<compile_context>
chip_gen: v6e
topology: v6e:2x2x1
jax: 0.10.0
libtpu: 0.0.40
codegen_flags: <defaults>
</compile_context>

<pallas_src>
import functools

import jax
import jax.numpy as jnp
from jax import lax
from jax.experimental import pallas as pl
from jax.experimental.pallas import tpu as pltpu

EPS = 1e-5          # torch.nn.GroupNorm default eps
NEG_BIG = -1e9      # bias for sublane-padded conv3 channels -> softmax weight 0
CS = 8              # conv3 output channels padded onto the sublane axis


def _gn_relu(a, gamma, beta, ggt, hw):
    """GroupNorm(4, 64) + ReLU on an (HW, 64) f32 slab.

    Per-group stats come from two sublane reductions plus a tiny
    (1,64)@(64,64) group-selector matmul (ggt[c,c'] = 1 iff same group),
    applied as a single fused y = max(a*scale + shift, 0) pass."""
    s1 = jnp.sum(a, axis=0, keepdims=True)             # (1, 64) per-channel sum
    s2 = jnp.sum(a * a, axis=0, keepdims=True)         # (1, 64) per-channel sumsq
    inv_cnt = 1.0 / (hw * 16)                          # 16 channels per group
    mean = jnp.dot(s1, ggt, preferred_element_type=jnp.float32) * inv_cnt
    ex2 = jnp.dot(s2, ggt, preferred_element_type=jnp.float32) * inv_cnt
    var = jnp.maximum(ex2 - mean * mean, 0.0)          # cancellation guard
    scale = gamma * lax.rsqrt(var + EPS)               # (1, 64)
    shift = beta - mean * scale                        # (1, 64)
    return jnp.maximum(a * scale + shift, 0.0)


def cofusion_kernel(xcol_ref, xcm_ref,
                    w1_ref, b1_ref, g1_ref, be1_ref,
                    w2_ref, b2_ref, g2_ref, be2_ref,
                    w3t_ref, b3_ref, ggt_ref,
                    out_ref, pad_scr, col_scr, *, H, W):
    HW = H * W
    ggt = ggt_ref[...]

    # ---- keep a zero 1-px border in pad_scr (interior is always rewritten) --
    zr = jnp.zeros((1, W + 2, 64), jnp.float32)
    zc = jnp.zeros((H + 2, 1, 64), jnp.float32)
    pad_scr[0:1, :, :] = zr
    pad_scr[H + 1:H + 2, :, :] = zr
    pad_scr[:, 0:1, :] = zc
    pad_scr[:, W + 1:W + 2, :] = zc

    def stash_and_im2col(act):
        # GN+ReLU'd activation (HW, 64) -> padded map -> (HW, 576) im2col slab.
        pad_scr[1:H + 1, 1:W + 1, :] = act.reshape(H, W, 64)
        # 128-lane-aligned writes: four tap pairs + one trailing 64-wide tap.
        for p in range(4):
            t0, t1 = 2 * p, 2 * p + 1
            ta = pad_scr[t0 // 3:t0 // 3 + H, t0 % 3:t0 % 3 + W, :].reshape(HW, 64)
            tb = pad_scr[t1 // 3:t1 // 3 + H, t1 % 3:t1 % 3 + W, :].reshape(HW, 64)
            col_scr[:, p * 128:(p + 1) * 128] = jnp.concatenate([ta, tb], axis=-1)
        col_scr[:, 512:576] = pad_scr[2:2 + H, 2:2 + W, :].reshape(HW, 64)

    # ---- conv1 (host-built im2col, K = 9*in_ch) + GN1 + ReLU ----------------
    a = jnp.dot(xcol_ref[0], w1_ref[...],
                preferred_element_type=jnp.float32) + b1_ref[...]
    a = _gn_relu(a, g1_ref[...], be1_ref[...], ggt, HW)

    # ---- conv2 (single K=576 matmul) + GN2 + ReLU ---------------------------
    stash_and_im2col(a)
    a = jnp.dot(col_scr[...], w2_ref[...],
                preferred_element_type=jnp.float32) + b2_ref[...]
    a = _gn_relu(a, g2_ref[...], be2_ref[...], ggt, HW)

    # ---- conv3 with channels on sublanes: logits (8, HW), softmax over rows -
    stash_and_im2col(a)
    logits = lax.dot_general(w3t_ref[...], col_scr[...],      # (8,576)@(HW,576)^T
                             (((1,), (1,)), ((), ())),
                             preferred_element_type=jnp.float32) + b3_ref[...]
    m = jnp.max(logits, axis=0, keepdims=True)                # (1, HW)
    e = jnp.exp(logits - m)                                   # padded rows -> 0
    inv = 1.0 / jnp.sum(e, axis=0, keepdims=True)             # exact; denom >= 1
    attn = e * inv                                            # (8, HW)

    # ---- out[p] = sum_c x[c,p] * attn[c,p], lane-dense (1, HW) --------------
    prod = xcm_ref[0] * attn                                  # padded c rows are 0
    out_ref[0] = jnp.sum(prod, axis=0, keepdims=True)


def cofusion_forward(x_nchw, params):
    """x_nchw: (N, C, H, W) float32 -> (N, 1, H, W) float32."""
    N, Cin, H, W = x_nchw.shape
    Cout = params["b3"].shape[-1]
    assert Cout == Cin, "CoFusion requires out_ch == in_ch for x * attn"
    assert Cout <= CS
    HW = H * W
    K1, K2 = 9 * Cin, 9 * 64

    x_f32 = x_nchw.astype(jnp.float32)
    x_nhwc = jnp.transpose(x_f32, (0, 2, 3, 1))

    # conv1 im2col built host-side (in_ch is tiny, so this is cheap)
    xp = jnp.pad(x_nhwc, ((0, 0), (1, 1), (1, 1), (0, 0)))
    taps = [xp[:, dy:dy + H, dx:dx + W, :]
            for dy in range(3) for dx in range(3)]
    x_col = jnp.concatenate(taps, axis=-1).reshape(N, HW, K1)

    # channel-major x, zero-padded to 8 sublane rows, for the weighted sum
    x_cm = jnp.pad(x_f32.reshape(N, Cin, HW), ((0, 0), (0, CS - Cin), (0, 0)))

    # weights in single-matmul form (tap order (dy, dx, ci) matches im2col)
    w1 = params["w1"].reshape(K1, 64)
    w2 = params["w2"].reshape(K2, 64)
    w3t = jnp.pad(params["w3"].reshape(K2, Cout),
                  ((0, 0), (0, CS - Cout))).T                 # (8, K2)
    b3 = jnp.pad(params["b3"].reshape(Cout, 1),
                 ((0, CS - Cout), (0, 0)),
                 constant_values=NEG_BIG)                     # (8, 1)

    # group-selector matrix for GroupNorm(4, 64)
    grp = jnp.arange(64) // 16
    ggt = (grp[:, None] == grp[None, :]).astype(jnp.float32)

    def full(shape):
        return pl.BlockSpec(shape, lambda b, n=len(shape): (0,) * n)

    in_specs = [
        pl.BlockSpec((1, HW, K1), lambda b: (b, 0, 0)),       # x_col
        pl.BlockSpec((1, CS, HW), lambda b: (b, 0, 0)),       # x channel-major
        full((K1, 64)), full((1, 64)), full((1, 64)), full((1, 64)),
        full((K2, 64)), full((1, 64)), full((1, 64)), full((1, 64)),
        full((CS, K2)), full((CS, 1)),
        full((64, 64)),
    ]
    out_specs = pl.BlockSpec((1, 1, HW), lambda b: (b, 0, 0))

    kernel = functools.partial(cofusion_kernel, H=H, W=W)
    out = pl.pallas_call(
        kernel,
        out_shape=jax.ShapeDtypeStruct((N, 1, HW), jnp.float32),
        grid_spec=pltpu.PrefetchScalarGridSpec(
            num_scalar_prefetch=0,
            grid=(N,),
            in_specs=in_specs,
            out_specs=out_specs,
            scratch_shapes=[
                pltpu.VMEM((H + 2, W + 2, 64), jnp.float32),  # padded act map
                pltpu.VMEM((HW, K2), jnp.float32),            # im2col slab
            ],
        ),
        compiler_params=pltpu.CompilerParams(
            dimension_semantics=("parallel",),
            vmem_limit_bytes=48 * 1024 * 1024),
    )(x_col, x_cm,
      w1, params["b1"], params["g1"], params["beta1"],
      w2, params["b2"], params["g2"], params["beta2"],
      w3t, b3, ggt)

    return out.reshape(N, 1, H, W)


# ------------------------- pure-JAX reference ------------------------------
def cofusion_reference(x, p):
    def conv(x, w_hwio, b):
        w_oihw = jnp.transpose(w_hwio, (3, 2, 0, 1))
        y = lax.conv_general_dilated(
            x, w_oihw, (1, 1), "SAME",
            dimension_numbers=("NCHW", "OIHW", "NCHW"))
        return y + b.reshape(1, -1, 1, 1)

    def gn(x, gamma, beta, groups=4):
        N, C, H, W = x.shape
        xg = x.reshape(N, groups, C // groups, H, W)
        m = xg.mean(axis=(2, 3, 4), keepdims=True)
        v = ((xg - m) ** 2).mean(axis=(2, 3, 4), keepdims=True)
        xn = ((xg - m) / jnp.sqrt(v + EPS)).reshape(N, C, H, W)
        return xn * gamma.reshape(1, -1, 1, 1) + beta.reshape(1, -1, 1, 1)

    a = jax.nn.relu(gn(conv(x, p["w1"], p["b1"]), p["g1"], p["beta1"]))
    a = jax.nn.relu(gn(conv(a, p["w2"], p["b2"]), p["g2"], p["beta2"]))
    attn = jax.nn.softmax(conv(a, p["w3"], p["b3"]), axis=1)
    return (x * attn).sum(1, keepdims=True)


def make_params(key, in_ch, out_ch):
    ks = jax.random.split(key, 11)

    def w_init(k, shape, fan_in):
        return jax.random.normal(k, shape, jnp.float32) / jnp.sqrt(fan_in)

    return {
        "w1": w_init(ks[0], (3, 3, in_ch, 64), 9 * in_ch),     # HWIO
        "b1": 0.1 * jax.random.normal(ks[1], (1, 64), jnp.float32),
        "g1": 1.0 + 0.1 * jax.random.normal(ks[2], (1, 64), jnp.float32),
        "beta1": 0.1 * jax.random.normal(ks[3], (1, 64), jnp.float32),
        "w2": w_init(ks[4], (3, 3, 64, 64), 9 * 64),
        "b2": 0.1 * jax.random.normal(ks[5], (1, 64), jnp.float32),
        "g2": 1.0 + 0.1 * jax.random.normal(ks[6], (1, 64), jnp.float32),
        "beta2": 0.1 * jax.random.normal(ks[7], (1, 64), jnp.float32),
        "w3": w_init(ks[8], (3, 3, 64, out_ch), 9 * 64),
        "b3": 0.1 * jax.random.normal(ks[9], (1, out_ch), jnp.float32),
    }


if __name__ == "__main__":
    N, C, H, W = 2, 4, 16, 16          # in_ch == out_ch == 4
    key = jax.random.PRNGKey(0)
    kx, kp = jax.random.split(key)
    x = jax.random.normal(kx, (N, C, H, W), jnp.float32)
    params = make_params(kp, C, C)

    out = jax.block_until_ready(cofusion_forward(x, params))
    ref = jax.block_until_ready(cofusion_reference(x, params))

    assert out.shape == (N, 1, H, W), out.shape
    max_err = float(jnp.max(jnp.abs(out - ref)))
    assert jnp.allclose(out, ref, atol=2e-3, rtol=2e-3), max_err
    print("KERNEL_OK")
</pallas_src>

<mosaic_0001>
module attributes {stable_mosaic.version = 11 : i64} {
  func.func @cofusion_kernel(%arg0: i32, %arg1: memref<1x256x36xf32, #tpu.memory_space<vmem>>, %arg2: memref<1x8x256xf32, #tpu.memory_space<vmem>>, %arg3: memref<36x64xf32, #tpu.memory_space<vmem>>, %arg4: memref<1x64xf32, #tpu.memory_space<vmem>>, %arg5: memref<1x64xf32, #tpu.memory_space<vmem>>, %arg6: memref<1x64xf32, #tpu.memory_space<vmem>>, %arg7: memref<576x64xf32, #tpu.memory_space<vmem>>, %arg8: memref<1x64xf32, #tpu.memory_space<vmem>>, %arg9: memref<1x64xf32, #tpu.memory_space<vmem>>, %arg10: memref<1x64xf32, #tpu.memory_space<vmem>>, %arg11: memref<8x576xf32, #tpu.memory_space<vmem>>, %arg12: memref<8x1xf32, #tpu.memory_space<vmem>>, %arg13: memref<64x64xf32, #tpu.memory_space<vmem>>, %arg14: memref<1x1x256xf32, #tpu.memory_space<vmem>>, %arg15: memref<18x18x64xf32, #tpu.memory_space<vmem>>, %arg16: memref<256x576xf32, #tpu.memory_space<vmem>>) attributes {dimension_semantics = [#tpu.dimension_semantics<parallel>], iteration_bounds = array<i64: 2>, scalar_prefetch = 0 : i64, scratch_operands = 2 : i64, tpu.core_type = #tpu.core_type<tc>, window_params = [{transform_indices = @transform_0, window_bounds = array<i64: 1, 256, 36>}, {transform_indices = @transform_1, window_bounds = array<i64: 1, 8, 256>}, {pipeline_mode = #tpu.pipeline_mode<synchronous>, transform_indices = @transform_2, window_bounds = array<i64: 36, 64>}, {pipeline_mode = #tpu.pipeline_mode<synchronous>, transform_indices = @transform_3, window_bounds = array<i64: 1, 64>}, {pipeline_mode = #tpu.pipeline_mode<synchronous>, transform_indices = @transform_4, window_bounds = array<i64: 1, 64>}, {pipeline_mode = #tpu.pipeline_mode<synchronous>, transform_indices = @transform_5, window_bounds = array<i64: 1, 64>}, {pipeline_mode = #tpu.pipeline_mode<synchronous>, transform_indices = @transform_6, window_bounds = array<i64: 576, 64>}, {pipeline_mode = #tpu.pipeline_mode<synchronous>, transform_indices = @transform_7, window_bounds = array<i64: 1, 64>}, {pipeline_mode = #tpu.pipeline_mode<synchronous>, transform_indices = @transform_8, window_bounds = array<i64: 1, 64>}, {pipeline_mode = #tpu.pipeline_mode<synchronous>, transform_indices = @transform_9, window_bounds = array<i64: 1, 64>}, {pipeline_mode = #tpu.pipeline_mode<synchronous>, transform_indices = @transform_10, window_bounds = array<i64: 8, 576>}, {pipeline_mode = #tpu.pipeline_mode<synchronous>, transform_indices = @transform_11, window_bounds = array<i64: 8, 1>}, {pipeline_mode = #tpu.pipeline_mode<synchronous>, transform_indices = @transform_12, window_bounds = array<i64: 64, 64>}, {transform_indices = @transform_13, window_bounds = array<i64: 1, 1, 256>}]} {
    %c0 = arith.constant 0 : index
    %c0_0 = arith.constant 0 : index
    %0 = vector.load %arg13[%c0, %c0_0] : memref<64x64xf32, #tpu.memory_space<vmem>>, vector<64x64xf32>
    %cst = arith.constant 0.000000e+00 : f32
    %1 = vector.broadcast %cst : f32 to vector<1x18x64xf32>
    %cst_1 = arith.constant 0.000000e+00 : f32
    %2 = vector.broadcast %cst_1 : f32 to vector<18x1x64xf32>
    %c0_2 = arith.constant 0 : index
    %c0_3 = arith.constant 0 : index
    %c0_4 = arith.constant 0 : index
    %3 = vector.load %arg15[%c0_2, %c0_3, %c0_4] : memref<18x18x64xf32, #tpu.memory_space<vmem>>, vector<1x18x64xf32>
    tpu.vector_store %arg15[%c0_2, %c0_3, %c0_4], %1 {strides = array<i32>} : memref<18x18x64xf32, #tpu.memory_space<vmem>>, vector<1x18x64xf32>,
    %c17 = arith.constant 17 : index
    %c0_5 = arith.constant 0 : index
    %c0_6 = arith.constant 0 : index
    %4 = vector.load %arg15[%c17, %c0_5, %c0_6] : memref<18x18x64xf32, #tpu.memory_space<vmem>>, vector<1x18x64xf32>
    tpu.vector_store %arg15[%c17, %c0_5, %c0_6], %1 {strides = array<i32>} : memref<18x18x64xf32, #tpu.memory_space<vmem>>, vector<1x18x64xf32>,
    %c0_7 = arith.constant 0 : index
    %c0_8 = arith.constant 0 : index
    %c0_9 = arith.constant 0 : index
    %5 = vector.load %arg15[%c0_7, %c0_8, %c0_9] : memref<18x18x64xf32, #tpu.memory_space<vmem>>, vector<18x1x64xf32>
    tpu.vector_store %arg15[%c0_7, %c0_8, %c0_9], %2 {strides = array<i32>} : memref<18x18x64xf32, #tpu.memory_space<vmem>>, vector<18x1x64xf32>,
    %c0_10 = arith.constant 0 : index
    %c17_11 = arith.constant 17 : index
    %c0_12 = arith.constant 0 : index
    %6 = vector.load %arg15[%c0_10, %c17_11, %c0_12] : memref<18x18x64xf32, #tpu.memory_space<vmem>>, vector<18x1x64xf32>
    tpu.vector_store %arg15[%c0_10, %c17_11, %c0_12], %2 {strides = array<i32>} : memref<18x18x64xf32, #tpu.memory_space<vmem>>, vector<18x1x64xf32>,
    %c0_13 = arith.constant 0 : index
    %c0_14 = arith.constant 0 : index
    %c0_15 = arith.constant 0 : index
    %7 = vector.load %arg1[%c0_13, %c0_14, %c0_15] : memref<1x256x36xf32, #tpu.memory_space<vmem>>, vector<1x256x36xf32>
    %8 = vector.shape_cast %7 : vector<1x256x36xf32> to vector<256x36xf32>
    %c0_16 = arith.constant 0 : index
    %c0_17 = arith.constant 0 : index
    %9 = vector.load %arg3[%c0_16, %c0_17] : memref<36x64xf32, #tpu.memory_space<vmem>>, vector<36x64xf32>
    %cst_18 = arith.constant dense<0.000000e+00> : vector<256x64xf32>
    %10 = tpu.matmul %8, %9, %cst_18 {dimension_numbers = #tpu.dot_dimension_numbers<[1], [0], [0], [1], [0, 0, 1, 1], [], []>} : vector<256x36xf32>, vector<36x64xf32>, vector<256x64xf32> -> vector<256x64xf32>
    %c0_19 = arith.constant 0 : index
    %c0_20 = arith.constant 0 : index
    %11 = vector.load %arg4[%c0_19, %c0_20] : memref<1x64xf32, #tpu.memory_space<vmem>>, vector<1x64xf32>
    %12 = vector.broadcast %11 : vector<1x64xf32> to vector<256x64xf32>
    %13 = arith.addf %10, %12 : vector<256x64xf32>
    %c0_21 = arith.constant 0 : index
    %c0_22 = arith.constant 0 : index
    %14 = vector.load %arg5[%c0_21, %c0_22] : memref<1x64xf32, #tpu.memory_space<vmem>>, vector<1x64xf32>
    %c0_23 = arith.constant 0 : index
    %c0_24 = arith.constant 0 : index
    %15 = vector.load %arg6[%c0_23, %c0_24] : memref<1x64xf32, #tpu.memory_space<vmem>>, vector<1x64xf32>
    %cst_25 = arith.constant dense<0.000000e+00> : vector<64xf32>
    %16 = vector.multi_reduction <add>, %13, %cst_25 [0] : vector<256x64xf32> to vector<64xf32>
    %17 = vector.shape_cast %16 : vector<64xf32> to vector<1x64xf32>
    %18 = arith.mulf %13, %13 : vector<256x64xf32>
    %cst_26 = arith.constant dense<0.000000e+00> : vector<64xf32>
    %19 = vector.multi_reduction <add>, %18, %cst_26 [0] : vector<256x64xf32> to vector<64xf32>
    %20 = vector.shape_cast %19 : vector<64xf32> to vector<1x64xf32>
    %cst_27 = arith.constant dense<0.000000e+00> : vector<1x64xf32>
    %21 = tpu.matmul %17, %0, %cst_27 {dimension_numbers = #tpu.dot_dimension_numbers<[1], [0], [0], [1], [0, 0, 1, 1], [], []>} : vector<1x64xf32>, vector<64x64xf32>, vector<1x64xf32> -> vector<1x64xf32>
    %cst_28 = arith.constant 2.44140625E-4 : f32
    %22 = vector.broadcast %cst_28 : f32 to vector<1x64xf32>
    %23 = arith.mulf %21, %22 : vector<1x64xf32>
    %cst_29 = arith.constant dense<0.000000e+00> : vector<1x64xf32>
    %24 = tpu.matmul %20, %0, %cst_29 {dimension_numbers = #tpu.dot_dimension_numbers<[1], [0], [0], [1], [0, 0, 1, 1], [], []>} : vector<1x64xf32>, vector<64x64xf32>, vector<1x64xf32> -> vector<1x64xf32>
    %cst_30 = arith.constant 2.44140625E-4 : f32
    %25 = vector.broadcast %cst_30 : f32 to vector<1x64xf32>
    %26 = arith.mulf %24, %25 : vector<1x64xf32>
    %27 = arith.mulf %23, %23 : vector<1x64xf32>
    %28 = arith.subf %26, %27 : vector<1x64xf32>
    %cst_31 = arith.constant 0.000000e+00 : f32
    %29 = vector.broadcast %cst_31 : f32 to vector<1x64xf32>
    %30 = arith.maximumf %28, %29 : vector<1x64xf32>
    %cst_32 = arith.constant 9.99999974E-6 : f32
    %31 = vector.broadcast %cst_32 : f32 to vector<1x64xf32>
    %32 = arith.addf %30, %31 : vector<1x64xf32>
    %33 = math.rsqrt %32 : vector<1x64xf32>
    %34 = arith.mulf %14, %33 : vector<1x64xf32>
    %35 = arith.mulf %23, %34 : vector<1x64xf32>
    %36 = arith.subf %15, %35 : vector<1x64xf32>
    %37 = vector.broadcast %34 : vector<1x64xf32> to vector<256x64xf32>
    %38 = arith.mulf %13, %37 : vector<256x64xf32>
    %39 = vector.broadcast %36 : vector<1x64xf32> to vector<256x64xf32>
    %40 = arith.addf %38, %39 : vector<256x64xf32>
    %cst_33 = arith.constant 0.000000e+00 : f32
    %41 = vector.broadcast %cst_33 : f32 to vector<256x64xf32>
    %42 = arith.maximumf %40, %41 : vector<256x64xf32>
    %43 = vector.shape_cast %42 : vector<256x64xf32> to vector<16x16x64xf32>
    %c1 = arith.constant 1 : index
    %c1_34 = arith.constant 1 : index
    %c0_35 = arith.constant 0 : index
    %44 = vector.load %arg15[%c1, %c1_34, %c0_35] : memref<18x18x64xf32, #tpu.memory_space<vmem>>, vector<16x16x64xf32>
    tpu.vector_store %arg15[%c1, %c1_34, %c0_35], %43 {strides = array<i32>} : memref<18x18x64xf32, #tpu.memory_space<vmem>>, vector<16x16x64xf32>,
    %c0_36 = arith.constant 0 : index
    %c0_37 = arith.constant 0 : index
    %c0_38 = arith.constant 0 : index
    %45 = vector.load %arg15[%c0_36, %c0_37, %c0_38] : memref<18x18x64xf32, #tpu.memory_space<vmem>>, vector<16x16x64xf32>
    %46 = vector.shape_cast %45 : vector<16x16x64xf32> to vector<256x64xf32>
    %c0_39 = arith.constant 0 : index
    %c1_40 = arith.constant 1 : index
    %c0_41 = arith.constant 0 : index
    %47 = vector.load %arg15[%c0_39, %c1_40, %c0_41] : memref<18x18x64xf32, #tpu.memory_space<vmem>>, vector<16x16x64xf32>
    %48 = vector.shape_cast %47 : vector<16x16x64xf32> to vector<256x64xf32>
    %49 = tpu.concatenate %46, %48 in 1 : vector<256x64xf32>, vector<256x64xf32> -> vector<256x128xf32>
    %c0_42 = arith.constant 0 : index
    %c0_43 = arith.constant 0 : index
    %50 = vector.load %arg16[%c0_42, %c0_43] : memref<256x576xf32, #tpu.memory_space<vmem>>, vector<256x128xf32>
    tpu.vector_store %arg16[%c0_42, %c0_43], %49 {strides = array<i32>} : memref<256x576xf32, #tpu.memory_space<vmem>>, vector<256x128xf32>,
    %c0_44 = arith.constant 0 : index
    %c2 = arith.constant 2 : index
    %c0_45 = arith.constant 0 : index
    %51 = vector.load %arg15[%c0_44, %c2, %c0_45] : memref<18x18x64xf32, #tpu.memory_space<vmem>>, vector<16x16x64xf32>
    %52 = vector.shape_cast %51 : vector<16x16x64xf32> to vector<256x64xf32>
    %c1_46 = arith.constant 1 : index
    %c0_47 = arith.constant 0 : index
    %c0_48 = arith.constant 0 : index
    %53 = vector.load %arg15[%c1_46, %c0_47, %c0_48] : memref<18x18x64xf32, #tpu.memory_space<vmem>>, vector<16x16x64xf32>
    %54 = vector.shape_cast %53 : vector<16x16x64xf32> to vector<256x64xf32>
    %55 = tpu.concatenate %52, %54 in 1 : vector<256x64xf32>, vector<256x64xf32> -> vector<256x128xf32>
    %c0_49 = arith.constant 0 : index
    %c128 = arith.constant 128 : index
    %56 = vector.load %arg16[%c0_49, %c128] : memref<256x576xf32, #tpu.memory_space<vmem>>, vector<256x128xf32>
    tpu.vector_store %arg16[%c0_49, %c128], %55 {strides = array<i32>} : memref<256x576xf32, #tpu.memory_space<vmem>>, vector<256x128xf32>,
    %c1_50 = arith.constant 1 : index
    %c1_51 = arith.constant 1 : index
    %c0_52 = arith.constant 0 : index
    %57 = vector.load %arg15[%c1_50, %c1_51, %c0_52] : memref<18x18x64xf32, #tpu.memory_space<vmem>>, vector<16x16x64xf32>
    %58 = vector.shape_cast %57 : vector<16x16x64xf32> to vector<256x64xf32>
    %c1_53 = arith.constant 1 : index
    %c2_54 = arith.constant 2 : index
    %c0_55 = arith.constant 0 : index
    %59 = vector.load %arg15[%c1_53, %c2_54, %c0_55] : memref<18x18x64xf32, #tpu.memory_space<vmem>>, vector<16x16x64xf32>
    %60 = vector.shape_cast %59 : vector<16x16x64xf32> to vector<256x64xf32>
    %61 = tpu.concatenate %58, %60 in 1 : vector<256x64xf32>, vector<256x64xf32> -> vector<256x128xf32>
    %c0_56 = arith.constant 0 : index
    %c256 = arith.constant 256 : index
    %62 = vector.load %arg16[%c0_56, %c256] : memref<256x576xf32, #tpu.memory_space<vmem>>, vector<256x128xf32>
    tpu.vector_store %arg16[%c0_56, %c256], %61 {strides = array<i32>} : memref<256x576xf32, #tpu.memory_space<vmem>>, vector<256x128xf32>,
    %c2_57 = arith.constant 2 : index
    %c0_58 = arith.constant 0 : index
    %c0_59 = arith.constant 0 : index
    %63 = vector.load %arg15[%c2_57, %c0_58, %c0_59] : memref<18x18x64xf32, #tpu.memory_space<vmem>>, vector<16x16x64xf32>
    %64 = vector.shape_cast %63 : vector<16x16x64xf32> to vector<256x64xf32>
    %c2_60 = arith.constant 2 : index
    %c1_61 = arith.constant 1 : index
    %c0_62 = arith.constant 0 : index
    %65 = vector.load %arg15[%c2_60, %c1_61, %c0_62] : memref<18x18x64xf32, #tpu.memory_space<vmem>>, vector<16x16x64xf32>
    %66 = vector.shape_cast %65 : vector<16x16x64xf32> to vector<256x64xf32>
    %67 = tpu.concatenate %64, %66 in 1 : vector<256x64xf32>, vector<256x64xf32> -> vector<256x128xf32>
    %c0_63 = arith.constant 0 : index
    %c384 = arith.constant 384 : index
    %68 = vector.load %arg16[%c0_63, %c384] : memref<256x576xf32, #tpu.memory_space<vmem>>, vector<256x128xf32>
    tpu.vector_store %arg16[%c0_63, %c384], %67 {strides = array<i32>} : memref<256x576xf32, #tpu.memory_space<vmem>>, vector<256x128xf32>,
    %c2_64 = arith.constant 2 : index
    %c2_65 = arith.constant 2 : index
    %c0_66 = arith.constant 0 : index
    %69 = vector.load %arg15[%c2_64, %c2_65, %c0_66] : memref<18x18x64xf32, #tpu.memory_space<vmem>>, vector<16x16x64xf32>
    %70 = vector.shape_cast %69 : vector<16x16x64xf32> to vector<256x64xf32>
    %c0_67 = arith.constant 0 : index
    %c512 = arith.constant 512 : index
    %71 = vector.load %arg16[%c0_67, %c512] : memref<256x576xf32, #tpu.memory_space<vmem>>, vector<256x64xf32>
    tpu.vector_store %arg16[%c0_67, %c512], %70 {strides = array<i32>} : memref<256x576xf32, #tpu.memory_space<vmem>>, vector<256x64xf32>,
    %c0_68 = arith.constant 0 : index
    %c0_69 = arith.constant 0 : index
    %72 = vector.load %arg16[%c0_68, %c0_69] : memref<256x576xf32, #tpu.memory_space<vmem>>, vector<256x576xf32>
    %c0_70 = arith.constant 0 : index
    %c0_71 = arith.constant 0 : index
    %73 = vector.load %arg7[%c0_70, %c0_71] : memref<576x64xf32, #tpu.memory_space<vmem>>, vector<576x64xf32>
    %cst_72 = arith.constant dense<0.000000e+00> : vector<256x64xf32>
    %74 = tpu.matmul %72, %73, %cst_72 {dimension_numbers = #tpu.dot_dimension_numbers<[1], [0], [0], [1], [0, 0, 1, 1], [], []>} : vector<256x576xf32>, vector<576x64xf32>, vector<256x64xf32> -> vector<256x64xf32>
    %c0_73 = arith.constant 0 : index
    %c0_74 = arith.constant 0 : index
    %75 = vector.load %arg8[%c0_73, %c0_74] : memref<1x64xf32, #tpu.memory_space<vmem>>, vector<1x64xf32>
    %76 = vector.broadcast %75 : vector<1x64xf32> to vector<256x64xf32>
    %77 = arith.addf %74, %76 : vector<256x64xf32>
    %c0_75 = arith.constant 0 : index
    %c0_76 = arith.constant 0 : index
    %78 = vector.load %arg9[%c0_75, %c0_76] : memref<1x64xf32, #tpu.memory_space<vmem>>, vector<1x64xf32>
    %c0_77 = arith.constant 0 : index
    %c0_78 = arith.constant 0 : index
    %79 = vector.load %arg10[%c0_77, %c0_78] : memref<1x64xf32, #tpu.memory_space<vmem>>, vector<1x64xf32>
    %cst_79 = arith.constant dense<0.000000e+00> : vector<64xf32>
    %80 = vector.multi_reduction <add>, %77, %cst_79 [0] : vector<256x64xf32> to vector<64xf32>
    %81 = vector.shape_cast %80 : vector<64xf32> to vector<1x64xf32>
    %82 = arith.mulf %77, %77 : vector<256x64xf32>
    %cst_80 = arith.constant dense<0.000000e+00> : vector<64xf32>
    %83 = vector.multi_reduction <add>, %82, %cst_80 [0] : vector<256x64xf32> to vector<64xf32>
    %84 = vector.shape_cast %83 : vector<64xf32> to vector<1x64xf32>
    %cst_81 = arith.constant dense<0.000000e+00> : vector<1x64xf32>
    %85 = tpu.matmul %81, %0, %cst_81 {dimension_numbers = #tpu.dot_dimension_numbers<[1], [0], [0], [1], [0, 0, 1, 1], [], []>} : vector<1x64xf32>, vector<64x64xf32>, vector<1x64xf32> -> vector<1x64xf32>
    %cst_82 = arith.constant 2.44140625E-4 : f32
    %86 = vector.broadcast %cst_82 : f32 to vector<1x64xf32>
    %87 = arith.mulf %85, %86 : vector<1x64xf32>
    %cst_83 = arith.constant dense<0.000000e+00> : vector<1x64xf32>
    %88 = tpu.matmul %84, %0, %cst_83 {dimension_numbers = #tpu.dot_dimension_numbers<[1], [0], [0], [1], [0, 0, 1, 1], [], []>} : vector<1x64xf32>, vector<64x64xf32>, vector<1x64xf32> -> vector<1x64xf32>
    %cst_84 = arith.constant 2.44140625E-4 : f32
    %89 = vector.broadcast %cst_84 : f32 to vector<1x64xf32>
    %90 = arith.mulf %88, %89 : vector<1x64xf32>
    %91 = arith.mulf %87, %87 : vector<1x64xf32>
    %92 = arith.subf %90, %91 : vector<1x64xf32>
    %cst_85 = arith.constant 0.000000e+00 : f32
    %93 = vector.broadcast %cst_85 : f32 to vector<1x64xf32>
    %94 = arith.maximumf %92, %93 : vector<1x64xf32>
    %cst_86 = arith.constant 9.99999974E-6 : f32
    %95 = vector.broadcast %cst_86 : f32 to vector<1x64xf32>
    %96 = arith.addf %94, %95 : vector<1x64xf32>
    %97 = math.rsqrt %96 : vector<1x64xf32>
    %98 = arith.mulf %78, %97 : vector<1x64xf32>
    %99 = arith.mulf %87, %98 : vector<1x64xf32>
    %100 = arith.subf %79, %99 : vector<1x64xf32>
    %101 = vector.broadcast %98 : vector<1x64xf32> to vector<256x64xf32>
    %102 = arith.mulf %77, %101 : vector<256x64xf32>
    %103 = vector.broadcast %100 : vector<1x64xf32> to vector<256x64xf32>
    %104 = arith.addf %102, %103 : vector<256x64xf32>
    %cst_87 = arith.constant 0.000000e+00 : f32
    %105 = vector.broadcast %cst_87 : f32 to vector<256x64xf32>
    %106 = arith.maximumf %104, %105 : vector<256x64xf32>
    %107 = vector.shape_cast %106 : vector<256x64xf32> to vector<16x16x64xf32>
    %c1_88 = arith.constant 1 : index
    %c1_89 = arith.constant 1 : index
    %c0_90 = arith.constant 0 : index
    %108 = vector.load %arg15[%c1_88, %c1_89, %c0_90] : memref<18x18x64xf32, #tpu.memory_space<vmem>>, vector<16x16x64xf32>
    tpu.vector_store %arg15[%c1_88, %c1_89, %c0_90], %107 {strides = array<i32>} : memref<18x18x64xf32, #tpu.memory_space<vmem>>, vector<16x16x64xf32>,
    %c0_91 = arith.constant 0 : index
    %c0_92 = arith.constant 0 : index
    %c0_93 = arith.constant 0 : index
    %109 = vector.load %arg15[%c0_91, %c0_92, %c0_93] : memref<18x18x64xf32, #tpu.memory_space<vmem>>, vector<16x16x64xf32>
    %110 = vector.shape_cast %109 : vector<16x16x64xf32> to vector<256x64xf32>
    %c0_94 = arith.constant 0 : index
    %c1_95 = arith.constant 1 : index
    %c0_96 = arith.constant 0 : index
    %111 = vector.load %arg15[%c0_94, %c1_95, %c0_96] : memref<18x18x64xf32, #tpu.memory_space<vmem>>, vector<16x16x64xf32>
    %112 = vector.shape_cast %111 : vector<16x16x64xf32> to vector<256x64xf32>
    %113 = tpu.concatenate %110, %112 in 1 : vector<256x64xf32>, vector<256x64xf32> -> vector<256x128xf32>
    %c0_97 = arith.constant 0 : index
    %c0_98 = arith.constant 0 : index
    %114 = vector.load %arg16[%c0_97, %c0_98] : memref<256x576xf32, #tpu.memory_space<vmem>>, vector<256x128xf32>
    tpu.vector_store %arg16[%c0_97, %c0_98], %113 {strides = array<i32>} : memref<256x576xf32, #tpu.memory_space<vmem>>, vector<256x128xf32>,
    %c0_99 = arith.constant 0 : index
    %c2_100 = arith.constant 2 : index
    %c0_101 = arith.constant 0 : index
    %115 = vector.load %arg15[%c0_99, %c2_100, %c0_101] : memref<18x18x64xf32, #tpu.memory_space<vmem>>, vector<16x16x64xf32>
    %116 = vector.shape_cast %115 : vector<16x16x64xf32> to vector<256x64xf32>
    %c1_102 = arith.constant 1 : index
    %c0_103 = arith.constant 0 : index
    %c0_104 = arith.constant 0 : index
    %117 = vector.load %arg15[%c1_102, %c0_103, %c0_104] : memref<18x18x64xf32, #tpu.memory_space<vmem>>, vector<16x16x64xf32>
    %118 = vector.shape_cast %117 : vector<16x16x64xf32> to vector<256x64xf32>
    %119 = tpu.concatenate %116, %118 in 1 : vector<256x64xf32>, vector<256x64xf32> -> vector<256x128xf32>
    %c0_105 = arith.constant 0 : index
    %c128_106 = arith.constant 128 : index
    %120 = vector.load %arg16[%c0_105, %c128_106] : memref<256x576xf32, #tpu.memory_space<vmem>>, vector<256x128xf32>
    tpu.vector_store %arg16[%c0_105, %c128_106], %119 {strides = array<i32>} : memref<256x576xf32, #tpu.memory_space<vmem>>, vector<256x128xf32>,
    %c1_107 = arith.constant 1 : index
    %c1_108 = arith.constant 1 : index
    %c0_109 = arith.constant 0 : index
    %121 = vector.load %arg15[%c1_107, %c1_108, %c0_109] : memref<18x18x64xf32, #tpu.memory_space<vmem>>, vector<16x16x64xf32>
    %122 = vector.shape_cast %121 : vector<16x16x64xf32> to vector<256x64xf32>
    %c1_110 = arith.constant 1 : index
    %c2_111 = arith.constant 2 : index
    %c0_112 = arith.constant 0 : index
    %123 = vector.load %arg15[%c1_110, %c2_111, %c0_112] : memref<18x18x64xf32, #tpu.memory_space<vmem>>, vector<16x16x64xf32>
    %124 = vector.shape_cast %123 : vector<16x16x64xf32> to vector<256x64xf32>
    %125 = tpu.concatenate %122, %124 in 1 : vector<256x64xf32>, vector<256x64xf32> -> vector<256x128xf32>
    %c0_113 = arith.constant 0 : index
    %c256_114 = arith.constant 256 : index
    %126 = vector.load %arg16[%c0_113, %c256_114] : memref<256x576xf32, #tpu.memory_space<vmem>>, vector<256x128xf32>
    tpu.vector_store %arg16[%c0_113, %c256_114], %125 {strides = array<i32>} : memref<256x576xf32, #tpu.memory_space<vmem>>, vector<256x128xf32>,
    %c2_115 = arith.constant 2 : index
    %c0_116 = arith.constant 0 : index
    %c0_117 = arith.constant 0 : index
    %127 = vector.load %arg15[%c2_115, %c0_116, %c0_117] : memref<18x18x64xf32, #tpu.memory_space<vmem>>, vector<16x16x64xf32>
    %128 = vector.shape_cast %127 : vector<16x16x64xf32> to vector<256x64xf32>
    %c2_118 = arith.constant 2 : index
    %c1_119 = arith.constant 1 : index
    %c0_120 = arith.constant 0 : index
    %129 = vector.load %arg15[%c2_118, %c1_119, %c0_120] : memref<18x18x64xf32, #tpu.memory_space<vmem>>, vector<16x16x64xf32>
    %130 = vector.shape_cast %129 : vector<16x16x64xf32> to vector<256x64xf32>
    %131 = tpu.concatenate %128, %130 in 1 : vector<256x64xf32>, vector<256x64xf32> -> vector<256x128xf32>
    %c0_121 = arith.constant 0 : index
    %c384_122 = arith.constant 384 : index
    %132 = vector.load %arg16[%c0_121, %c384_122] : memref<256x576xf32, #tpu.memory_space<vmem>>, vector<256x128xf32>
    tpu.vector_store %arg16[%c0_121, %c384_122], %131 {strides = array<i32>} : memref<256x576xf32, #tpu.memory_space<vmem>>, vector<256x128xf32>,
    %c2_123 = arith.constant 2 : index
    %c2_124 = arith.constant 2 : index
    %c0_125 = arith.constant 0 : index
    %133 = vector.load %arg15[%c2_123, %c2_124, %c0_125] : memref<18x18x64xf32, #tpu.memory_space<vmem>>, vector<16x16x64xf32>
    %134 = vector.shape_cast %133 : vector<16x16x64xf32> to vector<256x64xf32>
    %c0_126 = arith.constant 0 : index
    %c512_127 = arith.constant 512 : index
    %135 = vector.load %arg16[%c0_126, %c512_127] : memref<256x576xf32, #tpu.memory_space<vmem>>, vector<256x64xf32>
    tpu.vector_store %arg16[%c0_126, %c512_127], %134 {strides = array<i32>} : memref<256x576xf32, #tpu.memory_space<vmem>>, vector<256x64xf32>,
    %c0_128 = arith.constant 0 : index
    %c0_129 = arith.constant 0 : index
    %136 = vector.load %arg11[%c0_128, %c0_129] : memref<8x576xf32, #tpu.memory_space<vmem>>, vector<8x576xf32>
    %c0_130 = arith.constant 0 : index
    %c0_131 = arith.constant 0 : index
    %137 = vector.load %arg16[%c0_130, %c0_131] : memref<256x576xf32, #tpu.memory_space<vmem>>, vector<256x576xf32>
    %cst_132 = arith.constant dense<0.000000e+00> : vector<8x256xf32>
    %138 = tpu.matmul %136, %137, %cst_132 {dimension_numbers = #tpu.dot_dimension_numbers<[1], [1], [0], [0], [0, 0, 1, 0], [], []>} : vector<8x576xf32>, vector<256x576xf32>, vector<8x256xf32> -> vector<8x256xf32>
    %c0_133 = arith.constant 0 : index
    %c0_134 = arith.constant 0 : index
    %139 = vector.load %arg12[%c0_133, %c0_134] : memref<8x1xf32, #tpu.memory_space<vmem>>, vector<8x1xf32>
    %140 = vector.broadcast %139 : vector<8x1xf32> to vector<8x256xf32>
    %141 = arith.addf %138, %140 : vector<8x256xf32>
    %cst_135 = arith.constant dense<0xFF800000> : vector<256xf32>
    %142 = vector.multi_reduction <maximumf>, %141, %cst_135 [0] : vector<8x256xf32> to vector<256xf32>
    %143 = vector.shape_cast %142 : vector<256xf32> to vector<1x256xf32>
    %144 = vector.broadcast %143 : vector<1x256xf32> to vector<8x256xf32>
    %145 = arith.subf %141, %144 : vector<8x256xf32>
    %146 = math.exp %145 : vector<8x256xf32>
    %cst_136 = arith.constant dense<0.000000e+00> : vector<256xf32>
    %147 = vector.multi_reduction <add>, %146, %cst_136 [0] : vector<8x256xf32> to vector<256xf32>
    %148 = vector.shape_cast %147 : vector<256xf32> to vector<1x256xf32>
    %cst_137 = arith.constant 1.000000e+00 : f32
    %149 = vector.broadcast %cst_137 : f32 to vector<1x256xf32>
    %150 = arith.divf %149, %148 : vector<1x256xf32>
    %151 = vector.broadcast %150 : vector<1x256xf32> to vector<8x256xf32>
    %152 = arith.mulf %146, %151 : vector<8x256xf32>
    %c0_138 = arith.constant 0 : index
    %c0_139 = arith.constant 0 : index
    %c0_140 = arith.constant 0 : index
    %153 = vector.load %arg2[%c0_138, %c0_139, %c0_140] : memref<1x8x256xf32, #tpu.memory_space<vmem>>, vector<1x8x256xf32>
    %154 = vector.shape_cast %153 : vector<1x8x256xf32> to vector<8x256xf32>
    %155 = arith.mulf %154, %152 : vector<8x256xf32>
    %cst_141 = arith.constant dense<0.000000e+00> : vector<256xf32>
    %156 = vector.multi_reduction <add>, %155, %cst_141 [0] : vector<8x256xf32> to vector<256xf32>
    %157 = vector.shape_cast %156 : vector<256xf32> to vector<1x256xf32>
    %c0_142 = arith.constant 0 : index
    %c0_143 = arith.constant 0 : index
    %c0_144 = arith.constant 0 : index
    %158 = vector.load %arg14[%c0_142, %c0_143, %c0_144] : memref<1x1x256xf32, #tpu.memory_space<vmem>>, vector<1x1x256xf32>
    %159 = vector.shape_cast %158 : vector<1x1x256xf32> to vector<1x256xf32>
    %160 = vector.shape_cast %157 : vector<1x256xf32> to vector<1x1x256xf32>
    tpu.vector_store %arg14[%c0_142, %c0_143, %c0_144], %160 {strides = array<i32>} : memref<1x1x256xf32, #tpu.memory_space<vmem>>, vector<1x1x256xf32>,
    return
  }
  func.func @transform_0(%arg0: i32) -> (i32, i32, i32) {
    %c0_i32 = arith.constant 0 : i32
    %c0_i32_0 = arith.constant 0 : i32
    %c0_i32_1 = arith.constant 0 : i32
    return %arg0, %c0_i32, %c0_i32_0 : i32, i32, i32
  }
  func.func @transform_1(%arg0: i32) -> (i32, i32, i32) {
    %c0_i32 = arith.constant 0 : i32
    %c0_i32_0 = arith.constant 0 : i32
    %c0_i32_1 = arith.constant 0 : i32
    return %arg0, %c0_i32, %c0_i32_0 : i32, i32, i32
  }
  func.func @transform_2(%arg0: i32) -> (i32, i32) {
    %c0_i32 = arith.constant 0 : i32
    %c0_i32_0 = arith.constant 0 : i32
    %c0_i32_1 = arith.constant 0 : i32
    return %c0_i32, %c0_i32_0 : i32, i32
  }
  func.func @transform_3(%arg0: i32) -> (i32, i32) {
    %c0_i32 = arith.constant 0 : i32
    %c0_i32_0 = arith.constant 0 : i32
    %c0_i32_1 = arith.constant 0 : i32
    return %c0_i32, %c0_i32_0 : i32, i32
  }
  func.func @transform_4(%arg0: i32) -> (i32, i32) {
    %c0_i32 = arith.constant 0 : i32
    %c0_i32_0 = arith.constant 0 : i32
    %c0_i32_1 = arith.constant 0 : i32
    return %c0_i32, %c0_i32_0 : i32, i32
  }
  func.func @transform_5(%arg0: i32) -> (i32, i32) {
    %c0_i32 = arith.constant 0 : i32
    %c0_i32_0 = arith.constant 0 : i32
    %c0_i32_1 = arith.constant 0 : i32
    return %c0_i32, %c0_i32_0 : i32, i32
  }
  func.func @transform_6(%arg0: i32) -> (i32, i32) {
    %c0_i32 = arith.constant 0 : i32
    %c0_i32_0 = arith.constant 0 : i32
    %c0_i32_1 = arith.constant 0 : i32
    return %c0_i32, %c0_i32_0 : i32, i32
  }
  func.func @transform_7(%arg0: i32) -> (i32, i32) {
    %c0_i32 = arith.constant 0 : i32
    %c0_i32_0 = arith.constant 0 : i32
    %c0_i32_1 = arith.constant 0 : i32
    return %c0_i32, %c0_i32_0 : i32, i32
  }
  func.func @transform_8(%arg0: i32) -> (i32, i32) {
    %c0_i32 = arith.constant 0 : i32
    %c0_i32_0 = arith.constant 0 : i32
    %c0_i32_1 = arith.constant 0 : i32
    return %c0_i32, %c0_i32_0 : i32, i32
  }
  func.func @transform_9(%arg0: i32) -> (i32, i32) {
    %c0_i32 = arith.constant 0 : i32
    %c0_i32_0 = arith.constant 0 : i32
    %c0_i32_1 = arith.constant 0 : i32
    return %c0_i32, %c0_i32_0 : i32, i32
  }
  func.func @transform_10(%arg0: i32) -> (i32, i32) {
    %c0_i32 = arith.constant 0 : i32
    %c0_i32_0 = arith.constant 0 : i32
    %c0_i32_1 = arith.constant 0 : i32
    return %c0_i32, %c0_i32_0 : i32, i32
  }
  func.func @transform_11(%arg0: i32) -> (i32, i32) {
    %c0_i32 = arith.constant 0 : i32
    %c0_i32_0 = arith.constant 0 : i32
    %c0_i32_1 = arith.constant 0 : i32
    return %c0_i32, %c0_i32_0 : i32, i32
  }
  func.func @transform_12(%arg0: i32) -> (i32, i32) {
    %c0_i32 = arith.constant 0 : i32
    %c0_i32_0 = arith.constant 0 : i32
    %c0_i32_1 = arith.constant 0 : i32
    return %c0_i32, %c0_i32_0 : i32, i32
  }
  func.func @transform_13(%arg0: i32) -> (i32, i32, i32) {
    %c0_i32 = arith.constant 0 : i32
    %c0_i32_0 = arith.constant 0 : i32
    %c0_i32_1 = arith.constant 0 : i32
    return %arg0, %c0_i32, %c0_i32_0 : i32, i32, i32
  }
}

</mosaic_0001>

<llo_original>
// kernel: tpu_custom_call.1
$region0: #{tpu_custom_call.1}
  #allocation0 [shape = 'u32[]', space=smem, size = 0x4, offset = 0x4, fixed_abs, tag = 'smem constant byte address 0x4 - core index']
  #allocation1 [shape = 'u32[144,128]{1,0:T(1,128)}', space=vmem, size = 0x12000, scoped, tag = 'internal scratch']
  #allocation2 [shape = 'f32[18,18,64]{2,1,0:T(8,128)}', space=vmem, size = 0x36000, scoped, tag = 'scratch operand']
  #allocation3 [shape = 'f32[256,576]{1,0:T(8,128)}', space=vmem, size = 0xa0000, scoped, tag = 'scratch operand']
  %s0 = inlined_call_operand.vmem [shape: f32[2,256,36], index: 0, kind: input, shape index: {}]
  %s1 = inlined_call_operand.vmem [shape: f32[2,8,256], index: 1, kind: input, shape index: {}]
  %s2 = inlined_call_operand.vmem [shape: f32[36,64], index: 2, kind: input, shape index: {}]
  %s3 = inlined_call_operand.vmem [shape: f32[1,64], index: 3, kind: input, shape index: {}]
  %s4 = inlined_call_operand.vmem [shape: f32[1,64], index: 4, kind: input, shape index: {}]
  %s5 = inlined_call_operand.vmem [shape: f32[1,64], index: 5, kind: input, shape index: {}]
  %s6 = inlined_call_operand.vmem [shape: f32[576,64], index: 6, kind: input, shape index: {}]
  %s7 = inlined_call_operand.vmem [shape: f32[1,64], index: 7, kind: input, shape index: {}]
  %s8 = inlined_call_operand.vmem [shape: f32[1,64], index: 8, kind: input, shape index: {}]
  %s9 = inlined_call_operand.vmem [shape: f32[1,64], index: 9, kind: input, shape index: {}]
  %s10 = inlined_call_operand.vmem [shape: f32[8,576], index: 10, kind: input, shape index: {}]
  %s11 = inlined_call_operand.vmem [shape: f32[8,1], index: 11, kind: input, shape index: {}]
  %s12 = inlined_call_operand.vmem [shape: f32[64,64], index: 12, kind: input, shape index: {}]
  %s13 = inlined_call_operand.hbm [shape: f32[2,1,256], index: 13, kind: output, shape index: {}]
  %s14 = sld [smem:[#allocation0]]
  $region85: #{tpu_custom_call.1} parent=0
    _
  %s16 = ssub.s32 1, %s14
  %s17 = scalar_select 0, %s16, %s14
  $region1: #{tpu_custom_call.1} parent=0
    #allocation4 [shape = 'u8[2048]{0}', space=vmem, size = 0x800, scoped, tag = 'output window, operand 0']
    #allocation5 [shape = 's32[2]{0}', space=sflag, size = 0x8, scoped, tag = 'scoped memory for tpu_custom_call.1']
    %18 = vsyncpa [#allocation5], 0
    %s19 = scalar_lea.sflag [#allocation5], 1
    %20 = vsyncpa %s19, 0
    loop: start=0, step=1, limit=4
    $region2: #{tpu_custom_call.1} parent=1 // loop_pre_header
      _
    $region3: #{tpu_custom_call.1} parent=1 // loop_header
      %s22 = sphi 0, %s26
      %p23 = scmp.ge.s32.totalorder %s22, 4
      %s32 = sphi 0, %s34
      %s35 = sphi 0, %s32
      %s36 = sphi 0, %s35
      %s52 = sphi 0, %s36
      %s58 = sphi 0, %s60
      %s61 = sphi 0, %s58
      %s62 = sphi 0, %s61
      %s78 = sphi 0, %s62
      %s82 = sphi 0, %s82
      %s84 = sphi 0, %s82
      %s85 = sphi 0, %s84
      %s99 = sphi 0, %s85
      %s103 = sphi 0, %s103
      %s105 = sphi 0, %s103
      %s106 = sphi 0, %s105
      %s120 = sphi 0, %s106
      %s124 = sphi 0, %s124
      %s126 = sphi 0, %s124
      %s127 = sphi 0, %s126
      %s141 = sphi 0, %s127
      %s145 = sphi 0, %s145
      %s147 = sphi 0, %s145
      %s148 = sphi 0, %s147
      %s162 = sphi 0, %s148
      %s166 = sphi 0, %s166
      %s168 = sphi 0, %s166
      %s169 = sphi 0, %s168
      %s183 = sphi 0, %s169
      %s187 = sphi 0, %s187
      %s189 = sphi 0, %s187
      %s190 = sphi 0, %s189
      %s204 = sphi 0, %s190
      %s208 = sphi 0, %s208
      %s210 = sphi 0, %s208
      %s211 = sphi 0, %s210
      %s225 = sphi 0, %s211
      %s229 = sphi 0, %s229
      %s231 = sphi 0, %s229
      %s232 = sphi 0, %s231
      %s246 = sphi 0, %s232
      %s250 = sphi 0, %s250
      %s252 = sphi 0, %s250
      %s253 = sphi 0, %s252
      %s267 = sphi 0, %s253
      %s271 = sphi 0, %s271
      %s273 = sphi 0, %s271
      %s274 = sphi 0, %s273
      %s288 = sphi 0, %s274
      %s292 = sphi 0, %s292
      %s294 = sphi 0, %s292
      %s295 = sphi 0, %s294
      %s309 = sphi 0, %s295
      %s315 = sphi 0, %s317
      %s318 = sphi 0, %s315
      %s319 = sphi 0, %s318
      %s335 = sphi 0, %s319
    $region4: #{tpu_custom_call.1} parent=1 // loop_header_branch
      %25 = sbr.rel (%p23) target = $region8
    $region5: #{tpu_custom_call.1} parent=1 // loop_body
      %s27 = ssub.s32 %s22, 1
      %s28 = ssub.s32 %s22, 2
      %s29 = sadd.s32 %s22, 1
      %s30 = ssub.s32 %s22, %s29
      %p31 = scmp.eq.s32.totalorder %s30, 0
      %s33 = sadd.s32 %s32, 1
      %s34 = scalar_select %p31, %s32, %s33
      %p37 = pneg %p31
      %p38 = scmp.eq.s32.totalorder %s22, 1
      %p39 = por %p37, %p38
      %p40 = scmp.ne.s32.totalorder %s32, %s35
      %p41 = scmp.eq.s32.totalorder %s22, 0
      %p42 = por %p40, %p41
      %p43 = scmp.ne.s32.totalorder %s32, %s35
      %p44 = scmp.eq.s32.totalorder %s27, 1
      %p45 = por %p43, %p44
      %p46 = scmp.ne.s32.totalorder %s35, %s36
      %p47 = scmp.eq.s32.totalorder %s27, 0
      %p48 = por %p46, %p47
      %p49 = scmp.ne.s32.totalorder %s35, %s36
      %p50 = scmp.eq.s32.totalorder %s28, 1
      %p51 = por %p49, %p50
      %p53 = scmp.ne.s32.totalorder %s36, %s52
      %p54 = scmp.eq.s32.totalorder %s28, 0
      %p55 = por %p53, %p54
      %s56 = ssub.s32 %s22, %s29
      %p57 = scmp.eq.s32.totalorder %s56, 0
      %s59 = sadd.s32 %s58, 1
      %s60 = scalar_select %p57, %s58, %s59
      %p63 = pneg %p57
      %p64 = scmp.eq.s32.totalorder %s22, 1
      %p65 = por %p63, %p64
      %p66 = scmp.ne.s32.totalorder %s58, %s61
      %p67 = scmp.eq.s32.totalorder %s22, 0
      %p68 = por %p66, %p67
      %p69 = scmp.ne.s32.totalorder %s58, %s61
      %p70 = scmp.eq.s32.totalorder %s27, 1
      %p71 = por %p69, %p70
      %p72 = scmp.ne.s32.totalorder %s61, %s62
      %p73 = scmp.eq.s32.totalorder %s27, 0
      %p74 = por %p72, %p73
      %p75 = scmp.ne.s32.totalorder %s61, %s62
      %p76 = scmp.eq.s32.totalorder %s28, 1
      %p77 = por %p75, %p76
      %p79 = scmp.ne.s32.totalorder %s62, %s78
      %p80 = scmp.eq.s32.totalorder %s28, 0
      %p81 = por %p79, %p80
      %s83 = sadd.s32 %s82, 1
      %p86 = scmp.eq.s32.totalorder %s22, 1
      %p87 = scmp.ne.s32.totalorder %s82, %s84
      %p88 = scmp.eq.s32.totalorder %s22, 0
      %p89 = por %p87, %p88
      %p90 = scmp.ne.s32.totalorder %s82, %s84
      %p91 = scmp.eq.s32.totalorder %s27, 1
      %p92 = por %p90, %p91
      %p93 = scmp.ne.s32.totalorder %s84, %s85
      %p94 = scmp.eq.s32.totalorder %s27, 0
      %p95 = por %p93, %p94
      %p96 = scmp.ne.s32.totalorder %s84, %s85
      %p97 = scmp.eq.s32.totalorder %s28, 1
      %p98 = por %p96, %p97
      %p100 = scmp.ne.s32.totalorder %s85, %s99
      %p101 = scmp.eq.s32.totalorder %s28, 0
      %p102 = por %p100, %p101
      %s104 = sadd.s32 %s103, 1
      %p107 = scmp.eq.s32.totalorder %s22, 1
      %p108 = scmp.ne.s32.totalorder %s103, %s105
      %p109 = scmp.eq.s32.totalorder %s22, 0
      %p110 = por %p108, %p109
      %p111 = scmp.ne.s32.totalorder %s103, %s105
      %p112 = scmp.eq.s32.totalorder %s27, 1
      %p113 = por %p111, %p112
      %p114 = scmp.ne.s32.totalorder %s105, %s106
      %p115 = scmp.eq.s32.totalorder %s27, 0
      %p116 = por %p114, %p115
      %p117 = scmp.ne.s32.totalorder %s105, %s106
      %p118 = scmp.eq.s32.totalorder %s28, 1
      %p119 = por %p117, %p118
      %p121 = scmp.ne.s32.totalorder %s106, %s120
      %p122 = scmp.eq.s32.totalorder %s28, 0
      %p123 = por %p121, %p122
      %s125 = sadd.s32 %s124, 1
      %p128 = scmp.eq.s32.totalorder %s22, 1
      %p129 = scmp.ne.s32.totalorder %s124, %s126
      %p130 = scmp.eq.s32.totalorder %s22, 0
      %p131 = por %p129, %p130
      %p132 = scmp.ne.s32.totalorder %s124, %s126
      %p133 = scmp.eq.s32.totalorder %s27, 1
      %p134 = por %p132, %p133
      %p135 = scmp.ne.s32.totalorder %s126, %s127
      %p136 = scmp.eq.s32.totalorder %s27, 0
      %p137 = por %p135, %p136
      %p138 = scmp.ne.s32.totalorder %s126, %s127
      %p139 = scmp.eq.s32.totalorder %s28, 1
      %p140 = por %p138, %p139
      %p142 = scmp.ne.s32.totalorder %s127, %s141
      %p143 = scmp.eq.s32.totalorder %s28, 0
      %p144 = por %p142, %p143
      %s146 = sadd.s32 %s145, 1
      %p149 = scmp.eq.s32.totalorder %s22, 1
      %p150 = scmp.ne.s32.totalorder %s145, %s147
      %p151 = scmp.eq.s32.totalorder %s22, 0
      %p152 = por %p150, %p151
      %p153 = scmp.ne.s32.totalorder %s145, %s147
      %p154 = scmp.eq.s32.totalorder %s27, 1
      %p155 = por %p153, %p154
      %p156 = scmp.ne.s32.totalorder %s147, %s148
      %p157 = scmp.eq.s32.totalorder %s27, 0
      %p158 = por %p156, %p157
      %p159 = scmp.ne.s32.totalorder %s147, %s148
      %p160 = scmp.eq.s32.totalorder %s28, 1
      %p161 = por %p159, %p160
      %p163 = scmp.ne.s32.totalorder %s148, %s162
      %p164 = scmp.eq.s32.totalorder %s28, 0
      %p165 = por %p163, %p164
      %s167 = sadd.s32 %s166, 1
      %p170 = scmp.eq.s32.totalorder %s22, 1
      %p171 = scmp.ne.s32.totalorder %s166, %s168
      %p172 = scmp.eq.s32.totalorder %s22, 0
      %p173 = por %p171, %p172
      %p174 = scmp.ne.s32.totalorder %s166, %s168
      %p175 = scmp.eq.s32.totalorder %s27, 1
      %p176 = por %p174, %p175
      %p177 = scmp.ne.s32.totalorder %s168, %s169
      %p178 = scmp.eq.s32.totalorder %s27, 0
      %p179 = por %p177, %p178
      %p180 = scmp.ne.s32.totalorder %s168, %s169
      %p181 = scmp.eq.s32.totalorder %s28, 1
      %p182 = por %p180, %p181
      %p184 = scmp.ne.s32.totalorder %s169, %s183
      %p185 = scmp.eq.s32.totalorder %s28, 0
      %p186 = por %p184, %p185
      %s188 = sadd.s32 %s187, 1
      %p191 = scmp.eq.s32.totalorder %s22, 1
      %p192 = scmp.ne.s32.totalorder %s187, %s189
      %p193 = scmp.eq.s32.totalorder %s22, 0
      %p194 = por %p192, %p193
      %p195 = scmp.ne.s32.totalorder %s187, %s189
      %p196 = scmp.eq.s32.totalorder %s27, 1
      %p197 = por %p195, %p196
      %p198 = scmp.ne.s32.totalorder %s189, %s190
      %p199 = scmp.eq.s32.totalorder %s27, 0
      %p200 = por %p198, %p199
      %p201 = scmp.ne.s32.totalorder %s189, %s190
      %p202 = scmp.eq.s32.totalorder %s28, 1
      %p203 = por %p201, %p202
      %p205 = scmp.ne.s32.totalorder %s190, %s204
      %p206 = scmp.eq.s32.totalorder %s28, 0
      %p207 = por %p205, %p206
      %s209 = sadd.s32 %s208, 1
      %p212 = scmp.eq.s32.totalorder %s22, 1
      %p213 = scmp.ne.s32.totalorder %s208, %s210
      %p214 = scmp.eq.s32.totalorder %s22, 0
      %p215 = por %p213, %p214
      %p216 = scmp.ne.s32.totalorder %s208, %s210
      %p217 = scmp.eq.s32.totalorder %s27, 1
      %p218 = por %p216, %p217
      %p219 = scmp.ne.s32.totalorder %s210, %s211
      %p220 = scmp.eq.s32.totalorder %s27, 0
      %p221 = por %p219, %p220
      %p222 = scmp.ne.s32.totalorder %s210, %s211
      %p223 = scmp.eq.s32.totalorder %s28, 1
      %p224 = por %p222, %p223
      %p226 = scmp.ne.s32.totalorder %s211, %s225
      %p227 = scmp.eq.s32.totalorder %s28, 0
      %p228 = por %p226, %p227
      %s230 = sadd.s32 %s229, 1
      %p233 = scmp.eq.s32.totalorder %s22, 1
      %p234 = scmp.ne.s32.totalorder %s229, %s231
      %p235 = scmp.eq.s32.totalorder %s22, 0
      %p236 = por %p234, %p235
      %p237 = scmp.ne.s32.totalorder %s229, %s231
      %p238 = scmp.eq.s32.totalorder %s27, 1
      %p239 = por %p237, %p238
      %p240 = scmp.ne.s32.totalorder %s231, %s232
      %p241 = scmp.eq.s32.totalorder %s27, 0
      %p242 = por %p240, %p241
      %p243 = scmp.ne.s32.totalorder %s231, %s232
      %p244 = scmp.eq.s32.totalorder %s28, 1
      %p245 = por %p243, %p244
      %p247 = scmp.ne.s32.totalorder %s232, %s246
      %p248 = scmp.eq.s32.totalorder %s28, 0
      %p249 = por %p247, %p248
      %s251 = sadd.s32 %s250, 1
      %p254 = scmp.eq.s32.totalorder %s22, 1
      %p255 = scmp.ne.s32.totalorder %s250, %s252
      %p256 = scmp.eq.s32.totalorder %s22, 0
      %p257 = por %p255, %p256
      %p258 = scmp.ne.s32.totalorder %s250, %s252
      %p259 = scmp.eq.s32.totalorder %s27, 1
      %p260 = por %p258, %p259
      %p261 = scmp.ne.s32.totalorder %s252, %s253
      %p262 = scmp.eq.s32.totalorder %s27, 0
      %p263 = por %p261, %p262
      %p264 = scmp.ne.s32.totalorder %s252, %s253
      %p265 = scmp.eq.s32.totalorder %s28, 1
      %p266 = por %p264, %p265
      %p268 = scmp.ne.s32.totalorder %s253, %s267
      %p269 = scmp.eq.s32.totalorder %s28, 0
      %p270 = por %p268, %p269
      %s272 = sadd.s32 %s271, 1
      %p275 = scmp.eq.s32.totalorder %s22, 1
      %p276 = scmp.ne.s32.totalorder %s271, %s273
      %p277 = scmp.eq.s32.totalorder %s22, 0
      %p278 = por %p276, %p277
      %p279 = scmp.ne.s32.totalorder %s271, %s273
      %p280 = scmp.eq.s32.totalorder %s27, 1
      %p281 = por %p279, %p280
      %p282 = scmp.ne.s32.totalorder %s273, %s274
      %p283 = scmp.eq.s32.totalorder %s27, 0
      %p284 = por %p282, %p283
      %p285 = scmp.ne.s32.totalorder %s273, %s274
      %p286 = scmp.eq.s32.totalorder %s28, 1
      %p287 = por %p285, %p286
      %p289 = scmp.ne.s32.totalorder %s274, %s288
      %p290 = scmp.eq.s32.totalorder %s28, 0
      %p291 = por %p289, %p290
      %s293 = sadd.s32 %s292, 1
      %p296 = scmp.eq.s32.totalorder %s22, 1
      %p297 = scmp.ne.s32.totalorder %s292, %s294
      %p298 = scmp.eq.s32.totalorder %s22, 0
      %p299 = por %p297, %p298
      %p300 = scmp.ne.s32.totalorder %s292, %s294
      %p301 = scmp.eq.s32.totalorder %s27, 1
      %p302 = por %p300, %p301
      %p303 = scmp.ne.s32.totalorder %s294, %s295
      %p304 = scmp.eq.s32.totalorder %s27, 0
      %p305 = por %p303, %p304
      %p306 = scmp.ne.s32.totalorder %s294, %s295
      %p307 = scmp.eq.s32.totalorder %s28, 1
      %p308 = por %p306, %p307
      %p310 = scmp.ne.s32.totalorder %s295, %s309
      %p311 = scmp.eq.s32.totalorder %s28, 0
      %p312 = por %p310, %p311
      %s313 = ssub.s32 %s22, %s29
      %p314 = scmp.eq.s32.totalorder %s313, 0
      %s316 = sadd.s32 %s315, 1
      %s317 = scalar_select %p314, %s315, %s316
      %p320 = pneg %p314
      %p321 = scmp.eq.s32.totalorder %s22, 1
      %p322 = por %p320, %p321
      %p323 = scmp.ne.s32.totalorder %s315, %s318
      %p324 = scmp.eq.s32.totalorder %s22, 0
      %p325 = por %p323, %p324
      %p326 = scmp.ne.s32.totalorder %s315, %s318
      %p327 = scmp.eq.s32.totalorder %s27, 1
      %p328 = por %p326, %p327
      %p329 = scmp.ne.s32.totalorder %s318, %s319
      %p330 = scmp.eq.s32.totalorder %s27, 0
      %p331 = por %p329, %p330
      %p332 = scmp.ne.s32.totalorder %s318, %s319
      %p333 = scmp.eq.s32.totalorder %s28, 1
      %p334 = por %p332, %p333
      %p336 = scmp.ne.s32.totalorder %s319, %s335
      %p337 = scmp.eq.s32.totalorder %s28, 0
      %p338 = por %p336, %p337
      %p339 = scmp.le.s32.totalorder 1, %s22
      %p340 = scmp.lt.s32.totalorder %s22, 3
      %p341 = pnand %p339, %p340
      %p342 = pneg %p341
      // Predicated region
      $region9: #{tpu_custom_call.1} parent=5 // pred_check
        _
      $region10: #{tpu_custom_call.1} parent=5 // pred_check_branch
        %344 = sbr.rel (%p341) target = $region12
      $region11: #{tpu_custom_call.1} parent=5 // pred_region
        %s345 = ssub.s32 %s22, 1
        // Predicated region
        $region13: #{tpu_custom_call.1} parent=11 // pred_check
          %p346 = pneg %p95
        $region14: #{tpu_custom_call.1} parent=11 // pred_check_branch
          %348 = sbr.rel (%p346) target = $region16
        $region15: #{tpu_custom_call.1} parent=11 // pred_region
          _
        $region16: #{tpu_custom_call.1} parent=11 // pred_fallthru
          _
        // Predicated region
        $region17: #{tpu_custom_call.1} parent=11 // pred_check
          %p349 = pneg %p116
        $region18: #{tpu_custom_call.1} parent=11 // pred_check_branch
          %351 = sbr.rel (%p349) target = $region20
        $region19: #{tpu_custom_call.1} parent=11 // pred_region
          _
        $region20: #{tpu_custom_call.1} parent=11 // pred_fallthru
          _
        // Predicated region
        $region21: #{tpu_custom_call.1} parent=11 // pred_check
          %p352 = pneg %p137
        $region22: #{tpu_custom_call.1} parent=11 // pred_check_branch
          %354 = sbr.rel (%p352) target = $region24
        $region23: #{tpu_custom_call.1} parent=11 // pred_region
          _
        $region24: #{tpu_custom_call.1} parent=11 // pred_fallthru
          _
        // Predicated region
        $region25: #{tpu_custom_call.1} parent=11 // pred_check
          %p355 = pneg %p158
        $region26: #{tpu_custom_call.1} parent=11 // pred_check_branch
          %357 = sbr.rel (%p355) target = $region28
        $region27: #{tpu_custom_call.1} parent=11 // pred_region
          _
        $region28: #{tpu_custom_call.1} parent=11 // pred_fallthru
          _
        // Predicated region
        $region29: #{tpu_custom_call.1} parent=11 // pred_check
          %p358 = pneg %p179
        $region30: #{tpu_custom_call.1} parent=11 // pred_check_branch
          %360 = sbr.rel (%p358) target = $region32
        $region31: #{tpu_custom_call.1} parent=11 // pred_region
          _
        $region32: #{tpu_custom_call.1} parent=11 // pred_fallthru
          _
        // Predicated region
        $region33: #{tpu_custom_call.1} parent=11 // pred_check
          %p361 = pneg %p200
        $region34: #{tpu_custom_call.1} parent=11 // pred_check_branch
          %363 = sbr.rel (%p361) target = $region36
        $region35: #{tpu_custom_call.1} parent=11 // pred_region
          _
        $region36: #{tpu_custom_call.1} parent=11 // pred_fallthru
          _
        // Predicated region
        $region37: #{tpu_custom_call.1} parent=11 // pred_check
          %p364 = pneg %p221
        $region38: #{tpu_custom_call.1} parent=11 // pred_check_branch
          %366 = sbr.rel (%p364) target = $region40
        $region39: #{tpu_custom_call.1} parent=11 // pred_region
          _
        $region40: #{tpu_custom_call.1} parent=11 // pred_fallthru
          _
        // Predicated region
        $region41: #{tpu_custom_call.1} parent=11 // pred_check
          %p367 = pneg %p242
        $region42: #{tpu_custom_call.1} parent=11 // pred_check_branch
          %369 = sbr.rel (%p367) target = $region44
        $region43: #{tpu_custom_call.1} parent=11 // pred_region
          _
        $region44: #{tpu_custom_call.1} parent=11 // pred_fallthru
          _
        // Predicated region
        $region45: #{tpu_custom_call.1} parent=11 // pred_check
          %p370 = pneg %p263
        $region46: #{tpu_custom_call.1} parent=11 // pred_check_branch
          %372 = sbr.rel (%p370) target = $region48
        $region47: #{tpu_custom_call.1} parent=11 // pred_region
          _
        $region48: #{tpu_custom_call.1} parent=11 // pred_fallthru
          _
        // Predicated region
        $region49: #{tpu_custom_call.1} parent=11 // pred_check
          %p373 = pneg %p284
        $region50: #{tpu_custom_call.1} parent=11 // pred_check_branch
          %375 = sbr.rel (%p373) target = $region52
        $region51: #{tpu_custom_call.1} parent=11 // pred_region
          _
        $region52: #{tpu_custom_call.1} parent=11 // pred_fallthru
          _
        // Predicated region
        $region53: #{tpu_custom_call.1} parent=11 // pred_check
          %p376 = pneg %p305
        $region54: #{tpu_custom_call.1} parent=11 // pred_check_branch
          %378 = sbr.rel (%p376) target = $region56
        $region55: #{tpu_custom_call.1} parent=11 // pred_region
          _
        $region56: #{tpu_custom_call.1} parent=11 // pred_fallthru
          _
      $region12: #{tpu_custom_call.1} parent=5 // pred_fallthru
        _
      %p379 = scmp.lt.s32.totalorder %s22, 2
      // Predicated region
      $region57: #{tpu_custom_call.1} parent=5 // pred_check
        %p380 = pneg %p379
      $region58: #{tpu_custom_call.1} parent=5 // pred_check_branch
        %382 = sbr.rel (%p380) target = $region60
      $region59: #{tpu_custom_call.1} parent=5 // pred_region
        // Predicated region
        $region61: #{tpu_custom_call.1} parent=59 // pred_check
          %p383 = pneg %p42
        $region62: #{tpu_custom_call.1} parent=59 // pred_check_branch
          %385 = sbr.rel (%p383) target = $region64
        $region63: #{tpu_custom_call.1} parent=59 // pred_region
          %p386 = scmp.lt.s32.totalorder %s22, 1
          %s387 = scalar_select %p386, %s22, 1
          %s388 = smul.addr %s387, 32
          %s389 = smul.addr %s388, 8
          %s390 = scalar_lea.vmem %s0, %s389
        $region64: #{tpu_custom_call.1} parent=59 // pred_fallthru
          _
        // Predicated region
        $region65: #{tpu_custom_call.1} parent=59 // pred_check
          %p391 = pneg %p68
        $region66: #{tpu_custom_call.1} parent=59 // pred_check_branch
          %393 = sbr.rel (%p391) target = $region68
        $region67: #{tpu_custom_call.1} parent=59 // pred_region
          %p394 = scmp.lt.s32.totalorder %s22, 1
          %s395 = scalar_select %p394, %s22, 1
          %s396 = smul.addr %s395, 2
          %s397 = smul.addr %s396, 8
          %s398 = scalar_lea.vmem %s1, %s397
        $region68: #{tpu_custom_call.1} parent=59 // pred_fallthru
          _
      $region60: #{tpu_custom_call.1} parent=5 // pred_fallthru
        _
      %p399 = scmp.le.s32.totalorder 1, %s22
      %p400 = scmp.lt.s32.totalorder %s22, 3
      %p401 = pnand %p399, %p400
      %p402 = pneg %p401
      // Predicated region
      $region69: #{tpu_custom_call.1} parent=5 // pred_check
        _
      $region70: #{tpu_custom_call.1} parent=5 // pred_check_branch
        %404 = sbr.rel (%p401) target = $region72
      $region71: #{tpu_custom_call.1} parent=5 // pred_region
        %s405 = ssub.s32 %s22, 1
        %p406 = scmp.lt.s32.totalorder %s27, 1
        %s407 = scalar_select %p406, %s27, 1
        %s408 = smul.addr %s407, 32
        %s409 = smul.addr %s408, 8
        %s410 = scalar_lea.vmem %s0, %s409
        %p411 = pneg %p48
        %p412 = pneg %p45
        %p413 = scmp.lt.s32.totalorder %s27, 1
        %s414 = scalar_select %p413, %s27, 1
        %s415 = smul.addr %s414, 2
        %s416 = smul.addr %s415, 8
        %s417 = scalar_lea.vmem %s1, %s416
        %p418 = pneg %p74
        %p419 = pneg %p71
        %p420 = pneg %p95
        %p421 = pneg %p92
        %p422 = pneg %p116
        %p423 = pneg %p113
        %p424 = pneg %p137
        %p425 = pneg %p134
        %p426 = pneg %p158
        %p427 = pneg %p155
        %p428 = pneg %p179
        %p429 = pneg %p176
        %p430 = pneg %p200
        %p431 = pneg %p197
        %p432 = pneg %p221
        %p433 = pneg %p218
        %p434 = pneg %p242
        %p435 = pneg %p239
        %p436 = pneg %p263
        %p437 = pneg %p260
        %p438 = pneg %p284
        %p439 = pneg %p281
        %p440 = pneg %p305
        %p441 = pneg %p302
        %p442 = pneg %p331
        %p443 = pneg %p328
        %s444 = sand.u32 %s318, 1
        %s445 = scalar_lea.sflag [#allocation5], %s444
        %s446 = sand.u32 %s318, 1
        %s447 = smul.addr %s446, 2
        %s448 = scalar_lea.vmem [#allocation4], %s447
        %p449 = scmp.lt.s32.totalorder %s27, 1
        %s450 = scalar_select %p449, %s27, 1
        %s451 = smul.addr %s450, 32
        %s452 = smul.addr %s451, 8
        %s453 = scalar_lea.vmem %s0, %s452
        %p454 = scmp.lt.s32.totalorder %s27, 1
        %s455 = scalar_select %p454, %s27, 1
        %s456 = smul.addr %s455, 2
        %s457 = smul.addr %s456, 8
        %s458 = scalar_lea.vmem %s1, %s457
        %v459 = vld [vmem:[%s12] sm:$0xff]
        %v460 = vld [vmem:[%s12 + $0x8] sm:$0xff]
        %v461 = vld [vmem:[%s12 + $0x10] sm:$0xff]
        %v462 = vld [vmem:[%s12 + $0x18] sm:$0xff]
        %v463 = vld [vmem:[%s12 + $0x20] sm:$0xff]
        %v464 = vld [vmem:[%s12 + $0x28] sm:$0xff]
        %v465 = vld [vmem:[%s12 + $0x30] sm:$0xff]
        %v466 = vld [vmem:[%s12 + $0x38] sm:$0xff]
        %vm467 = vcmask 523264
        %468 = vst.msk [vmem:[#allocation2] sm:$0xff] %vm467, 0.0
        %469 = vst.msk [vmem:[#allocation2 + $0x8] sm:$0xff] %vm467, 0.0
        %vm470 = vcmask 517120
        %471 = vst.msk [vmem:[#allocation2 + $0x10] sm:$0x3] %vm470, 0.0
        %s472 = scalar_lea.vmem [#allocation2], 408
        %473 = vst.msk [vmem:[%s472] sm:$0xff] %vm467, 0.0
        %474 = vst.msk [vmem:[%s472 + $0x8] sm:$0xff] %vm467, 0.0
        %475 = vst.msk [vmem:[%s472 + $0x10] sm:$0x3] %vm470, 0.0
        %vm476 = vcmask 516096
        %477 = vst.msk [vmem:[#allocation2] sm:$0x1] %vm476, 0.0
        %478 = vst.msk [vmem:[#allocation2 + $0x18] sm:$0x1] %vm476, 0.0
        %479 = vst.msk [vmem:[#allocation2 + $0x30] sm:$0x1] %vm476, 0.0
        %480 = vst.msk [vmem:[#allocation2 + $0x48] sm:$0x1] %vm476, 0.0
        %481 = vst.msk [vmem:[#allocation2 + $0x60] sm:$0x1] %vm476, 0.0
        %482 = vst.msk [vmem:[#allocation2 + $0x78] sm:$0x1] %vm476, 0.0
        %483 = vst.msk [vmem:[#allocation2 + $0x90] sm:$0x1] %vm476, 0.0
        %484 = vst.msk [vmem:[#allocation2 + $0xa8] sm:$0x1] %vm476, 0.0
        %485 = vst.msk [vmem:[#allocation2 + $0xc0] sm:$0x1] %vm476, 0.0
        %486 = vst.msk [vmem:[#allocation2 + $0xd8] sm:$0x1] %vm476, 0.0
        %487 = vst.msk [vmem:[#allocation2 + $0xf0] sm:$0x1] %vm476, 0.0
        %488 = vst.msk [vmem:[#allocation2 + $0x108] sm:$0x1] %vm476, 0.0
        %489 = vst.msk [vmem:[#allocation2 + $0x120] sm:$0x1] %vm476, 0.0
        %490 = vst.msk [vmem:[#allocation2 + $0x138] sm:$0x1] %vm476, 0.0
        %491 = vst.msk [vmem:[#allocation2 + $0x150] sm:$0x1] %vm476, 0.0
        %492 = vst.msk [vmem:[#allocation2 + $0x168] sm:$0x1] %vm476, 0.0
        %493 = vst.msk [vmem:[#allocation2 + $0x180] sm:$0x1] %vm476, 0.0
        %494 = vst.msk [vmem:[#allocation2 + $0x198] sm:$0x1] %vm476, 0.0
        %495 = vst.msk [vmem:[#allocation2 + $0x11] sm:$0x1] %vm476, 0.0
        %496 = vst.msk [vmem:[#allocation2 + $0x29] sm:$0x1] %vm476, 0.0
        %497 = vst.msk [vmem:[#allocation2 + $0x41] sm:$0x1] %vm476, 0.0
        %498 = vst.msk [vmem:[#allocation2 + $0x59] sm:$0x1] %vm476, 0.0
        %499 = vst.msk [vmem:[#allocation2 + $0x71] sm:$0x1] %vm476, 0.0
        %500 = vst.msk [vmem:[#allocation2 + $0x89] sm:$0x1] %vm476, 0.0
        %501 = vst.msk [vmem:[#allocation2 + $0xa1] sm:$0x1] %vm476, 0.0
        %502 = vst.msk [vmem:[#allocation2 + $0xb9] sm:$0x1] %vm476, 0.0
        %503 = vst.msk [vmem:[#allocation2 + $0xd1] sm:$0x1] %vm476, 0.0
        %504 = vst.msk [vmem:[#allocation2 + $0xe9] sm:$0x1] %vm476, 0.0
        %505 = vst.msk [vmem:[#allocation2 + $0x101] sm:$0x1] %vm476, 0.0
        %506 = vst.msk [vmem:[#allocation2 + $0x119] sm:$0x1] %vm476, 0.0
        %507 = vst.msk [vmem:[#allocation2 + $0x131] sm:$0x1] %vm476, 0.0
        %508 = vst.msk [vmem:[#allocation2 + $0x149] sm:$0x1] %vm476, 0.0
        %509 = vst.msk [vmem:[#allocation2 + $0x161] sm:$0x1] %vm476, 0.0
        %510 = vst.msk [vmem:[#allocation2 + $0x179] sm:$0x1] %vm476, 0.0
        %511 = vst.msk [vmem:[#allocation2 + $0x191] sm:$0x1] %vm476, 0.0
        %512 = vst.msk [vmem:[#allocation2 + $0x1a9] sm:$0x1] %vm476, 0.0
        %v513 = vld [vmem:[%s453] sm:$0xff]
        %v514 = vld [vmem:[%s453 + $0x8] sm:$0xff]
        %v515 = vld [vmem:[%s453 + $0x10] sm:$0xff]
        %v516 = vld [vmem:[%s453 + $0x18] sm:$0xff]
        %v517 = vld [vmem:[%s453 + $0x20] sm:$0xff]
        %v518 = vld [vmem:[%s453 + $0x28] sm:$0xff]
        %v519 = vld [vmem:[%s453 + $0x30] sm:$0xff]
        %v520 = vld [vmem:[%s453 + $0x38] sm:$0xff]
        %v521 = vld [vmem:[%s453 + $0x40] sm:$0xff]
        %v522 = vld [vmem:[%s453 + $0x48] sm:$0xff]
        %v523 = vld [vmem:[%s453 + $0x50] sm:$0xff]
        %v524 = vld [vmem:[%s453 + $0x58] sm:$0xff]
        %v525 = vld [vmem:[%s453 + $0x60] sm:$0xff]
        %v526 = vld [vmem:[%s453 + $0x68] sm:$0xff]
        %v527 = vld [vmem:[%s453 + $0x70] sm:$0xff]
        %v528 = vld [vmem:[%s453 + $0x78] sm:$0xff]
        %v529 = vld [vmem:[%s453 + $0x80] sm:$0xff]
        %v530 = vld [vmem:[%s453 + $0x88] sm:$0xff]
        %v531 = vld [vmem:[%s453 + $0x90] sm:$0xff]
        %v532 = vld [vmem:[%s453 + $0x98] sm:$0xff]
        %v533 = vld [vmem:[%s453 + $0xa0] sm:$0xff]
        %v534 = vld [vmem:[%s453 + $0xa8] sm:$0xff]
        %v535 = vld [vmem:[%s453 + $0xb0] sm:$0xff]
        %v536 = vld [vmem:[%s453 + $0xb8] sm:$0xff]
        %v537 = vld [vmem:[%s453 + $0xc0] sm:$0xff]
        %v538 = vld [vmem:[%s453 + $0xc8] sm:$0xff]
        %v539 = vld [vmem:[%s453 + $0xd0] sm:$0xff]
        %v540 = vld [vmem:[%s453 + $0xd8] sm:$0xff]
        %v541 = vld [vmem:[%s453 + $0xe0] sm:$0xff]
        %v542 = vld [vmem:[%s453 + $0xe8] sm:$0xff]
        %v543 = vld [vmem:[%s453 + $0xf0] sm:$0xff]
        %v544 = vld [vmem:[%s453 + $0xf8] sm:$0xff]
        %v545 = vld [vmem:[%s2] sm:$0xff]
        %v546 = vld [vmem:[%s2 + $0x8] sm:$0xff]
        %v547 = vld [vmem:[%s2 + $0x10] sm:$0xff]
        %v548 = vld [vmem:[%s2 + $0x18] sm:$0xff]
        %v549 = vld [vmem:[%s2 + $0x20] sm:$0xf]
        %v550 = vld [vmem:[%s3] sm:$0x1]
        %v552 = vlaneseq
        %v553 = vshrl.u32 %v552, 7
        %v554 = vsub.s32 0, %v553
        %v555 = vrot.slane %v550, %v554
        %vm557 = vcmask 293888
        %v559 = vsel %vm557, %v513, 0
        %v562 = vsel %vm557, %v514, 0
        %v565 = vsel %vm557, %v515, 0
        %v568 = vsel %vm557, %v516, 0
        %v571 = vsel %vm557, %v517, 0
        %v574 = vsel %vm557, %v518, 0
        %v577 = vsel %vm557, %v519, 0
        %v580 = vsel %vm557, %v520, 0
        %v583 = vsel %vm557, %v521, 0
        %v586 = vsel %vm557, %v522, 0
        %v589 = vsel %vm557, %v523, 0
        %v592 = vsel %vm557, %v524, 0
        %v595 = vsel %vm557, %v525, 0
        %v598 = vsel %vm557, %v526, 0
        %v601 = vsel %vm557, %v527, 0
        %v604 = vsel %vm557, %v528, 0
        %v607 = vsel %vm557, %v529, 0
        %v610 = vsel %vm557, %v530, 0
        %v613 = vsel %vm557, %v531, 0
        %v616 = vsel %vm557, %v532, 0
        %v619 = vsel %vm557, %v533, 0
        %v622 = vsel %vm557, %v534, 0
        %v625 = vsel %vm557, %v535, 0
        %v628 = vsel %vm557, %v536, 0
        %v631 = vsel %vm557, %v537, 0
        %v634 = vsel %vm557, %v538, 0
        %v637 = vsel %vm557, %v539, 0
        %v640 = vsel %vm557, %v540, 0
        %v643 = vsel %vm557, %v541, 0
        %v646 = vsel %vm557, %v542, 0
        %v649 = vsel %vm557, %v543, 0
        %v652 = vsel %vm557, %v544, 0
        %vm654 = vcmask 1043456
        %v656 = vsel %vm654, %v549, 0
        %658 = vmatprep.subr.mxu0 0.0
        %659 = vmatpush1.msra.mxu0 0.0
        %660 = vmatprep.subr.mxu0 0.0
        %661 = vmatpush1.msra.mxu0 0.0
        %662 = vmatprep.subr.mxu0 0.0
        %663 = vmatpush1.msra.mxu0 0.0
        %664 = vmatprep.subr.mxu0 0.0
        %665 = vmatpush1.msra.mxu0 0.0
        %666 = vmatprep.subr.mxu0 0.0
        %667 = vmatpush1.msra.mxu0 0.0
        %668 = vmatprep.subr.mxu0 0.0
        %669 = vmatpush1.msra.mxu0 0.0
        %670 = vmatprep.subr.mxu0 0.0
        %671 = vmatpush1.msra.mxu0 0.0
        %672 = vmatprep.subr.mxu0 0.0
        %673 = vmatpush1.msra.mxu0 0.0
        %674 = vmatprep.subr.mxu0 0.0
        %675 = vmatpush1.msra.mxu0 0.0
        %676 = vmatprep.subr.mxu0 0.0
        %677 = vmatpush1.msra.mxu0 0.0
        %678 = vmatprep.subr.mxu0 0.0
        %679 = vmatpush1.msra.mxu0 0.0
        %680 = vmatprep.subr.mxu0 0.0
        %681 = vmatpush1.msra.mxu0 %v656
        %682 = vmatprep.subr.mxu0 0.0
        %683 = vmatpush1.msra.mxu0 %v548
        %684 = vmatprep.subr.mxu0 0.0
        %685 = vmatpush1.msra.mxu0 %v547
        %686 = vmatprep.subr.mxu0 0.0
        %687 = vmatpush1.msra.mxu0 %v546
        %688 = vmatprep.subr.mxu0 0.0
        %689 = vmatpush1.msra.mxu0 %v545
        %690 = vmatprep.subr.mxu0 0.0
        %691 = vmatpush2.msra.mxu0 0.0
        %692 = vmatprep.subr.mxu0 0.0
        %693 = vmatpush2.msra.mxu0 0.0
        %694 = vmatprep.subr.mxu0 0.0
        %695 = vmatpush2.msra.mxu0 0.0
        %696 = vmatprep.subr.mxu0 0.0
        %697 = vmatpush2.msra.mxu0 0.0
        %698 = vmatprep.subr.mxu0 0.0
        %699 = vmatpush2.msra.mxu0 0.0
        %700 = vmatprep.subr.mxu0 0.0
        %701 = vmatpush2.msra.mxu0 0.0
        %702 = vmatprep.subr.mxu0 0.0
        %703 = vmatpush2.msra.mxu0 0.0
        %704 = vmatprep.subr.mxu0 0.0
        %705 = vmatpush2.msra.mxu0 0.0
        %706 = vmatprep.subr.mxu0 0.0
        %707 = vmatpush2.msra.mxu0 0.0
        %708 = vmatprep.subr.mxu0 0.0
        %709 = vmatpush2.msra.mxu0 0.0
        %710 = vmatprep.subr.mxu0 0.0
        %711 = vmatpush2.msra.mxu0 0.0
        %712 = vmatprep.subr.mxu0 0.0
        %713 = vmatpush2.msra.mxu0 0.0
        %714 = vmatprep.subr.mxu0 0.0
        %715 = vmatpush2.msra.mxu0 0.0
        %716 = vmatprep.subr.mxu0 0.0
        %717 = vmatpush2.msra.mxu0 0.0
        %718 = vmatprep.subr.mxu0 0.0
        %719 = vmatpush2.msra.mxu0 0.0
        %720 = vmatprep.subr.mxu0 0.0
        %721 = vmatpush2.msra.mxu0 0.0
        %722 = vmatprep.mubr.f32.mxu0 0.0
        %723 = vmatmul.mubr.f32.gmra.mxu0 %v559
        %v724 = vpop.f32.mrf.mxu0
        %v725 = vadd.f32 %v555, %v724
        %v726 = vpop.f32.mrf.mxu0
        %727 = vmatprep.mubr.f32.mxu0 0.0
        %728 = vmatmul.mubr.f32.gmra.mxu0 %v562
        %v729 = vpop.f32.mrf.mxu0
        %v730 = vadd.f32 %v555, %v729
        %v731 = vpop.f32.mrf.mxu0
        %732 = vmatprep.mubr.f32.mxu0 0.0
        %733 = vmatmul.mubr.f32.gmra.mxu0 %v565
        %v734 = vpop.f32.mrf.mxu0
        %v735 = vadd.f32 %v555, %v734
        %v736 = vpop.f32.mrf.mxu0
        %737 = vmatprep.mubr.f32.mxu0 0.0
        %738 = vmatmul.mubr.f32.gmra.mxu0 %v568
        %v739 = vpop.f32.mrf.mxu0
        %v740 = vadd.f32 %v555, %v739
        %v741 = vpop.f32.mrf.mxu0
        %742 = vmatprep.mubr.f32.mxu0 0.0
        %743 = vmatmul.mubr.f32.gmra.mxu0 %v571
        %v744 = vpop.f32.mrf.mxu0
        %v745 = vadd.f32 %v555, %v744
        %v746 = vpop.f32.mrf.mxu0
        %747 = vmatprep.mubr.f32.mxu0 0.0
        %748 = vmatmul.mubr.f32.gmra.mxu0 %v574
        %v749 = vpop.f32.mrf.mxu0
        %v750 = vadd.f32 %v555, %v749
        %v751 = vpop.f32.mrf.mxu0
        %752 = vmatprep.mubr.f32.mxu0 0.0
        %753 = vmatmul.mubr.f32.gmra.mxu0 %v577
        %v754 = vpop.f32.mrf.mxu0
        %v755 = vadd.f32 %v555, %v754
        %v756 = vpop.f32.mrf.mxu0
        %757 = vmatprep.mubr.f32.mxu0 0.0
        %758 = vmatmul.mubr.f32.gmra.mxu0 %v580
        %v759 = vpop.f32.mrf.mxu0
        %v760 = vadd.f32 %v555, %v759
        %v761 = vpop.f32.mrf.mxu0
        %762 = vmatprep.mubr.f32.mxu0 0.0
        %763 = vmatmul.mubr.f32.gmra.mxu0 %v583
        %v764 = vpop.f32.mrf.mxu0
        %v765 = vadd.f32 %v555, %v764
        %v766 = vpop.f32.mrf.mxu0
        %767 = vmatprep.mubr.f32.mxu0 0.0
        %768 = vmatmul.mubr.f32.gmra.mxu0 %v586
        %v769 = vpop.f32.mrf.mxu0
        %v770 = vadd.f32 %v555, %v769
        %v771 = vpop.f32.mrf.mxu0
        %772 = vmatprep.mubr.f32.mxu0 0.0
        %773 = vmatmul.mubr.f32.gmra.mxu0 %v589
        %v774 = vpop.f32.mrf.mxu0
        %v775 = vadd.f32 %v555, %v774
        %v776 = vpop.f32.mrf.mxu0
        %777 = vmatprep.mubr.f32.mxu0 0.0
        %778 = vmatmul.mubr.f32.gmra.mxu0 %v592
        %v779 = vpop.f32.mrf.mxu0
        %v780 = vadd.f32 %v555, %v779
        %v781 = vpop.f32.mrf.mxu0
        %782 = vmatprep.mubr.f32.mxu0 0.0
        %783 = vmatmul.mubr.f32.gmra.mxu0 %v595
        %v784 = vpop.f32.mrf.mxu0
        %v785 = vadd.f32 %v555, %v784
        %v786 = vpop.f32.mrf.mxu0
        %787 = vmatprep.mubr.f32.mxu0 0.0
        %788 = vmatmul.mubr.f32.gmra.mxu0 %v598
        %v789 = vpop.f32.mrf.mxu0
        %v790 = vadd.f32 %v555, %v789
        %v791 = vpop.f32.mrf.mxu0
        %792 = vmatprep.mubr.f32.mxu0 0.0
        %793 = vmatmul.mubr.f32.gmra.mxu0 %v601
        %v794 = vpop.f32.mrf.mxu0
        %v795 = vadd.f32 %v555, %v794
        %v796 = vpop.f32.mrf.mxu0
        %797 = vmatprep.mubr.f32.mxu0 0.0
        %798 = vmatmul.mubr.f32.gmra.mxu0 %v604
        %v799 = vpop.f32.mrf.mxu0
        %v800 = vadd.f32 %v555, %v799
        %v801 = vpop.f32.mrf.mxu0
        %802 = vmatprep.mubr.f32.mxu0 0.0
        %803 = vmatmul.mubr.f32.gmra.mxu0 %v607
        %v804 = vpop.f32.mrf.mxu0
        %v805 = vadd.f32 %v555, %v804
        %v806 = vpop.f32.mrf.mxu0
        %807 = vmatprep.mubr.f32.mxu0 0.0
        %808 = vmatmul.mubr.f32.gmra.mxu0 %v610
        %v809 = vpop.f32.mrf.mxu0
        %v810 = vadd.f32 %v555, %v809
        %v811 = vpop.f32.mrf.mxu0
        %812 = vmatprep.mubr.f32.mxu0 0.0
        %813 = vmatmul.mubr.f32.gmra.mxu0 %v613
        %v814 = vpop.f32.mrf.mxu0
        %v815 = vadd.f32 %v555, %v814
        %v816 = vpop.f32.mrf.mxu0
        %817 = vmatprep.mubr.f32.mxu0 0.0
        %818 = vmatmul.mubr.f32.gmra.mxu0 %v616
        %v819 = vpop.f32.mrf.mxu0
        %v820 = vadd.f32 %v555, %v819
        %v821 = vpop.f32.mrf.mxu0
        %822 = vmatprep.mubr.f32.mxu0 0.0
        %823 = vmatmul.mubr.f32.gmra.mxu0 %v619
        %v824 = vpop.f32.mrf.mxu0
        %v825 = vadd.f32 %v555, %v824
        %v826 = vpop.f32.mrf.mxu0
        %827 = vmatprep.mubr.f32.mxu0 0.0
        %828 = vmatmul.mubr.f32.gmra.mxu0 %v622
        %v829 = vpop.f32.mrf.mxu0
        %v830 = vadd.f32 %v555, %v829
        %v831 = vpop.f32.mrf.mxu0
        %832 = vmatprep.mubr.f32.mxu0 0.0
        %833 = vmatmul.mubr.f32.gmra.mxu0 %v625
        %v834 = vpop.f32.mrf.mxu0
        %v835 = vadd.f32 %v555, %v834
        %v836 = vpop.f32.mrf.mxu0
        %837 = vmatprep.mubr.f32.mxu0 0.0
        %838 = vmatmul.mubr.f32.gmra.mxu0 %v628
        %v839 = vpop.f32.mrf.mxu0
        %v840 = vadd.f32 %v555, %v839
        %v841 = vpop.f32.mrf.mxu0
        %842 = vmatprep.mubr.f32.mxu0 0.0
        %843 = vmatmul.mubr.f32.gmra.mxu0 %v631
        %v844 = vpop.f32.mrf.mxu0
        %v845 = vadd.f32 %v555, %v844
        %v846 = vpop.f32.mrf.mxu0
        %847 = vmatprep.mubr.f32.mxu0 0.0
        %848 = vmatmul.mubr.f32.gmra.mxu0 %v634
        %v849 = vpop.f32.mrf.mxu0
        %v850 = vadd.f32 %v555, %v849
        %v851 = vpop.f32.mrf.mxu0
        %852 = vmatprep.mubr.f32.mxu0 0.0
        %853 = vmatmul.mubr.f32.gmra.mxu0 %v637
        %v854 = vpop.f32.mrf.mxu0
        %v855 = vadd.f32 %v555, %v854
        %v856 = vpop.f32.mrf.mxu0
        %857 = vmatprep.mubr.f32.mxu0 0.0
        %858 = vmatmul.mubr.f32.gmra.mxu0 %v640
        %v859 = vpop.f32.mrf.mxu0
        %v860 = vadd.f32 %v555, %v859
        %v861 = vpop.f32.mrf.mxu0
        %862 = vmatprep.mubr.f32.mxu0 0.0
        %863 = vmatmul.mubr.f32.gmra.mxu0 %v643
        %v864 = vpop.f32.mrf.mxu0
        %v865 = vadd.f32 %v555, %v864
        %v866 = vpop.f32.mrf.mxu0
        %867 = vmatprep.mubr.f32.mxu0 0.0
        %868 = vmatmul.mubr.f32.gmra.mxu0 %v646
        %v869 = vpop.f32.mrf.mxu0
        %v870 = vadd.f32 %v555, %v869
        %v871 = vpop.f32.mrf.mxu0
        %872 = vmatprep.mubr.f32.mxu0 0.0
        %873 = vmatmul.mubr.f32.gmra.mxu0 %v649
        %v874 = vpop.f32.mrf.mxu0
        %v875 = vadd.f32 %v555, %v874
        %v876 = vpop.f32.mrf.mxu0
        %877 = vmatprep.mubr.f32.mxu0 0.0
        %878 = vmatmul.mubr.f32.gmra.mxu0 %v652
        %v879 = vpop.f32.mrf.mxu0
        %v880 = vadd.f32 %v555, %v879
        %v881 = vpop.f32.mrf.mxu0
        %882 = vdwg.mxu0
        %v883 = vld [vmem:[%s4] sm:$0x1]
        %v884 = vld [vmem:[%s5] sm:$0x1]
        %v885 = vsel %vm467, %v725, 0.0
        %v886 = vsel %vm467, %v730, 0.0
        %v887 = vadd.f32 %v885, %v886
        %v888 = vsel %vm467, %v735, 0.0
        %v889 = vadd.f32 %v887, %v888
        %v890 = vsel %vm467, %v740, 0.0
        %v891 = vadd.f32 %v889, %v890
        %v892 = vsel %vm467, %v745, 0.0
        %v893 = vadd.f32 %v891, %v892
        %v894 = vsel %vm467, %v750, 0.0
        %v895 = vadd.f32 %v893, %v894
        %v896 = vsel %vm467, %v755, 0.0
        %v897 = vadd.f32 %v895, %v896
        %v898 = vsel %vm467, %v760, 0.0
        %v899 = vadd.f32 %v897, %v898
        %v900 = vsel %vm467, %v765, 0.0
        %v901 = vadd.f32 %v899, %v900
        %v902 = vsel %vm467, %v770, 0.0
        %v903 = vadd.f32 %v901, %v902
        %v904 = vsel %vm467, %v775, 0.0
        %v905 = vadd.f32 %v903, %v904
        %v906 = vsel %vm467, %v780, 0.0
        %v907 = vadd.f32 %v905, %v906
        %v908 = vsel %vm467, %v785, 0.0
        %v909 = vadd.f32 %v907, %v908
        %v910 = vsel %vm467, %v790, 0.0
        %v911 = vadd.f32 %v909, %v910
        %v912 = vsel %vm467, %v795, 0.0
        %v913 = vadd.f32 %v911, %v912
        %v914 = vsel %vm467, %v800, 0.0
        %v915 = vadd.f32 %v913, %v914
        %v916 = vsel %vm467, %v805, 0.0
        %v917 = vadd.f32 %v915, %v916
        %v918 = vsel %vm467, %v810, 0.0
        %v919 = vadd.f32 %v917, %v918
        %v920 = vsel %vm467, %v815, 0.0
        %v921 = vadd.f32 %v919, %v920
        %v922 = vsel %vm467, %v820, 0.0
        %v923 = vadd.f32 %v921, %v922
        %v924 = vsel %vm467, %v825, 0.0
        %v925 = vadd.f32 %v923, %v924
        %v926 = vsel %vm467, %v830, 0.0
        %v927 = vadd.f32 %v925, %v926
        %v928 = vsel %vm467, %v835, 0.0
        %v929 = vadd.f32 %v927, %v928
        %v930 = vsel %vm467, %v840, 0.0
        %v931 = vadd.f32 %v929, %v930
        %v932 = vsel %vm467, %v845, 0.0
        %v933 = vadd.f32 %v931, %v932
        %v934 = vsel %vm467, %v850, 0.0
        %v935 = vadd.f32 %v933, %v934
        %v936 = vsel %vm467, %v855, 0.0
        %v937 = vadd.f32 %v935, %v936
        %v938 = vsel %vm467, %v860, 0.0
        %v939 = vadd.f32 %v937, %v938
        %v940 = vsel %vm467, %v865, 0.0
        %v941 = vadd.f32 %v939, %v940
        %v942 = vsel %vm467, %v870, 0.0
        %v943 = vadd.f32 %v941, %v942
        %v944 = vsel %vm467, %v875, 0.0
        %v945 = vadd.f32 %v943, %v944
        %v946 = vsel %vm467, %v880, 0.0
        %v947 = vadd.f32 %v945, %v946
        %v948 = vrot.slane %v947, 4
        %v949 = vadd.f32 %v947, %v948
        %v950 = vrot.slane %v949, 2
        %v951 = vadd.f32 %v949, %v950
        %v952 = vrot.slane %v951, 1
        %v953 = vadd.f32 %v951, %v952
        %v954 = vmul.f32 %v725, %v725
        %v955 = vmul.f32 %v730, %v730
        %v956 = vmul.f32 %v735, %v735
        %v957 = vmul.f32 %v740, %v740
        %v958 = vmul.f32 %v745, %v745
        %v959 = vmul.f32 %v750, %v750
        %v960 = vmul.f32 %v755, %v755
        %v961 = vmul.f32 %v760, %v760
        %v962 = vmul.f32 %v765, %v765
        %v963 = vmul.f32 %v770, %v770
        %v964 = vmul.f32 %v775, %v775
        %v965 = vmul.f32 %v780, %v780
        %v966 = vmul.f32 %v785, %v785
        %v967 = vmul.f32 %v790, %v790
        %v968 = vmul.f32 %v795, %v795
        %v969 = vmul.f32 %v800, %v800
        %v970 = vmul.f32 %v805, %v805
        %v971 = vmul.f32 %v810, %v810
        %v972 = vmul.f32 %v815, %v815
        %v973 = vmul.f32 %v820, %v820
        %v974 = vmul.f32 %v825, %v825
        %v975 = vmul.f32 %v830, %v830
        %v976 = vmul.f32 %v835, %v835
        %v977 = vmul.f32 %v840, %v840
        %v978 = vmul.f32 %v845, %v845
        %v979 = vmul.f32 %v850, %v850
        %v980 = vmul.f32 %v855, %v855
        %v981 = vmul.f32 %v860, %v860
        %v982 = vmul.f32 %v865, %v865
        %v983 = vmul.f32 %v870, %v870
        %v984 = vmul.f32 %v875, %v875
        %v985 = vmul.f32 %v880, %v880
        %v986 = vsel %vm467, %v954, 0.0
        %v987 = vsel %vm467, %v955, 0.0
        %v988 = vadd.f32 %v986, %v987
        %v989 = vsel %vm467, %v956, 0.0
        %v990 = vadd.f32 %v988, %v989
        %v991 = vsel %vm467, %v957, 0.0
        %v992 = vadd.f32 %v990, %v991
        %v993 = vsel %vm467, %v958, 0.0
        %v994 = vadd.f32 %v992, %v993
        %v995 = vsel %vm467, %v959, 0.0
        %v996 = vadd.f32 %v994, %v995
        %v997 = vsel %vm467, %v960, 0.0
        %v998 = vadd.f32 %v996, %v997
        %v999 = vsel %vm467, %v961, 0.0
        %v1000 = vadd.f32 %v998, %v999
        %v1001 = vsel %vm467, %v962, 0.0
        %v1002 = vadd.f32 %v1000, %v1001
        %v1003 = vsel %vm467, %v963, 0.0
        %v1004 = vadd.f32 %v1002, %v1003
        %v1005 = vsel %vm467, %v964, 0.0
        %v1006 = vadd.f32 %v1004, %v1005
        %v1007 = vsel %vm467, %v965, 0.0
        %v1008 = vadd.f32 %v1006, %v1007
        %v1009 = vsel %vm467, %v966, 0.0
        %v1010 = vadd.f32 %v1008, %v1009
        %v1011 = vsel %vm467, %v967, 0.0
        %v1012 = vadd.f32 %v1010, %v1011
        %v1013 = vsel %vm467, %v968, 0.0
        %v1014 = vadd.f32 %v1012, %v1013
        %v1015 = vsel %vm467, %v969, 0.0
        %v1016 = vadd.f32 %v1014, %v1015
        %v1017 = vsel %vm467, %v970, 0.0
        %v1018 = vadd.f32 %v1016, %v1017
        %v1019 = vsel %vm467, %v971, 0.0
        %v1020 = vadd.f32 %v1018, %v1019
        %v1021 = vsel %vm467, %v972, 0.0
        %v1022 = vadd.f32 %v1020, %v1021
        %v1023 = vsel %vm467, %v973, 0.0
        %v1024 = vadd.f32 %v1022, %v1023
        %v1025 = vsel %vm467, %v974, 0.0
        %v1026 = vadd.f32 %v1024, %v1025
        %v1027 = vsel %vm467, %v975, 0.0
        %v1028 = vadd.f32 %v1026, %v1027
        %v1029 = vsel %vm467, %v976, 0.0
        %v1030 = vadd.f32 %v1028, %v1029
        %v1031 = vsel %vm467, %v977, 0.0
        %v1032 = vadd.f32 %v1030, %v1031
        %v1033 = vsel %vm467, %v978, 0.0
        %v1034 = vadd.f32 %v1032, %v1033
        %v1035 = vsel %vm467, %v979, 0.0
        %v1036 = vadd.f32 %v1034, %v1035
        %v1037 = vsel %vm467, %v980, 0.0
        %v1038 = vadd.f32 %v1036, %v1037
        %v1039 = vsel %vm467, %v981, 0.0
        %v1040 = vadd.f32 %v1038, %v1039
        %v1041 = vsel %vm467, %v982, 0.0
        %v1042 = vadd.f32 %v1040, %v1041
        %v1043 = vsel %vm467, %v983, 0.0
        %v1044 = vadd.f32 %v1042, %v1043
        %v1045 = vsel %vm467, %v984, 0.0
        %v1046 = vadd.f32 %v1044, %v1045
        %v1047 = vsel %vm467, %v985, 0.0
        %v1048 = vadd.f32 %v1046, %v1047
        %v1049 = vrot.slane %v1048, 4
        %v1050 = vadd.f32 %v1048, %v1049
        %v1051 = vrot.slane %v1050, 2
        %v1052 = vadd.f32 %v1050, %v1051
        %v1053 = vrot.slane %v1052, 1
        %v1054 = vadd.f32 %v1052, %v1053
        %v1056 = vsel %vm467, %v953, 0
        %1058 = vmatprep.subr.mxu0 0.0
        %1059 = vmatpush1.msra.mxu0 0.0
        %1060 = vmatprep.subr.mxu0 0.0
        %1061 = vmatpush1.msra.mxu0 0.0
        %1062 = vmatprep.subr.mxu0 0.0
        %1063 = vmatpush1.msra.mxu0 0.0
        %1064 = vmatprep.subr.mxu0 0.0
        %1065 = vmatpush1.msra.mxu0 0.0
        %1066 = vmatprep.subr.mxu0 0.0
        %1067 = vmatpush1.msra.mxu0 0.0
        %1068 = vmatprep.subr.mxu0 0.0
        %1069 = vmatpush1.msra.mxu0 0.0
        %1070 = vmatprep.subr.mxu0 0.0
        %1071 = vmatpush1.msra.mxu0 0.0
        %1072 = vmatprep.subr.mxu0 0.0
        %1073 = vmatpush1.msra.mxu0 0.0
        %1074 = vmatprep.subr.mxu0 0.0
        %1075 = vmatpush1.msra.mxu0 %v466
        %1076 = vmatprep.subr.mxu0 0.0
        %1077 = vmatpush1.msra.mxu0 %v465
        %1078 = vmatprep.subr.mxu0 0.0
        %1079 = vmatpush1.msra.mxu0 %v464
        %1080 = vmatprep.subr.mxu0 0.0
        %1081 = vmatpush1.msra.mxu0 %v463
        %1082 = vmatprep.subr.mxu0 0.0
        %1083 = vmatpush1.msra.mxu0 %v462
        %1084 = vmatprep.subr.mxu0 0.0
        %1085 = vmatpush1.msra.mxu0 %v461
        %1086 = vmatprep.subr.mxu0 0.0
        %1087 = vmatpush1.msra.mxu0 %v460
        %1088 = vmatprep.subr.mxu0 0.0
        %1089 = vmatpush1.msra.mxu0 %v459
        %1090 = vmatprep.subr.mxu0 0.0
        %1091 = vmatpush2.msra.mxu0 0.0
        %1092 = vmatprep.subr.mxu0 0.0
        %1093 = vmatpush2.msra.mxu0 0.0
        %1094 = vmatprep.subr.mxu0 0.0
        %1095 = vmatpush2.msra.mxu0 0.0
        %1096 = vmatprep.subr.mxu0 0.0
        %1097 = vmatpush2.msra.mxu0 0.0
        %1098 = vmatprep.subr.mxu0 0.0
        %1099 = vmatpush2.msra.mxu0 0.0
        %1100 = vmatprep.subr.mxu0 0.0
        %1101 = vmatpush2.msra.mxu0 0.0
        %1102 = vmatprep.subr.mxu0 0.0
        %1103 = vmatpush2.msra.mxu0 0.0
        %1104 = vmatprep.subr.mxu0 0.0
        %1105 = vmatpush2.msra.mxu0 0.0
        %1106 = vmatprep.subr.mxu0 0.0
        %1107 = vmatpush2.msra.mxu0 0.0
        %1108 = vmatprep.subr.mxu0 0.0
        %1109 = vmatpush2.msra.mxu0 0.0
        %1110 = vmatprep.subr.mxu0 0.0
        %1111 = vmatpush2.msra.mxu0 0.0
        %1112 = vmatprep.subr.mxu0 0.0
        %1113 = vmatpush2.msra.mxu0 0.0
        %1114 = vmatprep.subr.mxu0 0.0
        %1115 = vmatpush2.msra.mxu0 0.0
        %1116 = vmatprep.subr.mxu0 0.0
        %1117 = vmatpush2.msra.mxu0 0.0
        %1118 = vmatprep.subr.mxu0 0.0
        %1119 = vmatpush2.msra.mxu0 0.0
        %1120 = vmatprep.subr.mxu0 0.0
        %1121 = vmatpush2.msra.mxu0 0.0
        %1122 = vmatprep.mubr.f32.mxu0 0.0
        %1123 = vmatmul.mubr.f32.gmra.mxu0 %v1056
        %v1124 = vpop.f32.mrf.mxu0
        %v1125 = vadd.f32 0.0, %v1124
        %v1126 = vpop.f32.mrf.mxu0
        %1127 = vdwg.mxu0
        %v1128 = vmul.f32 %v1125, 0.00024414063
        %v1130 = vsel %vm467, %v1054, 0
        %1132 = vmatprep.subr.mxu0 0.0
        %1133 = vmatpush1.msra.mxu0 0.0
        %1134 = vmatprep.subr.mxu0 0.0
        %1135 = vmatpush1.msra.mxu0 0.0
        %1136 = vmatprep.subr.mxu0 0.0
        %1137 = vmatpush1.msra.mxu0 0.0
        %1138 = vmatprep.subr.mxu0 0.0
        %1139 = vmatpush1.msra.mxu0 0.0
        %1140 = vmatprep.subr.mxu0 0.0
        %1141 = vmatpush1.msra.mxu0 0.0
        %1142 = vmatprep.subr.mxu0 0.0
        %1143 = vmatpush1.msra.mxu0 0.0
        %1144 = vmatprep.subr.mxu0 0.0
        %1145 = vmatpush1.msra.mxu0 0.0
        %1146 = vmatprep.subr.mxu0 0.0
        %1147 = vmatpush1.msra.mxu0 0.0
        %1148 = vmatprep.subr.mxu0 0.0
        %1149 = vmatpush1.msra.mxu0 %v466
        %1150 = vmatprep.subr.mxu0 0.0
        %1151 = vmatpush1.msra.mxu0 %v465
        %1152 = vmatprep.subr.mxu0 0.0
        %1153 = vmatpush1.msra.mxu0 %v464
        %1154 = vmatprep.subr.mxu0 0.0
        %1155 = vmatpush1.msra.mxu0 %v463
        %1156 = vmatprep.subr.mxu0 0.0
        %1157 = vmatpush1.msra.mxu0 %v462
        %1158 = vmatprep.subr.mxu0 0.0
        %1159 = vmatpush1.msra.mxu0 %v461
        %1160 = vmatprep.subr.mxu0 0.0
        %1161 = vmatpush1.msra.mxu0 %v460
        %1162 = vmatprep.subr.mxu0 0.0
        %1163 = vmatpush1.msra.mxu0 %v459
        %1164 = vmatprep.subr.mxu0 0.0
        %1165 = vmatpush2.msra.mxu0 0.0
        %1166 = vmatprep.subr.mxu0 0.0
        %1167 = vmatpush2.msra.mxu0 0.0
        %1168 = vmatprep.subr.mxu0 0.0
        %1169 = vmatpush2.msra.mxu0 0.0
        %1170 = vmatprep.subr.mxu0 0.0
        %1171 = vmatpush2.msra.mxu0 0.0
        %1172 = vmatprep.subr.mxu0 0.0
        %1173 = vmatpush2.msra.mxu0 0.0
        %1174 = vmatprep.subr.mxu0 0.0
        %1175 = vmatpush2.msra.mxu0 0.0
        %1176 = vmatprep.subr.mxu0 0.0
        %1177 = vmatpush2.msra.mxu0 0.0
        %1178 = vmatprep.subr.mxu0 0.0
        %1179 = vmatpush2.msra.mxu0 0.0
        %1180 = vmatprep.subr.mxu0 0.0
        %1181 = vmatpush2.msra.mxu0 0.0
        %1182 = vmatprep.subr.mxu0 0.0
        %1183 = vmatpush2.msra.mxu0 0.0
        %1184 = vmatprep.subr.mxu0 0.0
        %1185 = vmatpush2.msra.mxu0 0.0
        %1186 = vmatprep.subr.mxu0 0.0
        %1187 = vmatpush2.msra.mxu0 0.0
        %1188 = vmatprep.subr.mxu0 0.0
        %1189 = vmatpush2.msra.mxu0 0.0
        %1190 = vmatprep.subr.mxu0 0.0
        %1191 = vmatpush2.msra.mxu0 0.0
        %1192 = vmatprep.subr.mxu0 0.0
        %1193 = vmatpush2.msra.mxu0 0.0
        %1194 = vmatprep.subr.mxu0 0.0
        %1195 = vmatpush2.msra.mxu0 0.0
        %1196 = vmatprep.mubr.f32.mxu0 0.0
        %1197 = vmatmul.mubr.f32.gmra.mxu0 %v1130
        %v1198 = vpop.f32.mrf.mxu0
        %v1199 = vadd.f32 0.0, %v1198
        %v1200 = vpop.f32.mrf.mxu0
        %1201 = vdwg.mxu0
        %v1202 = vmul.f32 %v1199, 0.00024414063
        %v1203 = vmul.f32 %v1128, %v1128
        %v1204 = vsub.f32 %v1202, %v1203
        %v1205 = vmax.f32 %v1204, 0.0
        %v1206 = vadd.f32 %v1205, 1e-05
        %v1207 = vrsqrt.pop %v1206
        %v1208 = vmul.f32 %v883, %v1207
        %v1209 = vmul.f32 %v1128, %v1208
        %v1210 = vsub.f32 %v884, %v1209
        %v1212 = vlaneseq
        %v1213 = vshrl.u32 %v1212, 7
        %v1214 = vsub.s32 0, %v1213
        %v1215 = vrot.slane %v1208, %v1214
        %v1217 = vmul.f32 %v725, %v1215
        %v1218 = vmul.f32 %v730, %v1215
        %v1219 = vmul.f32 %v735, %v1215
        %v1220 = vmul.f32 %v740, %v1215
        %v1221 = vmul.f32 %v745, %v1215
        %v1222 = vmul.f32 %v750, %v1215
        %v1223 = vmul.f32 %v755, %v1215
        %v1224 = vmul.f32 %v760, %v1215
        %v1225 = vmul.f32 %v765, %v1215
        %v1226 = vmul.f32 %v770, %v1215
        %v1227 = vmul.f32 %v775, %v1215
        %v1228 = vmul.f32 %v780, %v1215
        %v1229 = vmul.f32 %v785, %v1215
        %v1230 = vmul.f32 %v790, %v1215
        %v1231 = vmul.f32 %v795, %v1215
        %v1232 = vmul.f32 %v800, %v1215
        %v1233 = vmul.f32 %v805, %v1215
        %v1234 = vmul.f32 %v810, %v1215
        %v1235 = vmul.f32 %v815, %v1215
        %v1236 = vmul.f32 %v820, %v1215
        %v1237 = vmul.f32 %v825, %v1215
        %v1238 = vmul.f32 %v830, %v1215
        %v1239 = vmul.f32 %v835, %v1215
        %v1240 = vmul.f32 %v840, %v1215
        %v1241 = vmul.f32 %v845, %v1215
        %v1242 = vmul.f32 %v850, %v1215
        %v1243 = vmul.f32 %v855, %v1215
        %v1244 = vmul.f32 %v860, %v1215
        %v1245 = vmul.f32 %v865, %v1215
        %v1246 = vmul.f32 %v870, %v1215
        %v1247 = vmul.f32 %v875, %v1215
        %v1248 = vmul.f32 %v880, %v1215
        %v1250 = vlaneseq
        %v1251 = vshrl.u32 %v1250, 7
        %v1252 = vsub.s32 0, %v1251
        %v1253 = vrot.slane %v1210, %v1252
        %v1255 = vadd.f32 %v1217, %v1253
        %v1256 = vadd.f32 %v1218, %v1253
        %v1257 = vadd.f32 %v1219, %v1253
        %v1258 = vadd.f32 %v1220, %v1253
        %v1259 = vadd.f32 %v1221, %v1253
        %v1260 = vadd.f32 %v1222, %v1253
        %v1261 = vadd.f32 %v1223, %v1253
        %v1262 = vadd.f32 %v1224, %v1253
        %v1263 = vadd.f32 %v1225, %v1253
        %v1264 = vadd.f32 %v1226, %v1253
        %v1265 = vadd.f32 %v1227, %v1253
        %v1266 = vadd.f32 %v1228, %v1253
        %v1267 = vadd.f32 %v1229, %v1253
        %v1268 = vadd.f32 %v1230, %v1253
        %v1269 = vadd.f32 %v1231, %v1253
        %v1270 = vadd.f32 %v1232, %v1253
        %v1271 = vadd.f32 %v1233, %v1253
        %v1272 = vadd.f32 %v1234, %v1253
        %v1273 = vadd.f32 %v1235, %v1253
        %v1274 = vadd.f32 %v1236, %v1253
        %v1275 = vadd.f32 %v1237, %v1253
        %v1276 = vadd.f32 %v1238, %v1253
        %v1277 = vadd.f32 %v1239, %v1253
        %v1278 = vadd.f32 %v1240, %v1253
        %v1279 = vadd.f32 %v1241, %v1253
        %v1280 = vadd.f32 %v1242, %v1253
        %v1281 = vadd.f32 %v1243, %v1253
        %v1282 = vadd.f32 %v1244, %v1253
        %v1283 = vadd.f32 %v1245, %v1253
        %v1284 = vadd.f32 %v1246, %v1253
        %v1285 = vadd.f32 %v1247, %v1253
        %v1286 = vadd.f32 %v1248, %v1253
        %v1287 = vmax.f32 %v1255, 0.0
        %v1288 = vmax.f32 %v1256, 0.0
        %v1289 = vmax.f32 %v1257, 0.0
        %v1290 = vmax.f32 %v1258, 0.0
        %v1291 = vmax.f32 %v1259, 0.0
        %v1292 = vmax.f32 %v1260, 0.0
        %v1293 = vmax.f32 %v1261, 0.0
        %v1294 = vmax.f32 %v1262, 0.0
        %v1295 = vmax.f32 %v1263, 0.0
        %v1296 = vmax.f32 %v1264, 0.0
        %v1297 = vmax.f32 %v1265, 0.0
        %v1298 = vmax.f32 %v1266, 0.0
        %v1299 = vmax.f32 %v1267, 0.0
        %v1300 = vmax.f32 %v1268, 0.0
        %v1301 = vmax.f32 %v1269, 0.0
        %v1302 = vmax.f32 %v1270, 0.0
        %v1303 = vmax.f32 %v1271, 0.0
        %v1304 = vmax.f32 %v1272, 0.0
        %v1305 = vmax.f32 %v1273, 0.0
        %v1306 = vmax.f32 %v1274, 0.0
        %v1307 = vmax.f32 %v1275, 0.0
        %v1308 = vmax.f32 %v1276, 0.0
        %v1309 = vmax.f32 %v1277, 0.0
        %v1310 = vmax.f32 %v1278, 0.0
        %v1311 = vmax.f32 %v1279, 0.0
        %v1312 = vmax.f32 %v1280, 0.0
        %v1313 = vmax.f32 %v1281, 0.0
        %v1314 = vmax.f32 %v1282, 0.0
        %v1315 = vmax.f32 %v1283, 0.0
        %v1316 = vmax.f32 %v1284, 0.0
        %v1317 = vmax.f32 %v1285, 0.0
        %v1318 = vmax.f32 %v1286, 0.0
        %s1319 = scalar_lea.vmem [#allocation2], 24
        %1320 = vst.msk [vmem:[%s1319 + $0x1] sm:$0xff] %vm467, %v1287
        %1321 = vst.msk [vmem:[%s1319 + $0x9] sm:$0xff] %vm467, %v1288
        %1322 = vst.msk [vmem:[%s1319 + $0x19] sm:$0xff] %vm467, %v1289
        %1323 = vst.msk [vmem:[%s1319 + $0x21] sm:$0xff] %vm467, %v1290
        %1324 = vst.msk [vmem:[%s1319 + $0x31] sm:$0xff] %vm467, %v1291
        %1325 = vst.msk [vmem:[%s1319 + $0x39] sm:$0xff] %vm467, %v1292
        %1326 = vst.msk [vmem:[%s1319 + $0x49] sm:$0xff] %vm467, %v1293
        %1327 = vst.msk [vmem:[%s1319 + $0x51] sm:$0xff] %vm467, %v1294
        %1328 = vst.msk [vmem:[%s1319 + $0x61] sm:$0xff] %vm467, %v1295
        %1329 = vst.msk [vmem:[%s1319 + $0x69] sm:$0xff] %vm467, %v1296
        %1330 = vst.msk [vmem:[%s1319 + $0x79] sm:$0xff] %vm467, %v1297
        %1331 = vst.msk [vmem:[%s1319 + $0x81] sm:$0xff] %vm467, %v1298
        %1332 = vst.msk [vmem:[%s1319 + $0x91] sm:$0xff] %vm467, %v1299
        %1333 = vst.msk [vmem:[%s1319 + $0x99] sm:$0xff] %vm467, %v1300
        %1334 = vst.msk [vmem:[%s1319 + $0xa9] sm:$0xff] %vm467, %v1301
        %1335 = vst.msk [vmem:[%s1319 + $0xb1] sm:$0xff] %vm467, %v1302
        %1336 = vst.msk [vmem:[%s1319 + $0xc1] sm:$0xff] %vm467, %v1303
        %1337 = vst.msk [vmem:[%s1319 + $0xc9] sm:$0xff] %vm467, %v1304
        %1338 = vst.msk [vmem:[%s1319 + $0xd9] sm:$0xff] %vm467, %v1305
        %1339 = vst.msk [vmem:[%s1319 + $0xe1] sm:$0xff] %vm467, %v1306
        %1340 = vst.msk [vmem:[%s1319 + $0xf1] sm:$0xff] %vm467, %v1307
        %1341 = vst.msk [vmem:[%s1319 + $0xf9] sm:$0xff] %vm467, %v1308
        %1342 = vst.msk [vmem:[%s1319 + $0x109] sm:$0xff] %vm467, %v1309
        %1343 = vst.msk [vmem:[%s1319 + $0x111] sm:$0xff] %vm467, %v1310
        %1344 = vst.msk [vmem:[%s1319 + $0x121] sm:$0xff] %vm467, %v1311
        %1345 = vst.msk [vmem:[%s1319 + $0x129] sm:$0xff] %vm467, %v1312
        %1346 = vst.msk [vmem:[%s1319 + $0x139] sm:$0xff] %vm467, %v1313
        %1347 = vst.msk [vmem:[%s1319 + $0x141] sm:$0xff] %vm467, %v1314
        %1348 = vst.msk [vmem:[%s1319 + $0x151] sm:$0xff] %vm467, %v1315
        %1349 = vst.msk [vmem:[%s1319 + $0x159] sm:$0xff] %vm467, %v1316
        %1350 = vst.msk [vmem:[%s1319 + $0x169] sm:$0xff] %vm467, %v1317
        %1351 = vst.msk [vmem:[%s1319 + $0x171] sm:$0xff] %vm467, %v1318
        %v1352 = vld [vmem:[#allocation2] sm:$0xff]
        %v1353 = vld [vmem:[#allocation2 + $0x8] sm:$0xff]
        %v1354 = vld [vmem:[#allocation2 + $0x18] sm:$0xff]
        %v1355 = vld [vmem:[#allocation2 + $0x20] sm:$0xff]
        %v1356 = vld [vmem:[#allocation2 + $0x30] sm:$0xff]
        %v1357 = vld [vmem:[#allocation2 + $0x38] sm:$0xff]
        %v1358 = vld [vmem:[#allocation2 + $0x48] sm:$0xff]
        %v1359 = vld [vmem:[#allocation2 + $0x50] sm:$0xff]
        %v1360 = vld [vmem:[#allocation2 + $0x60] sm:$0xff]
        %v1361 = vld [vmem:[#allocation2 + $0x68] sm:$0xff]
        %v1362 = vld [vmem:[#allocation2 + $0x78] sm:$0xff]
        %v1363 = vld [vmem:[#allocation2 + $0x80] sm:$0xff]
        %v1364 = vld [vmem:[#allocation2 + $0x90] sm:$0xff]
        %v1365 = vld [vmem:[#allocation2 + $0x98] sm:$0xff]
        %v1366 = vld [vmem:[#allocation2 + $0xa8] sm:$0xff]
        %v1367 = vld [vmem:[#allocation2 + $0xb0] sm:$0xff]
        %v1368 = vld [vmem:[#allocation2 + $0xc0] sm:$0xff]
        %v1369 = vld [vmem:[#allocation2 + $0xc8] sm:$0xff]
        %v1370 = vld [vmem:[#allocation2 + $0xd8] sm:$0xff]
        %v1371 = vld [vmem:[#allocation2 + $0xe0] sm:$0xff]
        %v1372 = vld [vmem:[#allocation2 + $0xf0] sm:$0xff]
        %v1373 = vld [vmem:[#allocation2 + $0xf8] sm:$0xff]
        %v1374 = vld [vmem:[#allocation2 + $0x108] sm:$0xff]
        %v1375 = vld [vmem:[#allocation2 + $0x110] sm:$0xff]
        %v1376 = vld [vmem:[#allocation2 + $0x120] sm:$0xff]
        %v1377 = vld [vmem:[#allocation2 + $0x128] sm:$0xff]
        %v1378 = vld [vmem:[#allocation2 + $0x138] sm:$0xff]
        %v1379 = vld [vmem:[#allocation2 + $0x140] sm:$0xff]
        %v1380 = vld [vmem:[#allocation2 + $0x150] sm:$0xff]
        %v1381 = vld [vmem:[#allocation2 + $0x158] sm:$0xff]
        %v1382 = vld [vmem:[#allocation2 + $0x168] sm:$0xff]
        %v1383 = vld [vmem:[#allocation2 + $0x170] sm:$0xff]
        %v1384 = vld [vmem:[#allocation2 + $0x1] sm:$0xff]
        %v1385 = vld [vmem:[#allocation2 + $0x9] sm:$0xff]
        %v1386 = vld [vmem:[#allocation2 + $0x19] sm:$0xff]
        %v1387 = vld [vmem:[#allocation2 + $0x21] sm:$0xff]
        %v1388 = vld [vmem:[#allocation2 + $0x31] sm:$0xff]
        %v1389 = vld [vmem:[#allocation2 + $0x39] sm:$0xff]
        %v1390 = vld [vmem:[#allocation2 + $0x49] sm:$0xff]
        %v1391 = vld [vmem:[#allocation2 + $0x51] sm:$0xff]
        %v1392 = vld [vmem:[#allocation2 + $0x61] sm:$0xff]
        %v1393 = vld [vmem:[#allocation2 + $0x69] sm:$0xff]
        %v1394 = vld [vmem:[#allocation2 + $0x79] sm:$0xff]
        %v1395 = vld [vmem:[#allocation2 + $0x81] sm:$0xff]
        %v1396 = vld [vmem:[#allocation2 + $0x91] sm:$0xff]
        %v1397 = vld [vmem:[#allocation2 + $0x99] sm:$0xff]
        %v1398 = vld [vmem:[#allocation2 + $0xa9] sm:$0xff]
        %v1399 = vld [vmem:[#allocation2 + $0xb1] sm:$0xff]
        %v1400 = vld [vmem:[#allocation2 + $0xc1] sm:$0xff]
        %v1401 = vld [vmem:[#allocation2 + $0xc9] sm:$0xff]
        %v1402 = vld [vmem:[#allocation2 + $0xd9] sm:$0xff]
        %v1403 = vld [vmem:[#allocation2 + $0xe1] sm:$0xff]
        %v1404 = vld [vmem:[#allocation2 + $0xf1] sm:$0xff]
        %v1405 = vld [vmem:[#allocation2 + $0xf9] sm:$0xff]
        %v1406 = vld [vmem:[#allocation2 + $0x109] sm:$0xff]
        %v1407 = vld [vmem:[#allocation2 + $0x111] sm:$0xff]
        %v1408 = vld [vmem:[#allocation2 + $0x121] sm:$0xff]
        %v1409 = vld [vmem:[#allocation2 + $0x129] sm:$0xff]
        %v1410 = vld [vmem:[#allocation2 + $0x139] sm:$0xff]
        %v1411 = vld [vmem:[#allocation2 + $0x141] sm:$0xff]
        %v1412 = vld [vmem:[#allocation2 + $0x151] sm:$0xff]
        %v1413 = vld [vmem:[#allocation2 + $0x159] sm:$0xff]
        %v1414 = vld [vmem:[#allocation2 + $0x169] sm:$0xff]
        %v1415 = vld [vmem:[#allocation2 + $0x171] sm:$0xff]
        %1448 = vrot.lane.b32.xlu0 %v1384, 64
        %v1449 = vpop.permute.xlu0 %1448
        %1450 = vrot.lane.b32.xlu0 %v1385, 64
        %v1451 = vpop.permute.xlu0 %1450
        %1452 = vrot.lane.b32.xlu0 %v1386, 64
        %v1453 = vpop.permute.xlu0 %1452
        %1454 = vrot.lane.b32.xlu0 %v1387, 64
        %v1455 = vpop.permute.xlu0 %1454
        %1456 = vrot.lane.b32.xlu0 %v1388, 64
        %v1457 = vpop.permute.xlu0 %1456
        %1458 = vrot.lane.b32.xlu0 %v1389, 64
        %v1459 = vpop.permute.xlu0 %1458
        %1460 = vrot.lane.b32.xlu0 %v1390, 64
        %v1461 = vpop.permute.xlu0 %1460
        %1462 = vrot.lane.b32.xlu0 %v1391, 64
        %v1463 = vpop.permute.xlu0 %1462
        %1464 = vrot.lane.b32.xlu0 %v1392, 64
        %v1465 = vpop.permute.xlu0 %1464
        %1466 = vrot.lane.b32.xlu0 %v1393, 64
        %v1467 = vpop.permute.xlu0 %1466
        %1468 = vrot.lane.b32.xlu0 %v1394, 64
        %v1469 = vpop.permute.xlu0 %1468
        %1470 = vrot.lane.b32.xlu0 %v1395, 64
        %v1471 = vpop.permute.xlu0 %1470
        %1472 = vrot.lane.b32.xlu0 %v1396, 64
        %v1473 = vpop.permute.xlu0 %1472
        %1474 = vrot.lane.b32.xlu0 %v1397, 64
        %v1475 = vpop.permute.xlu0 %1474
        %1476 = vrot.lane.b32.xlu0 %v1398, 64
        %v1477 = vpop.permute.xlu0 %1476
        %1478 = vrot.lane.b32.xlu0 %v1399, 64
        %v1479 = vpop.permute.xlu0 %1478
        %1480 = vrot.lane.b32.xlu0 %v1400, 64
        %v1481 = vpop.permute.xlu0 %1480
        %1482 = vrot.lane.b32.xlu0 %v1401, 64
        %v1483 = vpop.permute.xlu0 %1482
        %1484 = vrot.lane.b32.xlu0 %v1402, 64
        %v1485 = vpop.permute.xlu0 %1484
        %1486 = vrot.lane.b32.xlu0 %v1403, 64
        %v1487 = vpop.permute.xlu0 %1486
        %1488 = vrot.lane.b32.xlu0 %v1404, 64
        %v1489 = vpop.permute.xlu0 %1488
        %1490 = vrot.lane.b32.xlu0 %v1405, 64
        %v1491 = vpop.permute.xlu0 %1490
        %1492 = vrot.lane.b32.xlu0 %v1406, 64
        %v1493 = vpop.permute.xlu0 %1492
        %1494 = vrot.lane.b32.xlu0 %v1407, 64
        %v1495 = vpop.permute.xlu0 %1494
        %1496 = vrot.lane.b32.xlu0 %v1408, 64
        %v1497 = vpop.permute.xlu0 %1496
        %1498 = vrot.lane.b32.xlu0 %v1409, 64
        %v1499 = vpop.permute.xlu0 %1498
        %1500 = vrot.lane.b32.xlu0 %v1410, 64
        %v1501 = vpop.permute.xlu0 %1500
        %1502 = vrot.lane.b32.xlu0 %v1411, 64
        %v1503 = vpop.permute.xlu0 %1502
        %1504 = vrot.lane.b32.xlu0 %v1412, 64
        %v1505 = vpop.permute.xlu0 %1504
        %1506 = vrot.lane.b32.xlu0 %v1413, 64
        %v1507 = vpop.permute.xlu0 %1506
        %1508 = vrot.lane.b32.xlu0 %v1414, 64
        %v1509 = vpop.permute.xlu0 %1508
        %1510 = vrot.lane.b32.xlu0 %v1415, 64
        %v1511 = vpop.permute.xlu0 %1510
        %v1544 = vsel %vm467, %v1352, %v1449
        %v1545 = vsel %vm467, %v1353, %v1451
        %v1546 = vsel %vm467, %v1354, %v1453
        %v1547 = vsel %vm467, %v1355, %v1455
        %v1548 = vsel %vm467, %v1356, %v1457
        %v1549 = vsel %vm467, %v1357, %v1459
        %v1550 = vsel %vm467, %v1358, %v1461
        %v1551 = vsel %vm467, %v1359, %v1463
        %v1552 = vsel %vm467, %v1360, %v1465
        %v1553 = vsel %vm467, %v1361, %v1467
        %v1554 = vsel %vm467, %v1362, %v1469
        %v1555 = vsel %vm467, %v1363, %v1471
        %v1556 = vsel %vm467, %v1364, %v1473
        %v1557 = vsel %vm467, %v1365, %v1475
        %v1558 = vsel %vm467, %v1366, %v1477
        %v1559 = vsel %vm467, %v1367, %v1479
        %v1560 = vsel %vm467, %v1368, %v1481
        %v1561 = vsel %vm467, %v1369, %v1483
        %v1562 = vsel %vm467, %v1370, %v1485
        %v1563 = vsel %vm467, %v1371, %v1487
        %v1564 = vsel %vm467, %v1372, %v1489
        %v1565 = vsel %vm467, %v1373, %v1491
        %v1566 = vsel %vm467, %v1374, %v1493
        %v1567 = vsel %vm467, %v1375, %v1495
        %v1568 = vsel %vm467, %v1376, %v1497
        %v1569 = vsel %vm467, %v1377, %v1499
        %v1570 = vsel %vm467, %v1378, %v1501
        %v1571 = vsel %vm467, %v1379, %v1503
        %v1572 = vsel %vm467, %v1380, %v1505
        %v1573 = vsel %vm467, %v1381, %v1507
        %v1574 = vsel %vm467, %v1382, %v1509
        %v1575 = vsel %vm467, %v1383, %v1511
        %1576 = vst [vmem:[#allocation3] sm:$0xff] %v1544
        %1577 = vst [vmem:[#allocation3 + $0x28] sm:$0xff] %v1545
        %1578 = vst [vmem:[#allocation3 + $0x50] sm:$0xff] %v1546
        %1579 = vst [vmem:[#allocation3 + $0x78] sm:$0xff] %v1547
        %1580 = vst [vmem:[#allocation3 + $0xa0] sm:$0xff] %v1548
        %1581 = vst [vmem:[#allocation3 + $0xc8] sm:$0xff] %v1549
        %1582 = vst [vmem:[#allocation3 + $0xf0] sm:$0xff] %v1550
        %1583 = vst [vmem:[#allocation3 + $0x118] sm:$0xff] %v1551
        %1584 = vst [vmem:[#allocation3 + $0x140] sm:$0xff] %v1552
        %1585 = vst [vmem:[#allocation3 + $0x168] sm:$0xff] %v1553
        %1586 = vst [vmem:[#allocation3 + $0x190] sm:$0xff] %v1554
        %1587 = vst [vmem:[#allocation3 + $0x1b8] sm:$0xff] %v1555
        %1588 = vst [vmem:[#allocation3 + $0x1e0] sm:$0xff] %v1556
        %1589 = vst [vmem:[#allocation3 + $0x208] sm:$0xff] %v1557
        %1590 = vst [vmem:[#allocation3 + $0x230] sm:$0xff] %v1558
        %1591 = vst [vmem:[#allocation3 + $0x258] sm:$0xff] %v1559
        %1592 = vst [vmem:[#allocation3 + $0x280] sm:$0xff] %v1560
        %1593 = vst [vmem:[#allocation3 + $0x2a8] sm:$0xff] %v1561
        %1594 = vst [vmem:[#allocation3 + $0x2d0] sm:$0xff] %v1562
        %1595 = vst [vmem:[#allocation3 + $0x2f8] sm:$0xff] %v1563
        %1596 = vst [vmem:[#allocation3 + $0x320] sm:$0xff] %v1564
        %1597 = vst [vmem:[#allocation3 + $0x348] sm:$0xff] %v1565
        %1598 = vst [vmem:[#allocation3 + $0x370] sm:$0xff] %v1566
        %1599 = vst [vmem:[#allocation3 + $0x398] sm:$0xff] %v1567
        %1600 = vst [vmem:[#allocation3 + $0x3c0] sm:$0xff] %v1568
        %1601 = vst [vmem:[#allocation3 + $0x3e8] sm:$0xff] %v1569
        %1602 = vst [vmem:[#allocation3 + $0x410] sm:$0xff] %v1570
        %1603 = vst [vmem:[#allocation3 + $0x438] sm:$0xff] %v1571
        %1604 = vst [vmem:[#allocation3 + $0x460] sm:$0xff] %v1572
        %1605 = vst [vmem:[#allocation3 + $0x488] sm:$0xff] %v1573
        %1606 = vst [vmem:[#allocation3 + $0x4b0] sm:$0xff] %v1574
        %1607 = vst [vmem:[#allocation3 + $0x4d8] sm:$0xff] %v1575
        %v1608 = vld [vmem:[#allocation2 + $0x2] sm:$0xff]
        %v1609 = vld [vmem:[#allocation2 + $0xa] sm:$0xff]
        %v1610 = vld [vmem:[#allocation2 + $0x1a] sm:$0xff]
        %v1611 = vld [vmem:[#allocation2 + $0x22] sm:$0xff]
        %v1612 = vld [vmem:[#allocation2 + $0x32] sm:$0xff]
        %v1613 = vld [vmem:[#allocation2 + $0x3a] sm:$0xff]
        %v1614 = vld [vmem:[#allocation2 + $0x4a] sm:$0xff]
        %v1615 = vld [vmem:[#allocation2 + $0x52] sm:$0xff]
        %v1616 = vld [vmem:[#allocation2 + $0x62] sm:$0xff]
        %v1617 = vld [vmem:[#allocation2 + $0x6a] sm:$0xff]
        %v1618 = vld [vmem:[#allocation2 + $0x7a] sm:$0xff]
        %v1619 = vld [vmem:[#allocation2 + $0x82] sm:$0xff]
        %v1620 = vld [vmem:[#allocation2 + $0x92] sm:$0xff]
        %v1621 = vld [vmem:[#allocation2 + $0x9a] sm:$0xff]
        %v1622 = vld [vmem:[#allocation2 + $0xaa] sm:$0xff]
        %v1623 = vld [vmem:[#allocation2 + $0xb2] sm:$0xff]
        %v1624 = vld [vmem:[#allocation2 + $0xc2] sm:$0xff]
        %v1625 = vld [vmem:[#allocation2 + $0xca] sm:$0xff]
        %v1626 = vld [vmem:[#allocation2 + $0xda] sm:$0xff]
        %v1627 = vld [vmem:[#allocation2 + $0xe2] sm:$0xff]
        %v1628 = vld [vmem:[#allocation2 + $0xf2] sm:$0xff]
        %v1629 = vld [vmem:[#allocation2 + $0xfa] sm:$0xff]
        %v1630 = vld [vmem:[#allocation2 + $0x10a] sm:$0xff]
        %v1631 = vld [vmem:[#allocation2 + $0x112] sm:$0xff]
        %v1632 = vld [vmem:[#allocation2 + $0x122] sm:$0xff]
        %v1633 = vld [vmem:[#allocation2 + $0x12a] sm:$0xff]
        %v1634 = vld [vmem:[#allocation2 + $0x13a] sm:$0xff]
        %v1635 = vld [vmem:[#allocation2 + $0x142] sm:$0xff]
        %v1636 = vld [vmem:[#allocation2 + $0x152] sm:$0xff]
        %v1637 = vld [vmem:[#allocation2 + $0x15a] sm:$0xff]
        %v1638 = vld [vmem:[#allocation2 + $0x16a] sm:$0xff]
        %v1639 = vld [vmem:[#allocation2 + $0x172] sm:$0xff]
        %v1640 = vld [vmem:[%s1319] sm:$0xff]
        %v1641 = vld [vmem:[%s1319 + $0x8] sm:$0xff]
        %v1642 = vld [vmem:[%s1319 + $0x18] sm:$0xff]
        %v1643 = vld [vmem:[%s1319 + $0x20] sm:$0xff]
        %v1644 = vld [vmem:[%s1319 + $0x30] sm:$0xff]
        %v1645 = vld [vmem:[%s1319 + $0x38] sm:$0xff]
        %v1646 = vld [vmem:[%s1319 + $0x48] sm:$0xff]
        %v1647 = vld [vmem:[%s1319 + $0x50] sm:$0xff]
        %v1648 = vld [vmem:[%s1319 + $0x60] sm:$0xff]
        %v1649 = vld [vmem:[%s1319 + $0x68] sm:$0xff]
        %v1650 = vld [vmem:[%s1319 + $0x78] sm:$0xff]
        %v1651 = vld [vmem:[%s1319 + $0x80] sm:$0xff]
        %v1652 = vld [vmem:[%s1319 + $0x90] sm:$0xff]
        %v1653 = vld [vmem:[%s1319 + $0x98] sm:$0xff]
        %v1654 = vld [vmem:[%s1319 + $0xa8] sm:$0xff]
        %v1655 = vld [vmem:[%s1319 + $0xb0] sm:$0xff]
        %v1656 = vld [vmem:[%s1319 + $0xc0] sm:$0xff]
        %v1657 = vld [vmem:[%s1319 + $0xc8] sm:$0xff]
        %v1658 = vld [vmem:[%s1319 + $0xd8] sm:$0xff]
        %v1659 = vld [vmem:[%s1319 + $0xe0] sm:$0xff]
        %v1660 = vld [vmem:[%s1319 + $0xf0] sm:$0xff]
        %v1661 = vld [vmem:[%s1319 + $0xf8] sm:$0xff]
        %v1662 = vld [vmem:[%s1319 + $0x108] sm:$0xff]
        %v1663 = vld [vmem:[%s1319 + $0x110] sm:$0xff]
        %v1664 = vld [vmem:[%s1319 + $0x120] sm:$0xff]
        %v1665 = vld [vmem:[%s1319 + $0x128] sm:$0xff]
        %v1666 = vld [vmem:[%s1319 + $0x138] sm:$0xff]
        %v1667 = vld [vmem:[%s1319 + $0x140] sm:$0xff]
        %v1668 = vld [vmem:[%s1319 + $0x150] sm:$0xff]
        %v1669 = vld [vmem:[%s1319 + $0x158] sm:$0xff]
        %v1670 = vld [vmem:[%s1319 + $0x168] sm:$0xff]
        %v1671 = vld [vmem:[%s1319 + $0x170] sm:$0xff]
        %1704 = vrot.lane.b32.xlu0 %v1640, 64
        %v1705 = vpop.permute.xlu0 %1704
        %1706 = vrot.lane.b32.xlu0 %v1641, 64
        %v1707 = vpop.permute.xlu0 %1706
        %1708 = vrot.lane.b32.xlu0 %v1642, 64
        %v1709 = vpop.permute.xlu0 %1708
        %1710 = vrot.lane.b32.xlu0 %v1643, 64
        %v1711 = vpop.permute.xlu0 %1710
        %1712 = vrot.lane.b32.xlu0 %v1644, 64
        %v1713 = vpop.permute.xlu0 %1712
        %1714 = vrot.lane.b32.xlu0 %v1645, 64
        %v1715 = vpop.permute.xlu0 %1714
        %1716 = vrot.lane.b32.xlu0 %v1646, 64
        %v1717 = vpop.permute.xlu0 %1716
        %1718 = vrot.lane.b32.xlu0 %v1647, 64
        %v1719 = vpop.permute.xlu0 %1718
        %1720 = vrot.lane.b32.xlu0 %v1648, 64
        %v1721 = vpop.permute.xlu0 %1720
        %1722 = vrot.lane.b32.xlu0 %v1649, 64
        %v1723 = vpop.permute.xlu0 %1722
        %1724 = vrot.lane.b32.xlu0 %v1650, 64
        %v1725 = vpop.permute.xlu0 %1724
        %1726 = vrot.lane.b32.xlu0 %v1651, 64
        %v1727 = vpop.permute.xlu0 %1726
        %1728 = vrot.lane.b32.xlu0 %v1652, 64
        %v1729 = vpop.permute.xlu0 %1728
        %1730 = vrot.lane.b32.xlu0 %v1653, 64
        %v1731 = vpop.permute.xlu0 %1730
        %1732 = vrot.lane.b32.xlu0 %v1654, 64
        %v1733 = vpop.permute.xlu0 %1732
        %1734 = vrot.lane.b32.xlu0 %v1655, 64
        %v1735 = vpop.permute.xlu0 %1734
        %1736 = vrot.lane.b32.xlu0 %v1656, 64
        %v1737 = vpop.permute.xlu0 %1736
        %1738 = vrot.lane.b32.xlu0 %v1657, 64
        %v1739 = vpop.permute.xlu0 %1738
        %1740 = vrot.lane.b32.xlu0 %v1658, 64
        %v1741 = vpop.permute.xlu0 %1740
        %1742 = vrot.lane.b32.xlu0 %v1659, 64
        %v1743 = vpop.permute.xlu0 %1742
        %1744 = vrot.lane.b32.xlu0 %v1660, 64
        %v1745 = vpop.permute.xlu0 %1744
        %1746 = vrot.lane.b32.xlu0 %v1661, 64
        %v1747 = vpop.permute.xlu0 %1746
        %1748 = vrot.lane.b32.xlu0 %v1662, 64
        %v1749 = vpop.permute.xlu0 %1748
        %1750 = vrot.lane.b32.xlu0 %v1663, 64
        %v1751 = vpop.permute.xlu0 %1750
        %1752 = vrot.lane.b32.xlu0 %v1664, 64
        %v1753 = vpop.permute.xlu0 %1752
        %1754 = vrot.lane.b32.xlu0 %v1665, 64
        %v1755 = vpop.permute.xlu0 %1754
        %1756 = vrot.lane.b32.xlu0 %v1666, 64
        %v1757 = vpop.permute.xlu0 %1756
        %1758 = vrot.lane.b32.xlu0 %v1667, 64
        %v1759 = vpop.permute.xlu0 %1758
        %1760 = vrot.lane.b32.xlu0 %v1668, 64
        %v1761 = vpop.permute.xlu0 %1760
        %1762 = vrot.lane.b32.xlu0 %v1669, 64
        %v1763 = vpop.permute.xlu0 %1762
        %1764 = vrot.lane.b32.xlu0 %v1670, 64
        %v1765 = vpop.permute.xlu0 %1764
        %1766 = vrot.lane.b32.xlu0 %v1671, 64
        %v1767 = vpop.permute.xlu0 %1766
        %v1800 = vsel %vm467, %v1608, %v1705
        %v1801 = vsel %vm467, %v1609, %v1707
        %v1802 = vsel %vm467, %v1610, %v1709
        %v1803 = vsel %vm467, %v1611, %v1711
        %v1804 = vsel %vm467, %v1612, %v1713
        %v1805 = vsel %vm467, %v1613, %v1715
        %v1806 = vsel %vm467, %v1614, %v1717
        %v1807 = vsel %vm467, %v1615, %v1719
        %v1808 = vsel %vm467, %v1616, %v1721
        %v1809 = vsel %vm467, %v1617, %v1723
        %v1810 = vsel %vm467, %v1618, %v1725
        %v1811 = vsel %vm467, %v1619, %v1727
        %v1812 = vsel %vm467, %v1620, %v1729
        %v1813 = vsel %vm467, %v1621, %v1731
        %v1814 = vsel %vm467, %v1622, %v1733
        %v1815 = vsel %vm467, %v1623, %v1735
        %v1816 = vsel %vm467, %v1624, %v1737
        %v1817 = vsel %vm467, %v1625, %v1739
        %v1818 = vsel %vm467, %v1626, %v1741
        %v1819 = vsel %vm467, %v1627, %v1743
        %v1820 = vsel %vm467, %v1628, %v1745
        %v1821 = vsel %vm467, %v1629, %v1747
        %v1822 = vsel %vm467, %v1630, %v1749
        %v1823 = vsel %vm467, %v1631, %v1751
        %v1824 = vsel %vm467, %v1632, %v1753
        %v1825 = vsel %vm467, %v1633, %v1755
        %v1826 = vsel %vm467, %v1634, %v1757
        %v1827 = vsel %vm467, %v1635, %v1759
        %v1828 = vsel %vm467, %v1636, %v1761
        %v1829 = vsel %vm467, %v1637, %v1763
        %v1830 = vsel %vm467, %v1638, %v1765
        %v1831 = vsel %vm467, %v1639, %v1767
        %1832 = vst [vmem:[#allocation3 + $0x8] sm:$0xff] %v1800
        %1833 = vst [vmem:[#allocation3 + $0x30] sm:$0xff] %v1801
        %1834 = vst [vmem:[#allocation3 + $0x58] sm:$0xff] %v1802
        %1835 = vst [vmem:[#allocation3 + $0x80] sm:$0xff] %v1803
        %1836 = vst [vmem:[#allocation3 + $0xa8] sm:$0xff] %v1804
        %1837 = vst [vmem:[#allocation3 + $0xd0] sm:$0xff] %v1805
        %1838 = vst [vmem:[#allocation3 + $0xf8] sm:$0xff] %v1806
        %1839 = vst [vmem:[#allocation3 + $0x120] sm:$0xff] %v1807
        %1840 = vst [vmem:[#allocation3 + $0x148] sm:$0xff] %v1808
        %1841 = vst [vmem:[#allocation3 + $0x170] sm:$0xff] %v1809
        %1842 = vst [vmem:[#allocation3 + $0x198] sm:$0xff] %v1810
        %1843 = vst [vmem:[#allocation3 + $0x1c0] sm:$0xff] %v1811
        %1844 = vst [vmem:[#allocation3 + $0x1e8] sm:$0xff] %v1812
        %1845 = vst [vmem:[#allocation3 + $0x210] sm:$0xff] %v1813
        %1846 = vst [vmem:[#allocation3 + $0x238] sm:$0xff] %v1814
        %1847 = vst [vmem:[#allocation3 + $0x260] sm:$0xff] %v1815
        %1848 = vst [vmem:[#allocation3 + $0x288] sm:$0xff] %v1816
        %1849 = vst [vmem:[#allocation3 + $0x2b0] sm:$0xff] %v1817
        %1850 = vst [vmem:[#allocation3 + $0x2d8] sm:$0xff] %v1818
        %1851 = vst [vmem:[#allocation3 + $0x300] sm:$0xff] %v1819
        %1852 = vst [vmem:[#allocation3 + $0x328] sm:$0xff] %v1820
        %1853 = vst [vmem:[#allocation3 + $0x350] sm:$0xff] %v1821
        %1854 = vst [vmem:[#allocation3 + $0x378] sm:$0xff] %v1822
        %1855 = vst [vmem:[#allocation3 + $0x3a0] sm:$0xff] %v1823
        %1856 = vst [vmem:[#allocation3 + $0x3c8] sm:$0xff] %v1824
        %1857 = vst [vmem:[#allocation3 + $0x3f0] sm:$0xff] %v1825
        %1858 = vst [vmem:[#allocation3 + $0x418] sm:$0xff] %v1826
        %1859 = vst [vmem:[#allocation3 + $0x440] sm:$0xff] %v1827
        %1860 = vst [vmem:[#allocation3 + $0x468] sm:$0xff] %v1828
        %1861 = vst [vmem:[#allocation3 + $0x490] sm:$0xff] %v1829
        %1862 = vst [vmem:[#allocation3 + $0x4b8] sm:$0xff] %v1830
        %1863 = vst [vmem:[#allocation3 + $0x4e0] sm:$0xff] %v1831
        %v1864 = vld [vmem:[%s1319 + $0x1] sm:$0xff]
        %v1865 = vld [vmem:[%s1319 + $0x9] sm:$0xff]
        %v1866 = vld [vmem:[%s1319 + $0x19] sm:$0xff]
        %v1867 = vld [vmem:[%s1319 + $0x21] sm:$0xff]
        %v1868 = vld [vmem:[%s1319 + $0x31] sm:$0xff]
        %v1869 = vld [vmem:[%s1319 + $0x39] sm:$0xff]
        %v1870 = vld [vmem:[%s1319 + $0x49] sm:$0xff]
        %v1871 = vld [vmem:[%s1319 + $0x51] sm:$0xff]
        %v1872 = vld [vmem:[%s1319 + $0x61] sm:$0xff]
        %v1873 = vld [vmem:[%s1319 + $0x69] sm:$0xff]
        %v1874 = vld [vmem:[%s1319 + $0x79] sm:$0xff]
        %v1875 = vld [vmem:[%s1319 + $0x81] sm:$0xff]
        %v1876 = vld [vmem:[%s1319 + $0x91] sm:$0xff]
        %v1877 = vld [vmem:[%s1319 + $0x99] sm:$0xff]
        %v1878 = vld [vmem:[%s1319 + $0xa9] sm:$0xff]
        %v1879 = vld [vmem:[%s1319 + $0xb1] sm:$0xff]
        %v1880 = vld [vmem:[%s1319 + $0xc1] sm:$0xff]
        %v1881 = vld [vmem:[%s1319 + $0xc9] sm:$0xff]
        %v1882 = vld [vmem:[%s1319 + $0xd9] sm:$0xff]
        %v1883 = vld [vmem:[%s1319 + $0xe1] sm:$0xff]
        %v1884 = vld [vmem:[%s1319 + $0xf1] sm:$0xff]
        %v1885 = vld [vmem:[%s1319 + $0xf9] sm:$0xff]
        %v1886 = vld [vmem:[%s1319 + $0x109] sm:$0xff]
        %v1887 = vld [vmem:[%s1319 + $0x111] sm:$0xff]
        %v1888 = vld [vmem:[%s1319 + $0x121] sm:$0xff]
        %v1889 = vld [vmem:[%s1319 + $0x129] sm:$0xff]
        %v1890 = vld [vmem:[%s1319 + $0x139] sm:$0xff]
        %v1891 = vld [vmem:[%s1319 + $0x141] sm:$0xff]
        %v1892 = vld [vmem:[%s1319 + $0x151] sm:$0xff]
        %v1893 = vld [vmem:[%s1319 + $0x159] sm:$0xff]
        %v1894 = vld [vmem:[%s1319 + $0x169] sm:$0xff]
        %v1895 = vld [vmem:[%s1319 + $0x171] sm:$0xff]
        %v1896 = vld [vmem:[%s1319 + $0x2] sm:$0xff]
        %v1897 = vld [vmem:[%s1319 + $0xa] sm:$0xff]
        %v1898 = vld [vmem:[%s1319 + $0x1a] sm:$0xff]
        %v1899 = vld [vmem:[%s1319 + $0x22] sm:$0xff]
        %v1900 = vld [vmem:[%s1319 + $0x32] sm:$0xff]
        %v1901 = vld [vmem:[%s1319 + $0x3a] sm:$0xff]
        %v1902 = vld [vmem:[%s1319 + $0x4a] sm:$0xff]
        %v1903 = vld [vmem:[%s1319 + $0x52] sm:$0xff]
        %v1904 = vld [vmem:[%s1319 + $0x62] sm:$0xff]
        %v1905 = vld [vmem:[%s1319 + $0x6a] sm:$0xff]
        %v1906 = vld [vmem:[%s1319 + $0x7a] sm:$0xff]
        %v1907 = vld [vmem:[%s1319 + $0x82] sm:$0xff]
        %v1908 = vld [vmem:[%s1319 + $0x92] sm:$0xff]
        %v1909 = vld [vmem:[%s1319 + $0x9a] sm:$0xff]
        %v1910 = vld [vmem:[%s1319 + $0xaa] sm:$0xff]
        %v1911 = vld [vmem:[%s1319 + $0xb2] sm:$0xff]
        %v1912 = vld [vmem:[%s1319 + $0xc2] sm:$0xff]
        %v1913 = vld [vmem:[%s1319 + $0xca] sm:$0xff]
        %v1914 = vld [vmem:[%s1319 + $0xda] sm:$0xff]
        %v1915 = vld [vmem:[%s1319 + $0xe2] sm:$0xff]
        %v1916 = vld [vmem:[%s1319 + $0xf2] sm:$0xff]
        %v1917 = vld [vmem:[%s1319 + $0xfa] sm:$0xff]
        %v1918 = vld [vmem:[%s1319 + $0x10a] sm:$0xff]
        %v1919 = vld [vmem:[%s1319 + $0x112] sm:$0xff]
        %v1920 = vld [vmem:[%s1319 + $0x122] sm:$0xff]
        %v1921 = vld [vmem:[%s1319 + $0x12a] sm:$0xff]
        %v1922 = vld [vmem:[%s1319 + $0x13a] sm:$0xff]
        %v1923 = vld [vmem:[%s1319 + $0x142] sm:$0xff]
        %v1924 = vld [vmem:[%s1319 + $0x152] sm:$0xff]
        %v1925 = vld [vmem:[%s1319 + $0x15a] sm:$0xff]
        %v1926 = vld [vmem:[%s1319 + $0x16a] sm:$0xff]
        %v1927 = vld [vmem:[%s1319 + $0x172] sm:$0xff]
        %1960 = vrot.lane.b32.xlu0 %v1896, 64
        %v1961 = vpop.permute.xlu0 %1960
        %1962 = vrot.lane.b32.xlu0 %v1897, 64
        %v1963 = vpop.permute.xlu0 %1962
        %1964 = vrot.lane.b32.xlu0 %v1898, 64
        %v1965 = vpop.permute.xlu0 %1964
        %1966 = vrot.lane.b32.xlu0 %v1899, 64
        %v1967 = vpop.permute.xlu0 %1966
        %1968 = vrot.lane.b32.xlu0 %v1900, 64
        %v1969 = vpop.permute.xlu0 %1968
        %1970 = vrot.lane.b32.xlu0 %v1901, 64
        %v1971 = vpop.permute.xlu0 %1970
        %1972 = vrot.lane.b32.xlu0 %v1902, 64
        %v1973 = vpop.permute.xlu0 %1972
        %1974 = vrot.lane.b32.xlu0 %v1903, 64
        %v1975 = vpop.permute.xlu0 %1974
        %1976 = vrot.lane.b32.xlu0 %v1904, 64
        %v1977 = vpop.permute.xlu0 %1976
        %1978 = vrot.lane.b32.xlu0 %v1905, 64
        %v1979 = vpop.permute.xlu0 %1978
        %1980 = vrot.lane.b32.xlu0 %v1906, 64
        %v1981 = vpop.permute.xlu0 %1980
        %1982 = vrot.lane.b32.xlu0 %v1907, 64
        %v1983 = vpop.permute.xlu0 %1982
        %1984 = vrot.lane.b32.xlu0 %v1908, 64
        %v1985 = vpop.permute.xlu0 %1984
        %1986 = vrot.lane.b32.xlu0 %v1909, 64
        %v1987 = vpop.permute.xlu0 %1986
        %1988 = vrot.lane.b32.xlu0 %v1910, 64
        %v1989 = vpop.permute.xlu0 %1988
        %1990 = vrot.lane.b32.xlu0 %v1911, 64
        %v1991 = vpop.permute.xlu0 %1990
        %1992 = vrot.lane.b32.xlu0 %v1912, 64
        %v1993 = vpop.permute.xlu0 %1992
        %1994 = vrot.lane.b32.xlu0 %v1913, 64
        %v1995 = vpop.permute.xlu0 %1994
        %1996 = vrot.lane.b32.xlu0 %v1914, 64
        %v1997 = vpop.permute.xlu0 %1996
        %1998 = vrot.lane.b32.xlu0 %v1915, 64
        %v1999 = vpop.permute.xlu0 %1998
        %2000 = vrot.lane.b32.xlu0 %v1916, 64
        %v2001 = vpop.permute.xlu0 %2000
        %2002 = vrot.lane.b32.xlu0 %v1917, 64
        %v2003 = vpop.permute.xlu0 %2002
        %2004 = vrot.lane.b32.xlu0 %v1918, 64
        %v2005 = vpop.permute.xlu0 %2004
        %2006 = vrot.lane.b32.xlu0 %v1919, 64
        %v2007 = vpop.permute.xlu0 %2006
        %2008 = vrot.lane.b32.xlu0 %v1920, 64
        %v2009 = vpop.permute.xlu0 %2008
        %2010 = vrot.lane.b32.xlu0 %v1921, 64
        %v2011 = vpop.permute.xlu0 %2010
        %2012 = vrot.lane.b32.xlu0 %v1922, 64
        %v2013 = vpop.permute.xlu0 %2012
        %2014 = vrot.lane.b32.xlu0 %v1923, 64
        %v2015 = vpop.permute.xlu0 %2014
        %2016 = vrot.lane.b32.xlu0 %v1924, 64
        %v2017 = vpop.permute.xlu0 %2016
        %2018 = vrot.lane.b32.xlu0 %v1925, 64
        %v2019 = vpop.permute.xlu0 %2018
        %2020 = vrot.lane.b32.xlu0 %v1926, 64
        %v2021 = vpop.permute.xlu0 %2020
        %2022 = vrot.lane.b32.xlu0 %v1927, 64
        %v2023 = vpop.permute.xlu0 %2022
        %v2056 = vsel %vm467, %v1864, %v1961
        %v2057 = vsel %vm467, %v1865, %v1963
        %v2058 = vsel %vm467, %v1866, %v1965
        %v2059 = vsel %vm467, %v1867, %v1967
        %v2060 = vsel %vm467, %v1868, %v1969
        %v2061 = vsel %vm467, %v1869, %v1971
        %v2062 = vsel %vm467, %v1870, %v1973
        %v2063 = vsel %vm467, %v1871, %v1975
        %v2064 = vsel %vm467, %v1872, %v1977
        %v2065 = vsel %vm467, %v1873, %v1979
        %v2066 = vsel %vm467, %v1874, %v1981
        %v2067 = vsel %vm467, %v1875, %v1983
        %v2068 = vsel %vm467, %v1876, %v1985
        %v2069 = vsel %vm467, %v1877, %v1987
        %v2070 = vsel %vm467, %v1878, %v1989
        %v2071 = vsel %vm467, %v1879, %v1991
        %v2072 = vsel %vm467, %v1880, %v1993
        %v2073 = vsel %vm467, %v1881, %v1995
        %v2074 = vsel %vm467, %v1882, %v1997
        %v2075 = vsel %vm467, %v1883, %v1999
        %v2076 = vsel %vm467, %v1884, %v2001
        %v2077 = vsel %vm467, %v1885, %v2003
        %v2078 = vsel %vm467, %v1886, %v2005
        %v2079 = vsel %vm467, %v1887, %v2007
        %v2080 = vsel %vm467, %v1888, %v2009
        %v2081 = vsel %vm467, %v1889, %v2011
        %v2082 = vsel %vm467, %v1890, %v2013
        %v2083 = vsel %vm467, %v1891, %v2015
        %v2084 = vsel %vm467, %v1892, %v2017
        %v2085 = vsel %vm467, %v1893, %v2019
        %v2086 = vsel %vm467, %v1894, %v2021
        %v2087 = vsel %vm467, %v1895, %v2023
        %2088 = vst [vmem:[#allocation3 + $0x10] sm:$0xff] %v2056
        %2089 = vst [vmem:[#allocation3 + $0x38] sm:$0xff] %v2057
        %2090 = vst [vmem:[#allocation3 + $0x60] sm:$0xff] %v2058
        %2091 = vst [vmem:[#allocation3 + $0x88] sm:$0xff] %v2059
        %2092 = vst [vmem:[#allocation3 + $0xb0] sm:$0xff] %v2060
        %2093 = vst [vmem:[#allocation3 + $0xd8] sm:$0xff] %v2061
        %2094 = vst [vmem:[#allocation3 + $0x100] sm:$0xff] %v2062
        %2095 = vst [vmem:[#allocation3 + $0x128] sm:$0xff] %v2063
        %2096 = vst [vmem:[#allocation3 + $0x150] sm:$0xff] %v2064
        %2097 = vst [vmem:[#allocation3 + $0x178] sm:$0xff] %v2065
        %2098 = vst [vmem:[#allocation3 + $0x1a0] sm:$0xff] %v2066
        %2099 = vst [vmem:[#allocation3 + $0x1c8] sm:$0xff] %v2067
        %2100 = vst [vmem:[#allocation3 + $0x1f0] sm:$0xff] %v2068
        %2101 = vst [vmem:[#allocation3 + $0x218] sm:$0xff] %v2069
        %2102 = vst [vmem:[#allocation3 + $0x240] sm:$0xff] %v2070
        %2103 = vst [vmem:[#allocation3 + $0x268] sm:$0xff] %v2071
        %2104 = vst [vmem:[#allocation3 + $0x290] sm:$0xff] %v2072
        %2105 = vst [vmem:[#allocation3 + $0x2b8] sm:$0xff] %v2073
        %2106 = vst [vmem:[#allocation3 + $0x2e0] sm:$0xff] %v2074
        %2107 = vst [vmem:[#allocation3 + $0x308] sm:$0xff] %v2075
        %2108 = vst [vmem:[#allocation3 + $0x330] sm:$0xff] %v2076
        %2109 = vst [vmem:[#allocation3 + $0x358] sm:$0xff] %v2077
        %2110 = vst [vmem:[#allocation3 + $0x380] sm:$0xff] %v2078
        %2111 = vst [vmem:[#allocation3 + $0x3a8] sm:$0xff] %v2079
        %2112 = vst [vmem:[#allocation3 + $0x3d0] sm:$0xff] %v2080
        %2113 = vst [vmem:[#allocation3 + $0x3f8] sm:$0xff] %v2081
        %2114 = vst [vmem:[#allocation3 + $0x420] sm:$0xff] %v2082
        %2115 = vst [vmem:[#allocation3 + $0x448] sm:$0xff] %v2083
        %2116 = vst [vmem:[#allocation3 + $0x470] sm:$0xff] %v2084
        %2117 = vst [vmem:[#allocation3 + $0x498] sm:$0xff] %v2085
        %2118 = vst [vmem:[#allocation3 + $0x4c0] sm:$0xff] %v2086
        %2119 = vst [vmem:[#allocation3 + $0x4e8] sm:$0xff] %v2087
        %s2120 = scalar_lea.vmem [#allocation2], 48
        %v2121 = vld [vmem:[%s2120] sm:$0xff]
        %v2122 = vld [vmem:[%s2120 + $0x8] sm:$0xff]
        %v2123 = vld [vmem:[%s2120 + $0x18] sm:$0xff]
        %v2124 = vld [vmem:[%s2120 + $0x20] sm:$0xff]
        %v2125 = vld [vmem:[%s2120 + $0x30] sm:$0xff]
        %v2126 = vld [vmem:[%s2120 + $0x38] sm:$0xff]
        %v2127 = vld [vmem:[%s2120 + $0x48] sm:$0xff]
        %v2128 = vld [vmem:[%s2120 + $0x50] sm:$0xff]
        %v2129 = vld [vmem:[%s2120 + $0x60] sm:$0xff]
        %v2130 = vld [vmem:[%s2120 + $0x68] sm:$0xff]
        %v2131 = vld [vmem:[%s2120 + $0x78] sm:$0xff]
        %v2132 = vld [vmem:[%s2120 + $0x80] sm:$0xff]
        %v2133 = vld [vmem:[%s2120 + $0x90] sm:$0xff]
        %v2134 = vld [vmem:[%s2120 + $0x98] sm:$0xff]
        %v2135 = vld [vmem:[%s2120 + $0xa8] sm:$0xff]
        %v2136 = vld [vmem:[%s2120 + $0xb0] sm:$0xff]
        %v2137 = vld [vmem:[%s2120 + $0xc0] sm:$0xff]
        %v2138 = vld [vmem:[%s2120 + $0xc8] sm:$0xff]
        %v2139 = vld [vmem:[%s2120 + $0xd8] sm:$0xff]
        %v2140 = vld [vmem:[%s2120 + $0xe0] sm:$0xff]
        %v2141 = vld [vmem:[%s2120 + $0xf0] sm:$0xff]
        %v2142 = vld [vmem:[%s2120 + $0xf8] sm:$0xff]
        %v2143 = vld [vmem:[%s2120 + $0x108] sm:$0xff]
        %v2144 = vld [vmem:[%s2120 + $0x110] sm:$0xff]
        %v2145 = vld [vmem:[%s2120 + $0x120] sm:$0xff]
        %v2146 = vld [vmem:[%s2120 + $0x128] sm:$0xff]
        %v2147 = vld [vmem:[%s2120 + $0x138] sm:$0xff]
        %v2148 = vld [vmem:[%s2120 + $0x140] sm:$0xff]
        %v2149 = vld [vmem:[%s2120 + $0x150] sm:$0xff]
        %v2150 = vld [vmem:[%s2120 + $0x158] sm:$0xff]
        %v2151 = vld [vmem:[%s2120 + $0x168] sm:$0xff]
        %v2152 = vld [vmem:[%s2120 + $0x170] sm:$0xff]
        %v2153 = vld [vmem:[%s2120 + $0x1] sm:$0xff]
        %v2154 = vld [vmem:[%s2120 + $0x9] sm:$0xff]
        %v2155 = vld [vmem:[%s2120 + $0x19] sm:$0xff]
        %v2156 = vld [vmem:[%s2120 + $0x21] sm:$0xff]
        %v2157 = vld [vmem:[%s2120 + $0x31] sm:$0xff]
        %v2158 = vld [vmem:[%s2120 + $0x39] sm:$0xff]
        %v2159 = vld [vmem:[%s2120 + $0x49] sm:$0xff]
        %v2160 = vld [vmem:[%s2120 + $0x51] sm:$0xff]
        %v2161 = vld [vmem:[%s2120 + $0x61] sm:$0xff]
        %v2162 = vld [vmem:[%s2120 + $0x69] sm:$0xff]
        %v2163 = vld [vmem:[%s2120 + $0x79] sm:$0xff]
        %v2164 = vld [vmem:[%s2120 + $0x81] sm:$0xff]
        %v2165 = vld [vmem:[%s2120 + $0x91] sm:$0xff]
        %v2166 = vld [vmem:[%s2120 + $0x99] sm:$0xff]
        %v2167 = vld [vmem:[%s2120 + $0xa9] sm:$0xff]
        %v2168 = vld [vmem:[%s2120 + $0xb1] sm:$0xff]
        %v2169 = vld [vmem:[%s2120 + $0xc1] sm:$0xff]
        %v2170 = vld [vmem:[%s2120 + $0xc9] sm:$0xff]
        %v2171 = vld [vmem:[%s2120 + $0xd9] sm:$0xff]
        %v2172 = vld [vmem:[%s2120 + $0xe1] sm:$0xff]
        %v2173 = vld [vmem:[%s2120 + $0xf1] sm:$0xff]
        %v2174 = vld [vmem:[%s2120 + $0xf9] sm:$0xff]
        %v2175 = vld [vmem:[%s2120 + $0x109] sm:$0xff]
        %v2176 = vld [vmem:[%s2120 + $0x111] sm:$0xff]
        %v2177 = vld [vmem:[%s2120 + $0x121] sm:$0xff]
        %v2178 = vld [vmem:[%s2120 + $0x129] sm:$0xff]
        %v2179 = vld [vmem:[%s2120 + $0x139] sm:$0xff]
        %v2180 = vld [vmem:[%s2120 + $0x141] sm:$0xff]
        %v2181 = vld [vmem:[%s2120 + $0x151] sm:$0xff]
        %v2182 = vld [vmem:[%s2120 + $0x159] sm:$0xff]
        %v2183 = vld [vmem:[%s2120 + $0x169] sm:$0xff]
        %v2184 = vld [vmem:[%s2120 + $0x171] sm:$0xff]
        %2217 = vrot.lane.b32.xlu0 %v2153, 64
        %v2218 = vpop.permute.xlu0 %2217
        %2219 = vrot.lane.b32.xlu0 %v2154, 64
        %v2220 = vpop.permute.xlu0 %2219
        %2221 = vrot.lane.b32.xlu0 %v2155, 64
        %v2222 = vpop.permute.xlu0 %2221
        %2223 = vrot.lane.b32.xlu0 %v2156, 64
        %v2224 = vpop.permute.xlu0 %2223
        %2225 = vrot.lane.b32.xlu0 %v2157, 64
        %v2226 = vpop.permute.xlu0 %2225
        %2227 = vrot.lane.b32.xlu0 %v2158, 64
        %v2228 = vpop.permute.xlu0 %2227
        %2229 = vrot.lane.b32.xlu0 %v2159, 64
        %v2230 = vpop.permute.xlu0 %2229
        %2231 = vrot.lane.b32.xlu0 %v2160, 64
        %v2232 = vpop.permute.xlu0 %2231
        %2233 = vrot.lane.b32.xlu0 %v2161, 64
        %v2234 = vpop.permute.xlu0 %2233
        %2235 = vrot.lane.b32.xlu0 %v2162, 64
        %v2236 = vpop.permute.xlu0 %2235
        %2237 = vrot.lane.b32.xlu0 %v2163, 64
        %v2238 = vpop.permute.xlu0 %2237
        %2239 = vrot.lane.b32.xlu0 %v2164, 64
        %v2240 = vpop.permute.xlu0 %2239
        %2241 = vrot.lane.b32.xlu0 %v2165, 64
        %v2242 = vpop.permute.xlu0 %2241
        %2243 = vrot.lane.b32.xlu0 %v2166, 64
        %v2244 = vpop.permute.xlu0 %2243
        %2245 = vrot.lane.b32.xlu0 %v2167, 64
        %v2246 = vpop.permute.xlu0 %2245
        %2247 = vrot.lane.b32.xlu0 %v2168, 64
        %v2248 = vpop.permute.xlu0 %2247
        %2249 = vrot.lane.b32.xlu0 %v2169, 64
        %v2250 = vpop.permute.xlu0 %2249
        %2251 = vrot.lane.b32.xlu0 %v2170, 64
        %v2252 = vpop.permute.xlu0 %2251
        %2253 = vrot.lane.b32.xlu0 %v2171, 64
        %v2254 = vpop.permute.xlu0 %2253
        %2255 = vrot.lane.b32.xlu0 %v2172, 64
        %v2256 = vpop.permute.xlu0 %2255
        %2257 = vrot.lane.b32.xlu0 %v2173, 64
        %v2258 = vpop.permute.xlu0 %2257
        %2259 = vrot.lane.b32.xlu0 %v2174, 64
        %v2260 = vpop.permute.xlu0 %2259
        %2261 = vrot.lane.b32.xlu0 %v2175, 64
        %v2262 = vpop.permute.xlu0 %2261
        %2263 = vrot.lane.b32.xlu0 %v2176, 64
        %v2264 = vpop.permute.xlu0 %2263
        %2265 = vrot.lane.b32.xlu0 %v2177, 64
        %v2266 = vpop.permute.xlu0 %2265
        %2267 = vrot.lane.b32.xlu0 %v2178, 64
        %v2268 = vpop.permute.xlu0 %2267
        %2269 = vrot.lane.b32.xlu0 %v2179, 64
        %v2270 = vpop.permute.xlu0 %2269
        %2271 = vrot.lane.b32.xlu0 %v2180, 64
        %v2272 = vpop.permute.xlu0 %2271
        %2273 = vrot.lane.b32.xlu0 %v2181, 64
        %v2274 = vpop.permute.xlu0 %2273
        %2275 = vrot.lane.b32.xlu0 %v2182, 64
        %v2276 = vpop.permute.xlu0 %2275
        %2277 = vrot.lane.b32.xlu0 %v2183, 64
        %v2278 = vpop.permute.xlu0 %2277
        %2279 = vrot.lane.b32.xlu0 %v2184, 64
        %v2280 = vpop.permute.xlu0 %2279
        %v2313 = vsel %vm467, %v2121, %v2218
        %v2314 = vsel %vm467, %v2122, %v2220
        %v2315 = vsel %vm467, %v2123, %v2222
        %v2316 = vsel %vm467, %v2124, %v2224
        %v2317 = vsel %vm467, %v2125, %v2226
        %v2318 = vsel %vm467, %v2126, %v2228
        %v2319 = vsel %vm467, %v2127, %v2230
        %v2320 = vsel %vm467, %v2128, %v2232
        %v2321 = vsel %vm467, %v2129, %v2234
        %v2322 = vsel %vm467, %v2130, %v2236
        %v2323 = vsel %vm467, %v2131, %v2238
        %v2324 = vsel %vm467, %v2132, %v2240
        %v2325 = vsel %vm467, %v2133, %v2242
        %v2326 = vsel %vm467, %v2134, %v2244
        %v2327 = vsel %vm467, %v2135, %v2246
        %v2328 = vsel %vm467, %v2136, %v2248
        %v2329 = vsel %vm467, %v2137, %v2250
        %v2330 = vsel %vm467, %v2138, %v2252
        %v2331 = vsel %vm467, %v2139, %v2254
        %v2332 = vsel %vm467, %v2140, %v2256
        %v2333 = vsel %vm467, %v2141, %v2258
        %v2334 = vsel %vm467, %v2142, %v2260
        %v2335 = vsel %vm467, %v2143, %v2262
        %v2336 = vsel %vm467, %v2144, %v2264
        %v2337 = vsel %vm467, %v2145, %v2266
        %v2338 = vsel %vm467, %v2146, %v2268
        %v2339 = vsel %vm467, %v2147, %v2270
        %v2340 = vsel %vm467, %v2148, %v2272
        %v2341 = vsel %vm467, %v2149, %v2274
        %v2342 = vsel %vm467, %v2150, %v2276
        %v2343 = vsel %vm467, %v2151, %v2278
        %v2344 = vsel %vm467, %v2152, %v2280
        %2345 = vst [vmem:[#allocation3 + $0x18] sm:$0xff] %v2313
        %2346 = vst [vmem:[#allocation3 + $0x40] sm:$0xff] %v2314
        %2347 = vst [vmem:[#allocation3 + $0x68] sm:$0xff] %v2315
        %2348 = vst [vmem:[#allocation3 + $0x90] sm:$0xff] %v2316
        %2349 = vst [vmem:[#allocation3 + $0xb8] sm:$0xff] %v2317
        %2350 = vst [vmem:[#allocation3 + $0xe0] sm:$0xff] %v2318
        %2351 = vst [vmem:[#allocation3 + $0x108] sm:$0xff] %v2319
        %2352 = vst [vmem:[#allocation3 + $0x130] sm:$0xff] %v2320
        %2353 = vst [vmem:[#allocation3 + $0x158] sm:$0xff] %v2321
        %2354 = vst [vmem:[#allocation3 + $0x180] sm:$0xff] %v2322
        %2355 = vst [vmem:[#allocation3 + $0x1a8] sm:$0xff] %v2323
        %2356 = vst [vmem:[#allocation3 + $0x1d0] sm:$0xff] %v2324
        %2357 = vst [vmem:[#allocation3 + $0x1f8] sm:$0xff] %v2325
        %2358 = vst [vmem:[#allocation3 + $0x220] sm:$0xff] %v2326
        %2359 = vst [vmem:[#allocation3 + $0x248] sm:$0xff] %v2327
        %2360 = vst [vmem:[#allocation3 + $0x270] sm:$0xff] %v2328
        %2361 = vst [vmem:[#allocation3 + $0x298] sm:$0xff] %v2329
        %2362 = vst [vmem:[#allocation3 + $0x2c0] sm:$0xff] %v2330
        %2363 = vst [vmem:[#allocation3 + $0x2e8] sm:$0xff] %v2331
        %2364 = vst [vmem:[#allocation3 + $0x310] sm:$0xff] %v2332
        %2365 = vst [vmem:[#allocation3 + $0x338] sm:$0xff] %v2333
        %2366 = vst [vmem:[#allocation3 + $0x360] sm:$0xff] %v2334
        %2367 = vst [vmem:[#allocation3 + $0x388] sm:$0xff] %v2335
        %2368 = vst [vmem:[#allocation3 + $0x3b0] sm:$0xff] %v2336
        %2369 = vst [vmem:[#allocation3 + $0x3d8] sm:$0xff] %v2337
        %2370 = vst [vmem:[#allocation3 + $0x400] sm:$0xff] %v2338
        %2371 = vst [vmem:[#allocation3 + $0x428] sm:$0xff] %v2339
        %2372 = vst [vmem:[#allocation3 + $0x450] sm:$0xff] %v2340
        %2373 = vst [vmem:[#allocation3 + $0x478] sm:$0xff] %v2341
        %2374 = vst [vmem:[#allocation3 + $0x4a0] sm:$0xff] %v2342
        %2375 = vst [vmem:[#allocation3 + $0x4c8] sm:$0xff] %v2343
        %2376 = vst [vmem:[#allocation3 + $0x4f0] sm:$0xff] %v2344
        %v2377 = vld [vmem:[%s2120 + $0x2] sm:$0xff]
        %v2378 = vld [vmem:[%s2120 + $0xa] sm:$0xff]
        %v2379 = vld [vmem:[%s2120 + $0x1a] sm:$0xff]
        %v2380 = vld [vmem:[%s2120 + $0x22] sm:$0xff]
        %v2381 = vld [vmem:[%s2120 + $0x32] sm:$0xff]
        %v2382 = vld [vmem:[%s2120 + $0x3a] sm:$0xff]
        %v2383 = vld [vmem:[%s2120 + $0x4a] sm:$0xff]
        %v2384 = vld [vmem:[%s2120 + $0x52] sm:$0xff]
        %v2385 = vld [vmem:[%s2120 + $0x62] sm:$0xff]
        %v2386 = vld [vmem:[%s2120 + $0x6a] sm:$0xff]
        %v2387 = vld [vmem:[%s2120 + $0x7a] sm:$0xff]
        %v2388 = vld [vmem:[%s2120 + $0x82] sm:$0xff]
        %v2389 = vld [vmem:[%s2120 + $0x92] sm:$0xff]
        %v2390 = vld [vmem:[%s2120 + $0x9a] sm:$0xff]
        %v2391 = vld [vmem:[%s2120 + $0xaa] sm:$0xff]
        %v2392 = vld [vmem:[%s2120 + $0xb2] sm:$0xff]
        %v2393 = vld [vmem:[%s2120 + $0xc2] sm:$0xff]
        %v2394 = vld [vmem:[%s2120 + $0xca] sm:$0xff]
        %v2395 = vld [vmem:[%s2120 + $0xda] sm:$0xff]
        %v2396 = vld [vmem:[%s2120 + $0xe2] sm:$0xff]
        %v2397 = vld [vmem:[%s2120 + $0xf2] sm:$0xff]
        %v2398 = vld [vmem:[%s2120 + $0xfa] sm:$0xff]
        %v2399 = vld [vmem:[%s2120 + $0x10a] sm:$0xff]
        %v2400 = vld [vmem:[%s2120 + $0x112] sm:$0xff]
        %v2401 = vld [vmem:[%s2120 + $0x122] sm:$0xff]
        %v2402 = vld [vmem:[%s2120 + $0x12a] sm:$0xff]
        %v2403 = vld [vmem:[%s2120 + $0x13a] sm:$0xff]
        %v2404 = vld [vmem:[%s2120 + $0x142] sm:$0xff]
        %v2405 = vld [vmem:[%s2120 + $0x152] sm:$0xff]
        %v2406 = vld [vmem:[%s2120 + $0x15a] sm:$0xff]
        %v2407 = vld [vmem:[%s2120 + $0x16a] sm:$0xff]
        %v2408 = vld [vmem:[%s2120 + $0x172] sm:$0xff]
        %2409 = vst.msk [vmem:[#allocation3 + $0x20] sm:$0xff] %vm467, %v2377
        %2410 = vst.msk [vmem:[#allocation3 + $0x48] sm:$0xff] %vm467, %v2378
        %2411 = vst.msk [vmem:[#allocation3 + $0x70] sm:$0xff] %vm467, %v2379
        %2412 = vst.msk [vmem:[#allocation3 + $0x98] sm:$0xff] %vm467, %v2380
        %2413 = vst.msk [vmem:[#allocation3 + $0xc0] sm:$0xff] %vm467, %v2381
        %2414 = vst.msk [vmem:[#allocation3 + $0xe8] sm:$0xff] %vm467, %v2382
        %2415 = vst.msk [vmem:[#allocation3 + $0x110] sm:$0xff] %vm467, %v2383
        %2416 = vst.msk [vmem:[#allocation3 + $0x138] sm:$0xff] %vm467, %v2384
        %2417 = vst.msk [vmem:[#allocation3 + $0x160] sm:$0xff] %vm467, %v2385
        %2418 = vst.msk [vmem:[#allocation3 + $0x188] sm:$0xff] %vm467, %v2386
        %2419 = vst.msk [vmem:[#allocation3 + $0x1b0] sm:$0xff] %vm467, %v2387
        %2420 = vst.msk [vmem:[#allocation3 + $0x1d8] sm:$0xff] %vm467, %v2388
        %2421 = vst.msk [vmem:[#allocation3 + $0x200] sm:$0xff] %vm467, %v2389
        %2422 = vst.msk [vmem:[#allocation3 + $0x228] sm:$0xff] %vm467, %v2390
        %2423 = vst.msk [vmem:[#allocation3 + $0x250] sm:$0xff] %vm467, %v2391
        %2424 = vst.msk [vmem:[#allocation3 + $0x278] sm:$0xff] %vm467, %v2392
        %2425 = vst.msk [vmem:[#allocation3 + $0x2a0] sm:$0xff] %vm467, %v2393
        %2426 = vst.msk [vmem:[#allocation3 + $0x2c8] sm:$0xff] %vm467, %v2394
        %2427 = vst.msk [vmem:[#allocation3 + $0x2f0] sm:$0xff] %vm467, %v2395
        %2428 = vst.msk [vmem:[#allocation3 + $0x318] sm:$0xff] %vm467, %v2396
        %2429 = vst.msk [vmem:[#allocation3 + $0x340] sm:$0xff] %vm467, %v2397
        %2430 = vst.msk [vmem:[#allocation3 + $0x368] sm:$0xff] %vm467, %v2398
        %2431 = vst.msk [vmem:[#allocation3 + $0x390] sm:$0xff] %vm467, %v2399
        %2432 = vst.msk [vmem:[#allocation3 + $0x3b8] sm:$0xff] %vm467, %v2400
        %2433 = vst.msk [vmem:[#allocation3 + $0x3e0] sm:$0xff] %vm467, %v2401
        %2434 = vst.msk [vmem:[#allocation3 + $0x408] sm:$0xff] %vm467, %v2402
        %2435 = vst.msk [vmem:[#allocation3 + $0x430] sm:$0xff] %vm467, %v2403
        %2436 = vst.msk [vmem:[#allocation3 + $0x458] sm:$0xff] %vm467, %v2404
        %2437 = vst.msk [vmem:[#allocation3 + $0x480] sm:$0xff] %vm467, %v2405
        %2438 = vst.msk [vmem:[#allocation3 + $0x4a8] sm:$0xff] %vm467, %v2406
        %2439 = vst.msk [vmem:[#allocation3 + $0x4d0] sm:$0xff] %vm467, %v2407
        %2440 = vst.msk [vmem:[#allocation3 + $0x4f8] sm:$0xff] %vm467, %v2408
        %v2441 = vld [vmem:[#allocation3] sm:$0xff]
        %v2442 = vld [vmem:[#allocation3 + $0x8] sm:$0xff]
        %v2443 = vld [vmem:[#allocation3 + $0x10] sm:$0xff]
        %v2444 = vld [vmem:[#allocation3 + $0x18] sm:$0xff]
        %v2445 = vld [vmem:[#allocation3 + $0x20] sm:$0xff]
        %v2446 = vld [vmem:[#allocation3 + $0x28] sm:$0xff]
        %v2447 = vld [vmem:[#allocation3 + $0x30] sm:$0xff]
        %v2448 = vld [vmem:[#allocation3 + $0x38] sm:$0xff]
        %v2449 = vld [vmem:[#allocation3 + $0x40] sm:$0xff]
        %v2450 = vld [vmem:[#allocation3 + $0x48] sm:$0xff]
        %v2451 = vld [vmem:[#allocation3 + $0x50] sm:$0xff]
        %v2452 = vld [vmem:[#allocation3 + $0x58] sm:$0xff]
        %v2453 = vld [vmem:[#allocation3 + $0x60] sm:$0xff]
        %v2454 = vld [vmem:[#allocation3 + $0x68] sm:$0xff]
        %v2455 = vld [vmem:[#allocation3 + $0x70] sm:$0xff]
        %v2456 = vld [vmem:[#allocation3 + $0x78] sm:$0xff]
        %v2457 = vld [vmem:[#allocation3 + $0x80] sm:$0xff]
        %v2458 = vld [vmem:[#allocation3 + $0x88] sm:$0xff]
        %v2459 = vld [vmem:[#allocation3 + $0x90] sm:$0xff]
        %v2460 = vld [vmem:[#allocation3 + $0x98] sm:$0xff]
        %v2461 = vld [vmem:[#allocation3 + $0xa0] sm:$0xff]
        %v2462 = vld [vmem:[#allocation3 + $0xa8] sm:$0xff]
        %v2463 = vld [vmem:[#allocation3 + $0xb0] sm:$0xff]
        %v2464 = vld [vmem:[#allocation3 + $0xb8] sm:$0xff]
        %v2465 = vld [vmem:[#allocation3 + $0xc0] sm:$0xff]
        %v2466 = vld [vmem:[#allocation3 + $0xc8] sm:$0xff]
        %v2467 = vld [vmem:[#allocation3 + $0xd0] sm:$0xff]
        %v2468 = vld [vmem:[#allocation3 + $0xd8] sm:$0xff]
        %v2469 = vld [vmem:[#allocation3 + $0xe0] sm:$0xff]
        %v2470 = vld [vmem:[#allocation3 + $0xe8] sm:$0xff]
        %v2471 = vld [vmem:[#allocation3 + $0xf0] sm:$0xff]
        %v2472 = vld [vmem:[#allocation3 + $0xf8] sm:$0xff]
        %v2473 = vld [vmem:[#allocation3 + $0x100] sm:$0xff]
        %v2474 = vld [vmem:[#allocation3 + $0x108] sm:$0xff]
        %v2475 = vld [vmem:[#allocation3 + $0x110] sm:$0xff]
        %v2476 = vld [vmem:[#allocation3 + $0x118] sm:$0xff]
        %v2477 = vld [vmem:[#allocation3 + $0x120] sm:$0xff]
        %v2478 = vld [vmem:[#allocation3 + $0x128] sm:$0xff]
        %v2479 = vld [vmem:[#allocation3 + $0x130] sm:$0xff]
        %v2480 = vld [vmem:[#allocation3 + $0x138] sm:$0xff]
        %v2481 = vld [vmem:[#allocation3 + $0x140] sm:$0xff]
        %v2482 = vld [vmem:[#allocation3 + $0x148] sm:$0xff]
        %v2483 = vld [vmem:[#allocation3 + $0x150] sm:$0xff]
        %v2484 = vld [vmem:[#allocation3 + $0x158] sm:$0xff]
        %v2485 = vld [vmem:[#allocation3 + $0x160] sm:$0xff]
        %v2486 = vld [vmem:[#allocation3 + $0x168] sm:$0xff]
        %v2487 = vld [vmem:[#allocation3 + $0x170] sm:$0xff]
        %v2488 = vld [vmem:[#allocation3 + $0x178] sm:$0xff]
        %v2489 = vld [vmem:[#allocation3 + $0x180] sm:$0xff]
        %v2490 = vld [vmem:[#allocation3 + $0x188] sm:$0xff]
        %v2491 = vld [vmem:[#allocation3 + $0x190] sm:$0xff]
        %v2492 = vld [vmem:[#allocation3 + $0x198] sm:$0xff]
        %v2493 = vld [vmem:[#allocation3 + $0x1a0] sm:$0xff]
        %v2494 = vld [vmem:[#allocation3 + $0x1a8] sm:$0xff]
        %v2495 = vld [vmem:[#allocation3 + $0x1b0] sm:$0xff]
        %v2496 = vld [vmem:[#allocation3 + $0x1b8] sm:$0xff]
        %v2497 = vld [vmem:[#allocation3 + $0x1c0] sm:$0xff]
        %v2498 = vld [vmem:[#allocation3 + $0x1c8] sm:$0xff]
        %v2499 = vld [vmem:[#allocation3 + $0x1d0] sm:$0xff]
        %v2500 = vld [vmem:[#allocation3 + $0x1d8] sm:$0xff]
        %v2501 = vld [vmem:[#allocation3 + $0x1e0] sm:$0xff]
        %v2502 = vld [vmem:[#allocation3 + $0x1e8] sm:$0xff]
        %v2503 = vld [vmem:[#allocation3 + $0x1f0] sm:$0xff]
        %v2504 = vld [vmem:[#allocation3 + $0x1f8] sm:$0xff]
        %v2505 = vld [vmem:[#allocation3 + $0x200] sm:$0xff]
        %v2506 = vld [vmem:[#allocation3 + $0x208] sm:$0xff]
        %v2507 = vld [vmem:[#allocation3 + $0x210] sm:$0xff]
        %v2508 = vld [vmem:[#allocation3 + $0x218] sm:$0xff]
        %v2509 = vld [vmem:[#allocation3 + $0x220] sm:$0xff]
        %v2510 = vld [vmem:[#allocation3 + $0x228] sm:$0xff]
        %v2511 = vld [vmem:[#allocation3 + $0x230] sm:$0xff]
        %v2512 = vld [vmem:[#allocation3 + $0x238] sm:$0xff]
        %v2513 = vld [vmem:[#allocation3 + $0x240] sm:$0xff]
        %v2514 = vld [vmem:[#allocation3 + $0x248] sm:$0xff]
        %v2515 = vld [vmem:[#allocation3 + $0x250] sm:$0xff]
        %v2516 = vld [vmem:[#allocation3 + $0x258] sm:$0xff]
        %v2517 = vld [vmem:[#allocation3 + $0x260] sm:$0xff]
        %v2518 = vld [vmem:[#allocation3 + $0x268] sm:$0xff]
        %v2519 = vld [vmem:[#allocation3 + $0x270] sm:$0xff]
        %v2520 = vld [vmem:[#allocation3 + $0x278] sm:$0xff]
        %v2521 = vld [vmem:[#allocation3 + $0x280] sm:$0xff]
        %v2522 = vld [vmem:[#allocation3 + $0x288] sm:$0xff]
        %v2523 = vld [vmem:[#allocation3 + $0x290] sm:$0xff]
        %v2524 = vld [vmem:[#allocation3 + $0x298] sm:$0xff]
        %v2525 = vld [vmem:[#allocation3 + $0x2a0] sm:$0xff]
        %v2526 = vld [vmem:[#allocation3 + $0x2a8] sm:$0xff]
        %v2527 = vld [vmem:[#allocation3 + $0x2b0] sm:$0xff]
        %v2528 = vld [vmem:[#allocation3 + $0x2b8] sm:$0xff]
        %v2529 = vld [vmem:[#allocation3 + $0x2c0] sm:$0xff]
        %v2530 = vld [vmem:[#allocation3 + $0x2c8] sm:$0xff]
        %v2531 = vld [vmem:[#allocation3 + $0x2d0] sm:$0xff]
        %v2532 = vld [vmem:[#allocation3 + $0x2d8] sm:$0xff]
        %v2533 = vld [vmem:[#allocation3 + $0x2e0] sm:$0xff]
        %v2534 = vld [vmem:[#allocation3 + $0x2e8] sm:$0xff]
        %v2535 = vld [vmem:[#allocation3 + $0x2f0] sm:$0xff]
        %v2536 = vld [vmem:[#allocation3 + $0x2f8] sm:$0xff]
        %v2537 = vld [vmem:[#allocation3 + $0x300] sm:$0xff]
        %v2538 = vld [vmem:[#allocation3 + $0x308] sm:$0xff]
        %v2539 = vld [vmem:[#allocation3 + $0x310] sm:$0xff]
        %v2540 = vld [vmem:[#allocation3 + $0x318] sm:$0xff]
        %v2541 = vld [vmem:[#allocation3 + $0x320] sm:$0xff]
        %v2542 = vld [vmem:[#allocation3 + $0x328] sm:$0xff]
        %v2543 = vld [vmem:[#allocation3 + $0x330] sm:$0xff]
        %v2544 = vld [vmem:[#allocation3 + $0x338] sm:$0xff]
        %v2545 = vld [vmem:[#allocation3 + $0x340] sm:$0xff]
        %v2546 = vld [vmem:[#allocation3 + $0x348] sm:$0xff]
        %v2547 = vld [vmem:[#allocation3 + $0x350] sm:$0xff]
        %v2548 = vld [vmem:[#allocation3 + $0x358] sm:$0xff]
        %v2549 = vld [vmem:[#allocation3 + $0x360] sm:$0xff]
        %v2550 = vld [vmem:[#allocation3 + $0x368] sm:$0xff]
        %v2551 = vld [vmem:[#allocation3 + $0x370] sm:$0xff]
        %v2552 = vld [vmem:[#allocation3 + $0x378] sm:$0xff]
        %v2553 = vld [vmem:[#allocation3 + $0x380] sm:$0xff]
        %v2554 = vld [vmem:[#allocation3 + $0x388] sm:$0xff]
        %v2555 = vld [vmem:[#allocation3 + $0x390] sm:$0xff]
        %v2556 = vld [vmem:[#allocation3 + $0x398] sm:$0xff]
        %v2557 = vld [vmem:[#allocation3 + $0x3a0] sm:$0xff]
        %v2558 = vld [vmem:[#allocation3 + $0x3a8] sm:$0xff]
        %v2559 = vld [vmem:[#allocation3 + $0x3b0] sm:$0xff]
        %v2560 = vld [vmem:[#allocation3 + $0x3b8] sm:$0xff]
        %v2561 = vld [vmem:[#allocation3 + $0x3c0] sm:$0xff]
        %v2562 = vld [vmem:[#allocation3 + $0x3c8] sm:$0xff]
        %v2563 = vld [vmem:[#allocation3 + $0x3d0] sm:$0xff]
        %v2564 = vld [vmem:[#allocation3 + $0x3d8] sm:$0xff]
        %v2565 = vld [vmem:[#allocation3 + $0x3e0] sm:$0xff]
        %v2566 = vld [vmem:[#allocation3 + $0x3e8] sm:$0xff]
        %v2567 = vld [vmem:[#allocation3 + $0x3f0] sm:$0xff]
        %v2568 = vld [vmem:[#allocation3 + $0x3f8] sm:$0xff]
        %v2569 = vld [vmem:[#allocation3 + $0x400] sm:$0xff]
        %v2570 = vld [vmem:[#allocation3 + $0x408] sm:$0xff]
        %v2571 = vld [vmem:[#allocation3 + $0x410] sm:$0xff]
        %v2572 = vld [vmem:[#allocation3 + $0x418] sm:$0xff]
        %v2573 = vld [vmem:[#allocation3 + $0x420] sm:$0xff]
        %v2574 = vld [vmem:[#allocation3 + $0x428] sm:$0xff]
        %v2575 = vld [vmem:[#allocation3 + $0x430] sm:$0xff]
        %v2576 = vld [vmem:[#allocation3 + $0x438] sm:$0xff]
        %v2577 = vld [vmem:[#allocation3 + $0x440] sm:$0xff]
        %v2578 = vld [vmem:[#allocation3 + $0x448] sm:$0xff]
        %v2579 = vld [vmem:[#allocation3 + $0x450] sm:$0xff]
        %v2580 = vld [vmem:[#allocation3 + $0x458] sm:$0xff]
        %v2581 = vld [vmem:[#allocation3 + $0x460] sm:$0xff]
        %v2582 = vld [vmem:[#allocation3 + $0x468] sm:$0xff]
        %v2583 = vld [vmem:[#allocation3 + $0x470] sm:$0xff]
        %v2584 = vld [vmem:[#allocation3 + $0x478] sm:$0xff]
        %v2585 = vld [vmem:[#allocation3 + $0x480] sm:$0xff]
        %v2586 = vld [vmem:[#allocation3 + $0x488] sm:$0xff]
        %v2587 = vld [vmem:[#allocation3 + $0x490] sm:$0xff]
        %v2588 = vld [vmem:[#allocation3 + $0x498] sm:$0xff]
        %v2589 = vld [vmem:[#allocation3 + $0x4a0] sm:$0xff]
        %v2590 = vld [vmem:[#allocation3 + $0x4a8] sm:$0xff]
        %v2591 = vld [vmem:[#allocation3 + $0x4b0] sm:$0xff]
        %v2592 = vld [vmem:[#allocation3 + $0x4b8] sm:$0xff]
        %v2593 = vld [vmem:[#allocation3 + $0x4c0] sm:$0xff]
        %v2594 = vld [vmem:[#allocation3 + $0x4c8] sm:$0xff]
        %v2595 = vld [vmem:[#allocation3 + $0x4d0] sm:$0xff]
        %v2596 = vld [vmem:[#allocation3 + $0x4d8] sm:$0xff]
        %v2597 = vld [vmem:[#allocation3 + $0x4e0] sm:$0xff]
        %v2598 = vld [vmem:[#allocation3 + $0x4e8] sm:$0xff]
        %v2599 = vld [vmem:[#allocation3 + $0x4f0] sm:$0xff]
        %v2600 = vld [vmem:[#allocation3 + $0x4f8] sm:$0xff]
        %v2601 = vld [vmem:[%s6] sm:$0xff]
        %v2602 = vld [vmem:[%s6 + $0x8] sm:$0xff]
        %v2603 = vld [vmem:[%s6 + $0x10] sm:$0xff]
        %v2604 = vld [vmem:[%s6 + $0x18] sm:$0xff]
        %v2605 = vld [vmem:[%s6 + $0x20] sm:$0xff]
        %v2606 = vld [vmem:[%s6 + $0x28] sm:$0xff]
        %v2607 = vld [vmem:[%s6 + $0x30] sm:$0xff]
        %v2608 = vld [vmem:[%s6 + $0x38] sm:$0xff]
        %v2609 = vld [vmem:[%s6 + $0x40] sm:$0xff]
        %v2610 = vld [vmem:[%s6 + $0x48] sm:$0xff]
        %v2611 = vld [vmem:[%s6 + $0x50] sm:$0xff]
        %v2612 = vld [vmem:[%s6 + $0x58] sm:$0xff]
        %v2613 = vld [vmem:[%s6 + $0x60] sm:$0xff]
        %v2614 = vld [vmem:[%s6 + $0x68] sm:$0xff]
        %v2615 = vld [vmem:[%s6 + $0x70] sm:$0xff]
        %v2616 = vld [vmem:[%s6 + $0x78] sm:$0xff]
        %v2617 = vld [vmem:[%s6 + $0x80] sm:$0xff]
        %v2618 = vld [vmem:[%s6 + $0x88] sm:$0xff]
        %v2619 = vld [vmem:[%s6 + $0x90] sm:$0xff]
        %v2620 = vld [vmem:[%s6 + $0x98] sm:$0xff]
        %v2621 = vld [vmem:[%s6 + $0xa0] sm:$0xff]
        %v2622 = vld [vmem:[%s6 + $0xa8] sm:$0xff]
        %v2623 = vld [vmem:[%s6 + $0xb0] sm:$0xff]
        %v2624 = vld [vmem:[%s6 + $0xb8] sm:$0xff]
        %v2625 = vld [vmem:[%s6 + $0xc0] sm:$0xff]
        %v2626 = vld [vmem:[%s6 + $0xc8] sm:$0xff]
        %v2627 = vld [vmem:[%s6 + $0xd0] sm:$0xff]
        %v2628 = vld [vmem:[%s6 + $0xd8] sm:$0xff]
        %v2629 = vld [vmem:[%s6 + $0xe0] sm:$0xff]
        %v2630 = vld [vmem:[%s6 + $0xe8] sm:$0xff]
        %v2631 = vld [vmem:[%s6 + $0xf0] sm:$0xff]
        %v2632 = vld [vmem:[%s6 + $0xf8] sm:$0xff]
        %v2633 = vld [vmem:[%s6 + $0x100] sm:$0xff]
        %v2634 = vld [vmem:[%s6 + $0x108] sm:$0xff]
        %v2635 = vld [vmem:[%s6 + $0x110] sm:$0xff]
        %v2636 = vld [vmem:[%s6 + $0x118] sm:$0xff]
        %v2637 = vld [vmem:[%s6 + $0x120] sm:$0xff]
        %v2638 = vld [vmem:[%s6 + $0x128] sm:$0xff]
        %v2639 = vld [vmem:[%s6 + $0x130] sm:$0xff]
        %v2640 = vld [vmem:[%s6 + $0x138] sm:$0xff]
        %v2641 = vld [vmem:[%s6 + $0x140] sm:$0xff]
        %v2642 = vld [vmem:[%s6 + $0x148] sm:$0xff]
        %v2643 = vld [vmem:[%s6 + $0x150] sm:$0xff]
        %v2644 = vld [vmem:[%s6 + $0x158] sm:$0xff]
        %v2645 = vld [vmem:[%s6 + $0x160] sm:$0xff]
        %v2646 = vld [vmem:[%s6 + $0x168] sm:$0xff]
        %v2647 = vld [vmem:[%s6 + $0x170] sm:$0xff]
        %v2648 = vld [vmem:[%s6 + $0x178] sm:$0xff]
        %v2649 = vld [vmem:[%s6 + $0x180] sm:$0xff]
        %v2650 = vld [vmem:[%s6 + $0x188] sm:$0xff]
        %v2651 = vld [vmem:[%s6 + $0x190] sm:$0xff]
        %v2652 = vld [vmem:[%s6 + $0x198] sm:$0xff]
        %v2653 = vld [vmem:[%s6 + $0x1a0] sm:$0xff]
        %v2654 = vld [vmem:[%s6 + $0x1a8] sm:$0xff]
        %v2655 = vld [vmem:[%s6 + $0x1b0] sm:$0xff]
        %v2656 = vld [vmem:[%s6 + $0x1b8] sm:$0xff]
        %v2657 = vld [vmem:[%s6 + $0x1c0] sm:$0xff]
        %v2658 = vld [vmem:[%s6 + $0x1c8] sm:$0xff]
        %v2659 = vld [vmem:[%s6 + $0x1d0] sm:$0xff]
        %v2660 = vld [vmem:[%s6 + $0x1d8] sm:$0xff]
        %v2661 = vld [vmem:[%s6 + $0x1e0] sm:$0xff]
        %v2662 = vld [vmem:[%s6 + $0x1e8] sm:$0xff]
        %v2663 = vld [vmem:[%s6 + $0x1f0] sm:$0xff]
        %v2664 = vld [vmem:[%s6 + $0x1f8] sm:$0xff]
        %v2665 = vld [vmem:[%s6 + $0x200] sm:$0xff]
        %v2666 = vld [vmem:[%s6 + $0x208] sm:$0xff]
        %v2667 = vld [vmem:[%s6 + $0x210] sm:$0xff]
        %v2668 = vld [vmem:[%s6 + $0x218] sm:$0xff]
        %v2669 = vld [vmem:[%s6 + $0x220] sm:$0xff]
        %v2670 = vld [vmem:[%s6 + $0x228] sm:$0xff]
        %v2671 = vld [vmem:[%s6 + $0x230] sm:$0xff]
        %v2672 = vld [vmem:[%s6 + $0x238] sm:$0xff]
        %v2673 = vld [vmem:[%s7] sm:$0x1]
        %v2675 = vlaneseq
        %v2676 = vshrl.u32 %v2675, 7
        %v2677 = vsub.s32 0, %v2676
        %v2678 = vrot.slane %v2673, %v2677
        %v2681 = vsel %vm467, %v2445, 0
        %v2684 = vsel %vm467, %v2450, 0
        %v2687 = vsel %vm467, %v2455, 0
        %v2690 = vsel %vm467, %v2460, 0
        %v2693 = vsel %vm467, %v2465, 0
        %v2696 = vsel %vm467, %v2470, 0
        %v2699 = vsel %vm467, %v2475, 0
        %v2702 = vsel %vm467, %v2480, 0
        %v2705 = vsel %vm467, %v2485, 0
        %v2708 = vsel %vm467, %v2490, 0
        %v2711 = vsel %vm467, %v2495, 0
        %v2714 = vsel %vm467, %v2500, 0
        %v2717 = vsel %vm467, %v2505, 0
        %v2720 = vsel %vm467, %v2510, 0
        %v2723 = vsel %vm467, %v2515, 0
        %v2726 = vsel %vm467, %v2520, 0
        %v2729 = vsel %vm467, %v2525, 0
        %v2732 = vsel %vm467, %v2530, 0
        %v2735 = vsel %vm467, %v2535, 0
        %v2738 = vsel %vm467, %v2540, 0
        %v2741 = vsel %vm467, %v2545, 0
        %v2744 = vsel %vm467, %v2550, 0
        %v2747 = vsel %vm467, %v2555, 0
        %v2750 = vsel %vm467, %v2560, 0
        %v2753 = vsel %vm467, %v2565, 0
        %v2756 = vsel %vm467, %v2570, 0
        %v2759 = vsel %vm467, %v2575, 0
        %v2762 = vsel %vm467, %v2580, 0
        %v2765 = vsel %vm467, %v2585, 0
        %v2768 = vsel %vm467, %v2590, 0
        %v2771 = vsel %vm467, %v2595, 0
        %v2774 = vsel %vm467, %v2600, 0
        %2776 = vmatprep.subr.mxu0 0.0
        %2777 = vmatpush1.msra.mxu0 %v2616
        %2778 = vmatprep.subr.mxu0 0.0
        %2779 = vmatpush1.msra.mxu0 %v2615
        %2780 = vmatprep.subr.mxu0 0.0
        %2781 = vmatpush1.msra.mxu0 %v2614
        %2782 = vmatprep.subr.mxu0 0.0
        %2783 = vmatpush1.msra.mxu0 %v2613
        %2784 = vmatprep.subr.mxu0 0.0
        %2785 = vmatpush1.msra.mxu0 %v2612
        %2786 = vmatprep.subr.mxu0 0.0
        %2787 = vmatpush1.msra.mxu0 %v2611
        %2788 = vmatprep.subr.mxu0 0.0
        %2789 = vmatpush1.msra.mxu0 %v2610
        %2790 = vmatprep.subr.mxu0 0.0
        %2791 = vmatpush1.msra.mxu0 %v2609
        %2792 = vmatprep.subr.mxu0 0.0
        %2793 = vmatpush1.msra.mxu0 %v2608
        %2794 = vmatprep.subr.mxu0 0.0
        %2795 = vmatpush1.msra.mxu0 %v2607
        %2796 = vmatprep.subr.mxu0 0.0
        %2797 = vmatpush1.msra.mxu0 %v2606
        %2798 = vmatprep.subr.mxu0 0.0
        %2799 = vmatpush1.msra.mxu0 %v2605
        %2800 = vmatprep.subr.mxu0 0.0
        %2801 = vmatpush1.msra.mxu0 %v2604
        %2802 = vmatprep.subr.mxu0 0.0
        %2803 = vmatpush1.msra.mxu0 %v2603
        %2804 = vmatprep.subr.mxu0 0.0
        %2805 = vmatpush1.msra.mxu0 %v2602
        %2806 = vmatprep.subr.mxu0 0.0
        %2807 = vmatpush1.msra.mxu0 %v2601
        %2808 = vmatprep.subr.mxu0 0.0
        %2809 = vmatpush2.msra.mxu0 %v2632
        %2810 = vmatprep.subr.mxu0 0.0
        %2811 = vmatpush2.msra.mxu0 %v2631
        %2812 = vmatprep.subr.mxu0 0.0
        %2813 = vmatpush2.msra.mxu0 %v2630
        %2814 = vmatprep.subr.mxu0 0.0
        %2815 = vmatpush2.msra.mxu0 %v2629
        %2816 = vmatprep.subr.mxu0 0.0
        %2817 = vmatpush2.msra.mxu0 %v2628
        %2818 = vmatprep.subr.mxu0 0.0
        %2819 = vmatpush2.msra.mxu0 %v2627
        %2820 = vmatprep.subr.mxu0 0.0
        %2821 = vmatpush2.msra.mxu0 %v2626
        %2822 = vmatprep.subr.mxu0 0.0
        %2823 = vmatpush2.msra.mxu0 %v2625
        %2824 = vmatprep.subr.mxu0 0.0
        %2825 = vmatpush2.msra.mxu0 %v2624
        %2826 = vmatprep.subr.mxu0 0.0
        %2827 = vmatpush2.msra.mxu0 %v2623
        %2828 = vmatprep.subr.mxu0 0.0
        %2829 = vmatpush2.msra.mxu0 %v2622
        %2830 = vmatprep.subr.mxu0 0.0
        %2831 = vmatpush2.msra.mxu0 %v2621
        %2832 = vmatprep.subr.mxu0 0.0
        %2833 = vmatpush2.msra.mxu0 %v2620
        %2834 = vmatprep.subr.mxu0 0.0
        %2835 = vmatpush2.msra.mxu0 %v2619
        %2836 = vmatprep.subr.mxu0 0.0
        %2837 = vmatpush2.msra.mxu0 %v2618
        %2838 = vmatprep.subr.mxu0 0.0
        %2839 = vmatpush2.msra.mxu0 %v2617
        %2840 = vmatprep.mubr.f32.mxu0 %v2442
        %2841 = vmatmul.mubr.f32.gmra.mxu0 %v2441
        %v2842 = vpop.f32.mrf.mxu0
        %v2843 = vadd.f32 %v2678, %v2842
        %v2844 = vpop.f32.mrf.mxu0
        %2845 = vmatprep.mubr.f32.mxu0 %v2447
        %2846 = vmatmul.mubr.f32.gmra.mxu0 %v2446
        %v2847 = vpop.f32.mrf.mxu0
        %v2848 = vadd.f32 %v2678, %v2847
        %v2849 = vpop.f32.mrf.mxu0
        %2850 = vmatprep.mubr.f32.mxu0 %v2452
        %2851 = vmatmul.mubr.f32.gmra.mxu0 %v2451
        %v2852 = vpop.f32.mrf.mxu0
        %v2853 = vadd.f32 %v2678, %v2852
        %v2854 = vpop.f32.mrf.mxu0
        %2855 = vmatprep.mubr.f32.mxu0 %v2457
        %2856 = vmatmul.mubr.f32.gmra.mxu0 %v2456
        %v2857 = vpop.f32.mrf.mxu0
        %v2858 = vadd.f32 %v2678, %v2857
        %v2859 = vpop.f32.mrf.mxu0
        %2860 = vmatprep.mubr.f32.mxu0 %v2462
        %2861 = vmatmul.mubr.f32.gmra.mxu0 %v2461
        %v2862 = vpop.f32.mrf.mxu0
        %v2863 = vadd.f32 %v2678, %v2862
        %v2864 = vpop.f32.mrf.mxu0
        %2865 = vmatprep.mubr.f32.mxu0 %v2467
        %2866 = vmatmul.mubr.f32.gmra.mxu0 %v2466
        %v2867 = vpop.f32.mrf.mxu0
        %v2868 = vadd.f32 %v2678, %v2867
        %v2869 = vpop.f32.mrf.mxu0
        %2870 = vmatprep.mubr.f32.mxu0 %v2472
        %2871 = vmatmul.mubr.f32.gmra.mxu0 %v2471
        %v2872 = vpop.f32.mrf.mxu0
        %v2873 = vadd.f32 %v2678, %v2872
        %v2874 = vpop.f32.mrf.mxu0
        %2875 = vmatprep.mubr.f32.mxu0 %v2477
        %2876 = vmatmul.mubr.f32.gmra.mxu0 %v2476
        %v2877 = vpop.f32.mrf.mxu0
        %v2878 = vadd.f32 %v2678, %v2877
        %v2879 = vpop.f32.mrf.mxu0
        %2880 = vmatprep.mubr.f32.mxu0 %v2482
        %2881 = vmatmul.mubr.f32.gmra.mxu0 %v2481
        %v2882 = vpop.f32.mrf.mxu0
        %v2883 = vadd.f32 %v2678, %v2882
        %v2884 = vpop.f32.mrf.mxu0
        %2885 = vmatprep.mubr.f32.mxu0 %v2487
        %2886 = vmatmul.mubr.f32.gmra.mxu0 %v2486
        %v2887 = vpop.f32.mrf.mxu0
        %v2888 = vadd.f32 %v2678, %v2887
        %v2889 = vpop.f32.mrf.mxu0
        %2890 = vmatprep.mubr.f32.mxu0 %v2492
        %2891 = vmatmul.mubr.f32.gmra.mxu0 %v2491
        %v2892 = vpop.f32.mrf.mxu0
        %v2893 = vadd.f32 %v2678, %v2892
        %v2894 = vpop.f32.mrf.mxu0
        %2895 = vmatprep.mubr.f32.mxu0 %v2497
        %2896 = vmatmul.mubr.f32.gmra.mxu0 %v2496
        %v2897 = vpop.f32.mrf.mxu0
        %v2898 = vadd.f32 %v2678, %v2897
        %v2899 = vpop.f32.mrf.mxu0
        %2900 = vmatprep.mubr.f32.mxu0 %v2502
        %2901 = vmatmul.mubr.f32.gmra.mxu0 %v2501
        %v2902 = vpop.f32.mrf.mxu0
        %v2903 = vadd.f32 %v2678, %v2902
        %v2904 = vpop.f32.mrf.mxu0
        %2905 = vmatprep.mubr.f32.mxu0 %v2507
        %2906 = vmatmul.mubr.f32.gmra.mxu0 %v2506
        %v2907 = vpop.f32.mrf.mxu0
        %v2908 = vadd.f32 %v2678, %v2907
        %v2909 = vpop.f32.mrf.mxu0
        %2910 = vmatprep.mubr.f32.mxu0 %v2512
        %2911 = vmatmul.mubr.f32.gmra.mxu0 %v2511
        %v2912 = vpop.f32.mrf.mxu0
        %v2913 = vadd.f32 %v2678, %v2912
        %v2914 = vpop.f32.mrf.mxu0
        %2915 = vmatprep.mubr.f32.mxu0 %v2517
        %2916 = vmatmul.mubr.f32.gmra.mxu0 %v2516
        %v2917 = vpop.f32.mrf.mxu0
        %v2918 = vadd.f32 %v2678, %v2917
        %v2919 = vpop.f32.mrf.mxu0
        %2920 = vmatprep.mubr.f32.mxu0 %v2522
        %2921 = vmatmul.mubr.f32.gmra.mxu0 %v2521
        %v2922 = vpop.f32.mrf.mxu0
        %v2923 = vadd.f32 %v2678, %v2922
        %v2924 = vpop.f32.mrf.mxu0
        %2925 = vmatprep.mubr.f32.mxu0 %v2527
        %2926 = vmatmul.mubr.f32.gmra.mxu0 %v2526
        %v2927 = vpop.f32.mrf.mxu0
        %v2928 = vadd.f32 %v2678, %v2927
        %v2929 = vpop.f32.mrf.mxu0
        %2930 = vmatprep.mubr.f32.mxu0 %v2532
        %2931 = vmatmul.mubr.f32.gmra.mxu0 %v2531
        %v2932 = vpop.f32.mrf.mxu0
        %v2933 = vadd.f32 %v2678, %v2932
        %v2934 = vpop.f32.mrf.mxu0
        %2935 = vmatprep.mubr.f32.mxu0 %v2537
        %2936 = vmatmul.mubr.f32.gmra.mxu0 %v2536
        %v2937 = vpop.f32.mrf.mxu0
        %v2938 = vadd.f32 %v2678, %v2937
        %v2939 = vpop.f32.mrf.mxu0
        %2940 = vmatprep.mubr.f32.mxu0 %v2542
        %2941 = vmatmul.mubr.f32.gmra.mxu0 %v2541
        %v2942 = vpop.f32.mrf.mxu0
        %v2943 = vadd.f32 %v2678, %v2942
        %v2944 = vpop.f32.mrf.mxu0
        %2945 = vmatprep.mubr.f32.mxu0 %v2547
        %2946 = vmatmul.mubr.f32.gmra.mxu0 %v2546
        %v2947 = vpop.f32.mrf.mxu0
        %v2948 = vadd.f32 %v2678, %v2947
        %v2949 = vpop.f32.mrf.mxu0
        %2950 = vmatprep.mubr.f32.mxu0 %v2552
        %2951 = vmatmul.mubr.f32.gmra.mxu0 %v2551
        %v2952 = vpop.f32.mrf.mxu0
        %v2953 = vadd.f32 %v2678, %v2952
        %v2954 = vpop.f32.mrf.mxu0
        %2955 = vmatprep.mubr.f32.mxu0 %v2557
        %2956 = vmatmul.mubr.f32.gmra.mxu0 %v2556
        %v2957 = vpop.f32.mrf.mxu0
        %v2958 = vadd.f32 %v2678, %v2957
        %v2959 = vpop.f32.mrf.mxu0
        %2960 = vmatprep.mubr.f32.mxu0 %v2562
        %2961 = vmatmul.mubr.f32.gmra.mxu0 %v2561
        %v2962 = vpop.f32.mrf.mxu0
        %v2963 = vadd.f32 %v2678, %v2962
        %v2964 = vpop.f32.mrf.mxu0
        %2965 = vmatprep.mubr.f32.mxu0 %v2567
        %2966 = vmatmul.mubr.f32.gmra.mxu0 %v2566
        %v2967 = vpop.f32.mrf.mxu0
        %v2968 = vadd.f32 %v2678, %v2967
        %v2969 = vpop.f32.mrf.mxu0
        %2970 = vmatprep.mubr.f32.mxu0 %v2572
        %2971 = vmatmul.mubr.f32.gmra.mxu0 %v2571
        %v2972 = vpop.f32.mrf.mxu0
        %v2973 = vadd.f32 %v2678, %v2972
        %v2974 = vpop.f32.mrf.mxu0
        %2975 = vmatprep.mubr.f32.mxu0 %v2577
        %2976 = vmatmul.mubr.f32.gmra.mxu0 %v2576
        %v2977 = vpop.f32.mrf.mxu0
        %v2978 = vadd.f32 %v2678, %v2977
        %v2979 = vpop.f32.mrf.mxu0
        %2980 = vmatprep.mubr.f32.mxu0 %v2582
        %2981 = vmatmul.mubr.f32.gmra.mxu0 %v2581
        %v2982 = vpop.f32.mrf.mxu0
        %v2983 = vadd.f32 %v2678, %v2982
        %v2984 = vpop.f32.mrf.mxu0
        %2985 = vmatprep.mubr.f32.mxu0 %v2587
        %2986 = vmatmul.mubr.f32.gmra.mxu0 %v2586
        %v2987 = vpop.f32.mrf.mxu0
        %v2988 = vadd.f32 %v2678, %v2987
        %v2989 = vpop.f32.mrf.mxu0
        %2990 = vmatprep.mubr.f32.mxu0 %v2592
        %2991 = vmatmul.mubr.f32.gmra.mxu0 %v2591
        %v2992 = vpop.f32.mrf.mxu0
        %v2993 = vadd.f32 %v2678, %v2992
        %v2994 = vpop.f32.mrf.mxu0
        %2995 = vmatprep.mubr.f32.mxu0 %v2597
        %2996 = vmatmul.mubr.f32.gmra.mxu0 %v2596
        %v2997 = vpop.f32.mrf.mxu0
        %v2998 = vadd.f32 %v2678, %v2997
        %v2999 = vpop.f32.mrf.mxu0
        %3000 = vdwg.mxu0
        %3001 = vmatprep.subr.mxu0 0.0
        %3002 = vmatpush1.msra.mxu0 %v2648
        %3003 = vmatprep.subr.mxu0 0.0
        %3004 = vmatpush1.msra.mxu0 %v2647
        %3005 = vmatprep.subr.mxu0 0.0
        %3006 = vmatpush1.msra.mxu0 %v2646
        %3007 = vmatprep.subr.mxu0 0.0
        %3008 = vmatpush1.msra.mxu0 %v2645
        %3009 = vmatprep.subr.mxu0 0.0
        %3010 = vmatpush1.msra.mxu0 %v2644
        %3011 = vmatprep.subr.mxu0 0.0
        %3012 = vmatpush1.msra.mxu0 %v2643
        %3013 = vmatprep.subr.mxu0 0.0
        %3014 = vmatpush1.msra.mxu0 %v2642
        %3015 = vmatprep.subr.mxu0 0.0
        %3016 = vmatpush1.msra.mxu0 %v2641
        %3017 = vmatprep.subr.mxu0 0.0
        %3018 = vmatpush1.msra.mxu0 %v2640
        %3019 = vmatprep.subr.mxu0 0.0
        %3020 = vmatpush1.msra.mxu0 %v2639
        %3021 = vmatprep.subr.mxu0 0.0
        %3022 = vmatpush1.msra.mxu0 %v2638
        %3023 = vmatprep.subr.mxu0 0.0
        %3024 = vmatpush1.msra.mxu0 %v2637
        %3025 = vmatprep.subr.mxu0 0.0
        %3026 = vmatpush1.msra.mxu0 %v2636
        %3027 = vmatprep.subr.mxu0 0.0
        %3028 = vmatpush1.msra.mxu0 %v2635
        %3029 = vmatprep.subr.mxu0 0.0
        %3030 = vmatpush1.msra.mxu0 %v2634
        %3031 = vmatprep.subr.mxu0 0.0
        %3032 = vmatpush1.msra.mxu0 %v2633
        %3033 = vmatprep.subr.mxu0 0.0
        %3034 = vmatpush2.msra.mxu0 %v2664
        %3035 = vmatprep.subr.mxu0 0.0
        %3036 = vmatpush2.msra.mxu0 %v2663
        %3037 = vmatprep.subr.mxu0 0.0
        %3038 = vmatpush2.msra.mxu0 %v2662
        %3039 = vmatprep.subr.mxu0 0.0
        %3040 = vmatpush2.msra.mxu0 %v2661
        %3041 = vmatprep.subr.mxu0 0.0
        %3042 = vmatpush2.msra.mxu0 %v2660
        %3043 = vmatprep.subr.mxu0 0.0
        %3044 = vmatpush2.msra.mxu0 %v2659
        %3045 = vmatprep.subr.mxu0 0.0
        %3046 = vmatpush2.msra.mxu0 %v2658
        %3047 = vmatprep.subr.mxu0 0.0
        %3048 = vmatpush2.msra.mxu0 %v2657
        %3049 = vmatprep.subr.mxu0 0.0
        %3050 = vmatpush2.msra.mxu0 %v2656
        %3051 = vmatprep.subr.mxu0 0.0
        %3052 = vmatpush2.msra.mxu0 %v2655
        %3053 = vmatprep.subr.mxu0 0.0
        %3054 = vmatpush2.msra.mxu0 %v2654
        %3055 = vmatprep.subr.mxu0 0.0
        %3056 = vmatpush2.msra.mxu0 %v2653
        %3057 = vmatprep.subr.mxu0 0.0
        %3058 = vmatpush2.msra.mxu0 %v2652
        %3059 = vmatprep.subr.mxu0 0.0
        %3060 = vmatpush2.msra.mxu0 %v2651
        %3061 = vmatprep.subr.mxu0 0.0
        %3062 = vmatpush2.msra.mxu0 %v2650
        %3063 = vmatprep.subr.mxu0 0.0
        %3064 = vmatpush2.msra.mxu0 %v2649
        %3065 = vmatprep.mubr.f32.mxu0 %v2444
        %3066 = vmatmul.mubr.f32.gmra.mxu0 %v2443
        %v3067 = vpop.f32.mrf.mxu0
        %v3068 = vadd.f32 %v2843, %v3067
        %v3069 = vpop.f32.mrf.mxu0
        %3070 = vmatprep.mubr.f32.mxu0 %v2449
        %3071 = vmatmul.mubr.f32.gmra.mxu0 %v2448
        %v3072 = vpop.f32.mrf.mxu0
        %v3073 = vadd.f32 %v2848, %v3072
        %v3074 = vpop.f32.mrf.mxu0
        %3075 = vmatprep.mubr.f32.mxu0 %v2454
        %3076 = vmatmul.mubr.f32.gmra.mxu0 %v2453
        %v3077 = vpop.f32.mrf.mxu0
        %v3078 = vadd.f32 %v2853, %v3077
        %v3079 = vpop.f32.mrf.mxu0
        %3080 = vmatprep.mubr.f32.mxu0 %v2459
        %3081 = vmatmul.mubr.f32.gmra.mxu0 %v2458
        %v3082 = vpop.f32.mrf.mxu0
        %v3083 = vadd.f32 %v2858, %v3082
        %v3084 = vpop.f32.mrf.mxu0
        %3085 = vmatprep.mubr.f32.mxu0 %v2464
        %3086 = vmatmul.mubr.f32.gmra.mxu0 %v2463
        %v3087 = vpop.f32.mrf.mxu0
        %v3088 = vadd.f32 %v2863, %v3087
        %v3089 = vpop.f32.mrf.mxu0
        %3090 = vmatprep.mubr.f32.mxu0 %v2469
        %3091 = vmatmul.mubr.f32.gmra.mxu0 %v2468
        %v3092 = vpop.f32.mrf.mxu0
        %v3093 = vadd.f32 %v2868, %v3092
        %v3094 = vpop.f32.mrf.mxu0
        %3095 = vmatprep.mubr.f32.mxu0 %v2474
        %3096 = vmatmul.mubr.f32.gmra.mxu0 %v2473
        %v3097 = vpop.f32.mrf.mxu0
        %v3098 = vadd.f32 %v2873, %v3097
        %v3099 = vpop.f32.mrf.mxu0
        %3100 = vmatprep.mubr.f32.mxu0 %v2479
        %3101 = vmatmul.mubr.f32.gmra.mxu0 %v2478
        %v3102 = vpop.f32.mrf.mxu0
        %v3103 = vadd.f32 %v2878, %v3102
        %v3104 = vpop.f32.mrf.mxu0
        %3105 = vmatprep.mubr.f32.mxu0 %v2484
        %3106 = vmatmul.mubr.f32.gmra.mxu0 %v2483
        %v3107 = vpop.f32.mrf.mxu0
        %v3108 = vadd.f32 %v2883, %v3107
        %v3109 = vpop.f32.mrf.mxu0
        %3110 = vmatprep.mubr.f32.mxu0 %v2489
        %3111 = vmatmul.mubr.f32.gmra.mxu0 %v2488
        %v3112 = vpop.f32.mrf.mxu0
        %v3113 = vadd.f32 %v2888, %v3112
        %v3114 = vpop.f32.mrf.mxu0
        %3115 = vmatprep.mubr.f32.mxu0 %v2494
        %3116 = vmatmul.mubr.f32.gmra.mxu0 %v2493
        %v3117 = vpop.f32.mrf.mxu0
        %v3118 = vadd.f32 %v2893, %v3117
        %v3119 = vpop.f32.mrf.mxu0
        %3120 = vmatprep.mubr.f32.mxu0 %v2499
        %3121 = vmatmul.mubr.f32.gmra.mxu0 %v2498
        %v3122 = vpop.f32.mrf.mxu0
        %v3123 = vadd.f32 %v2898, %v3122
        %v3124 = vpop.f32.mrf.mxu0
        %3125 = vmatprep.mubr.f32.mxu0 %v2504
        %3126 = vmatmul.mubr.f32.gmra.mxu0 %v2503
        %v3127 = vpop.f32.mrf.mxu0
        %v3128 = vadd.f32 %v2903, %v3127
        %v3129 = vpop.f32.mrf.mxu0
        %3130 = vmatprep.mubr.f32.mxu0 %v2509
        %3131 = vmatmul.mubr.f32.gmra.mxu0 %v2508
        %v3132 = vpop.f32.mrf.mxu0
        %v3133 = vadd.f32 %v2908, %v3132
        %v3134 = vpop.f32.mrf.mxu0
        %3135 = vmatprep.mubr.f32.mxu0 %v2514
        %3136 = vmatmul.mubr.f32.gmra.mxu0 %v2513
        %v3137 = vpop.f32.mrf.mxu0
        %v3138 = vadd.f32 %v2913, %v3137
        %v3139 = vpop.f32.mrf.mxu0
        %3140 = vmatprep.mubr.f32.mxu0 %v2519
        %3141 = vmatmul.mubr.f32.gmra.mxu0 %v2518
        %v3142 = vpop.f32.mrf.mxu0
        %v3143 = vadd.f32 %v2918, %v3142
        %v3144 = vpop.f32.mrf.mxu0
        %3145 = vmatprep.mubr.f32.mxu0 %v2524
        %3146 = vmatmul.mubr.f32.gmra.mxu0 %v2523
        %v3147 = vpop.f32.mrf.mxu0
        %v3148 = vadd.f32 %v2923, %v3147
        %v3149 = vpop.f32.mrf.mxu0
        %3150 = vmatprep.mubr.f32.mxu0 %v2529
        %3151 = vmatmul.mubr.f32.gmra.mxu0 %v2528
        %v3152 = vpop.f32.mrf.mxu0
        %v3153 = vadd.f32 %v2928, %v3152
        %v3154 = vpop.f32.mrf.mxu0
        %3155 = vmatprep.mubr.f32.mxu0 %v2534
        %3156 = vmatmul.mubr.f32.gmra.mxu0 %v2533
        %v3157 = vpop.f32.mrf.mxu0
        %v3158 = vadd.f32 %v2933, %v3157
        %v3159 = vpop.f32.mrf.mxu0
        %3160 = vmatprep.mubr.f32.mxu0 %v2539
        %3161 = vmatmul.mubr.f32.gmra.mxu0 %v2538
        %v3162 = vpop.f32.mrf.mxu0
        %v3163 = vadd.f32 %v2938, %v3162
        %v3164 = vpop.f32.mrf.mxu0
        %3165 = vmatprep.mubr.f32.mxu0 %v2544
        %3166 = vmatmul.mubr.f32.gmra.mxu0 %v2543
        %v3167 = vpop.f32.mrf.mxu0
        %v3168 = vadd.f32 %v2943, %v3167
        %v3169 = vpop.f32.mrf.mxu0
        %3170 = vmatprep.mubr.f32.mxu0 %v2549
        %3171 = vmatmul.mubr.f32.gmra.mxu0 %v2548
        %v3172 = vpop.f32.mrf.mxu0
        %v3173 = vadd.f32 %v2948, %v3172
        %v3174 = vpop.f32.mrf.mxu0
        %3175 = vmatprep.mubr.f32.mxu0 %v2554
        %3176 = vmatmul.mubr.f32.gmra.mxu0 %v2553
        %v3177 = vpop.f32.mrf.mxu0
        %v3178 = vadd.f32 %v2953, %v3177
        %v3179 = vpop.f32.mrf.mxu0
        %3180 = vmatprep.mubr.f32.mxu0 %v2559
        %3181 = vmatmul.mubr.f32.gmra.mxu0 %v2558
        %v3182 = vpop.f32.mrf.mxu0
        %v3183 = vadd.f32 %v2958, %v3182
        %v3184 = vpop.f32.mrf.mxu0
        %3185 = vmatprep.mubr.f32.mxu0 %v2564
        %3186 = vmatmul.mubr.f32.gmra.mxu0 %v2563
        %v3187 = vpop.f32.mrf.mxu0
        %v3188 = vadd.f32 %v2963, %v3187
        %v3189 = vpop.f32.mrf.mxu0
        %3190 = vmatprep.mubr.f32.mxu0 %v2569
        %3191 = vmatmul.mubr.f32.gmra.mxu0 %v2568
        %v3192 = vpop.f32.mrf.mxu0
        %v3193 = vadd.f32 %v2968, %v3192
        %v3194 = vpop.f32.mrf.mxu0
        %3195 = vmatprep.mubr.f32.mxu0 %v2574
        %3196 = vmatmul.mubr.f32.gmra.mxu0 %v2573
        %v3197 = vpop.f32.mrf.mxu0
        %v3198 = vadd.f32 %v2973, %v3197
        %v3199 = vpop.f32.mrf.mxu0
        %3200 = vmatprep.mubr.f32.mxu0 %v2579
        %3201 = vmatmul.mubr.f32.gmra.mxu0 %v2578
        %v3202 = vpop.f32.mrf.mxu0
        %v3203 = vadd.f32 %v2978, %v3202
        %v3204 = vpop.f32.mrf.mxu0
        %3205 = vmatprep.mubr.f32.mxu0 %v2584
        %3206 = vmatmul.mubr.f32.gmra.mxu0 %v2583
        %v3207 = vpop.f32.mrf.mxu0
        %v3208 = vadd.f32 %v2983, %v3207
        %v3209 = vpop.f32.mrf.mxu0
        %3210 = vmatprep.mubr.f32.mxu0 %v2589
        %3211 = vmatmul.mubr.f32.gmra.mxu0 %v2588
        %v3212 = vpop.f32.mrf.mxu0
        %v3213 = vadd.f32 %v2988, %v3212
        %v3214 = vpop.f32.mrf.mxu0
        %3215 = vmatprep.mubr.f32.mxu0 %v2594
        %3216 = vmatmul.mubr.f32.gmra.mxu0 %v2593
        %v3217 = vpop.f32.mrf.mxu0
        %v3218 = vadd.f32 %v2993, %v3217
        %v3219 = vpop.f32.mrf.mxu0
        %3220 = vmatprep.mubr.f32.mxu0 %v2599
        %3221 = vmatmul.mubr.f32.gmra.mxu0 %v2598
        %v3222 = vpop.f32.mrf.mxu0
        %v3223 = vadd.f32 %v2998, %v3222
        %v3224 = vpop.f32.mrf.mxu0
        %3225 = vdwg.mxu0
        %3226 = vmatprep.subr.mxu0 0.0
        %3227 = vmatpush1.msra.mxu0 0.0
        %3228 = vmatprep.subr.mxu0 0.0
        %3229 = vmatpush1.msra.mxu0 0.0
        %3230 = vmatprep.subr.mxu0 0.0
        %3231 = vmatpush1.msra.mxu0 0.0
        %3232 = vmatprep.subr.mxu0 0.0
        %3233 = vmatpush1.msra.mxu0 0.0
        %3234 = vmatprep.subr.mxu0 0.0
        %3235 = vmatpush1.msra.mxu0 0.0
        %3236 = vmatprep.subr.mxu0 0.0
        %3237 = vmatpush1.msra.mxu0 0.0
        %3238 = vmatprep.subr.mxu0 0.0
        %3239 = vmatpush1.msra.mxu0 0.0
        %3240 = vmatprep.subr.mxu0 0.0
        %3241 = vmatpush1.msra.mxu0 0.0
        %3242 = vmatprep.subr.mxu0 0.0
        %3243 = vmatpush1.msra.mxu0 %v2672
        %3244 = vmatprep.subr.mxu0 0.0
        %3245 = vmatpush1.msra.mxu0 %v2671
        %3246 = vmatprep.subr.mxu0 0.0
        %3247 = vmatpush1.msra.mxu0 %v2670
        %3248 = vmatprep.subr.mxu0 0.0
        %3249 = vmatpush1.msra.mxu0 %v2669
        %3250 = vmatprep.subr.mxu0 0.0
        %3251 = vmatpush1.msra.mxu0 %v2668
        %3252 = vmatprep.subr.mxu0 0.0
        %3253 = vmatpush1.msra.mxu0 %v2667
        %3254 = vmatprep.subr.mxu0 0.0
        %3255 = vmatpush1.msra.mxu0 %v2666
        %3256 = vmatprep.subr.mxu0 0.0
        %3257 = vmatpush1.msra.mxu0 %v2665
        %3258 = vmatprep.subr.mxu0 0.0
        %3259 = vmatpush2.msra.mxu0 0.0
        %3260 = vmatprep.subr.mxu0 0.0
        %3261 = vmatpush2.msra.mxu0 0.0
        %3262 = vmatprep.subr.mxu0 0.0
        %3263 = vmatpush2.msra.mxu0 0.0
        %3264 = vmatprep.subr.mxu0 0.0
        %3265 = vmatpush2.msra.mxu0 0.0
        %3266 = vmatprep.subr.mxu0 0.0
        %3267 = vmatpush2.msra.mxu0 0.0
        %3268 = vmatprep.subr.mxu0 0.0
        %3269 = vmatpush2.msra.mxu0 0.0
        %3270 = vmatprep.subr.mxu0 0.0
        %3271 = vmatpush2.msra.mxu0 0.0
        %3272 = vmatprep.subr.mxu0 0.0
        %3273 = vmatpush2.msra.mxu0 0.0
        %3274 = vmatprep.subr.mxu0 0.0
        %3275 = vmatpush2.msra.mxu0 0.0
        %3276 = vmatprep.subr.mxu0 0.0
        %3277 = vmatpush2.msra.mxu0 0.0
        %3278 = vmatprep.subr.mxu0 0.0
        %3279 = vmatpush2.msra.mxu0 0.0
        %3280 = vmatprep.subr.mxu0 0.0
        %3281 = vmatpush2.msra.mxu0 0.0
        %3282 = vmatprep.subr.mxu0 0.0
        %3283 = vmatpush2.msra.mxu0 0.0
        %3284 = vmatprep.subr.mxu0 0.0
        %3285 = vmatpush2.msra.mxu0 0.0
        %3286 = vmatprep.subr.mxu0 0.0
        %3287 = vmatpush2.msra.mxu0 0.0
        %3288 = vmatprep.subr.mxu0 0.0
        %3289 = vmatpush2.msra.mxu0 0.0
        %3290 = vmatprep.mubr.f32.mxu0 0.0
        %3291 = vmatmul.mubr.f32.gmra.mxu0 %v2681
        %v3292 = vpop.f32.mrf.mxu0
        %v3293 = vadd.f32 %v3068, %v3292
        %v3294 = vpop.f32.mrf.mxu0
        %3295 = vmatprep.mubr.f32.mxu0 0.0
        %3296 = vmatmul.mubr.f32.gmra.mxu0 %v2684
        %v3297 = vpop.f32.mrf.mxu0
        %v3298 = vadd.f32 %v3073, %v3297
        %v3299 = vpop.f32.mrf.mxu0
        %3300 = vmatprep.mubr.f32.mxu0 0.0
        %3301 = vmatmul.mubr.f32.gmra.mxu0 %v2687
        %v3302 = vpop.f32.mrf.mxu0
        %v3303 = vadd.f32 %v3078, %v3302
        %v3304 = vpop.f32.mrf.mxu0
        %3305 = vmatprep.mubr.f32.mxu0 0.0
        %3306 = vmatmul.mubr.f32.gmra.mxu0 %v2690
        %v3307 = vpop.f32.mrf.mxu0
        %v3308 = vadd.f32 %v3083, %v3307
        %v3309 = vpop.f32.mrf.mxu0
        %3310 = vmatprep.mubr.f32.mxu0 0.0
        %3311 = vmatmul.mubr.f32.gmra.mxu0 %v2693
        %v3312 = vpop.f32.mrf.mxu0
        %v3313 = vadd.f32 %v3088, %v3312
        %v3314 = vpop.f32.mrf.mxu0
        %3315 = vmatprep.mubr.f32.mxu0 0.0
        %3316 = vmatmul.mubr.f32.gmra.mxu0 %v2696
        %v3317 = vpop.f32.mrf.mxu0
        %v3318 = vadd.f32 %v3093, %v3317
        %v3319 = vpop.f32.mrf.mxu0
        %3320 = vmatprep.mubr.f32.mxu0 0.0
        %3321 = vmatmul.mubr.f32.gmra.mxu0 %v2699
        %v3322 = vpop.f32.mrf.mxu0
        %v3323 = vadd.f32 %v3098, %v3322
        %v3324 = vpop.f32.mrf.mxu0
        %3325 = vmatprep.mubr.f32.mxu0 0.0
        %3326 = vmatmul.mubr.f32.gmra.mxu0 %v2702
        %v3327 = vpop.f32.mrf.mxu0
        %v3328 = vadd.f32 %v3103, %v3327
        %v3329 = vpop.f32.mrf.mxu0
        %3330 = vmatprep.mubr.f32.mxu0 0.0
        %3331 = vmatmul.mubr.f32.gmra.mxu0 %v2705
        %v3332 = vpop.f32.mrf.mxu0
        %v3333 = vadd.f32 %v3108, %v3332
        %v3334 = vpop.f32.mrf.mxu0
        %3335 = vmatprep.mubr.f32.mxu0 0.0
        %3336 = vmatmul.mubr.f32.gmra.mxu0 %v2708
        %v3337 = vpop.f32.mrf.mxu0
        %v3338 = vadd.f32 %v3113, %v3337
        %v3339 = vpop.f32.mrf.mxu0
        %3340 = vmatprep.mubr.f32.mxu0 0.0
        %3341 = vmatmul.mubr.f32.gmra.mxu0 %v2711
        %v3342 = vpop.f32.mrf.mxu0
        %v3343 = vadd.f32 %v3118, %v3342
        %v3344 = vpop.f32.mrf.mxu0
        %3345 = vmatprep.mubr.f32.mxu0 0.0
        %3346 = vmatmul.mubr.f32.gmra.mxu0 %v2714
        %v3347 = vpop.f32.mrf.mxu0
        %v3348 = vadd.f32 %v3123, %v3347
        %v3349 = vpop.f32.mrf.mxu0
        %3350 = vmatprep.mubr.f32.mxu0 0.0
        %3351 = vmatmul.mubr.f32.gmra.mxu0 %v2717
        %v3352 = vpop.f32.mrf.mxu0
        %v3353 = vadd.f32 %v3128, %v3352
        %v3354 = vpop.f32.mrf.mxu0
        %3355 = vmatprep.mubr.f32.mxu0 0.0
        %3356 = vmatmul.mubr.f32.gmra.mxu0 %v2720
        %v3357 = vpop.f32.mrf.mxu0
        %v3358 = vadd.f32 %v3133, %v3357
        %v3359 = vpop.f32.mrf.mxu0
        %3360 = vmatprep.mubr.f32.mxu0 0.0
        %3361 = vmatmul.mubr.f32.gmra.mxu0 %v2723
        %v3362 = vpop.f32.mrf.mxu0
        %v3363 = vadd.f32 %v3138, %v3362
        %v3364 = vpop.f32.mrf.mxu0
        %3365 = vmatprep.mubr.f32.mxu0 0.0
        %3366 = vmatmul.mubr.f32.gmra.mxu0 %v2726
        %v3367 = vpop.f32.mrf.mxu0
        %v3368 = vadd.f32 %v3143, %v3367
        %v3369 = vpop.f32.mrf.mxu0
        %3370 = vmatprep.mubr.f32.mxu0 0.0
        %3371 = vmatmul.mubr.f32.gmra.mxu0 %v2729
        %v3372 = vpop.f32.mrf.mxu0
        %v3373 = vadd.f32 %v3148, %v3372
        %v3374 = vpop.f32.mrf.mxu0
        %3375 = vmatprep.mubr.f32.mxu0 0.0
        %3376 = vmatmul.mubr.f32.gmra.mxu0 %v2732
        %v3377 = vpop.f32.mrf.mxu0
        %v3378 = vadd.f32 %v3153, %v3377
        %v3379 = vpop.f32.mrf.mxu0
        %3380 = vmatprep.mubr.f32.mxu0 0.0
        %3381 = vmatmul.mubr.f32.gmra.mxu0 %v2735
        %v3382 = vpop.f32.mrf.mxu0
        %v3383 = vadd.f32 %v3158, %v3382
        %v3384 = vpop.f32.mrf.mxu0
        %3385 = vmatprep.mubr.f32.mxu0 0.0
        %3386 = vmatmul.mubr.f32.gmra.mxu0 %v2738
        %v3387 = vpop.f32.mrf.mxu0
        %v3388 = vadd.f32 %v3163, %v3387
        %v3389 = vpop.f32.mrf.mxu0
        %3390 = vmatprep.mubr.f32.mxu0 0.0
        %3391 = vmatmul.mubr.f32.gmra.mxu0 %v2741
        %v3392 = vpop.f32.mrf.mxu0
        %v3393 = vadd.f32 %v3168, %v3392
        %v3394 = vpop.f32.mrf.mxu0
        %3395 = vmatprep.mubr.f32.mxu0 0.0
        %3396 = vmatmul.mubr.f32.gmra.mxu0 %v2744
        %v3397 = vpop.f32.mrf.mxu0
        %v3398 = vadd.f32 %v3173, %v3397
        %v3399 = vpop.f32.mrf.mxu0
        %3400 = vmatprep.mubr.f32.mxu0 0.0
        %3401 = vmatmul.mubr.f32.gmra.mxu0 %v2747
        %v3402 = vpop.f32.mrf.mxu0
        %v3403 = vadd.f32 %v3178, %v3402
        %v3404 = vpop.f32.mrf.mxu0
        %3405 = vmatprep.mubr.f32.mxu0 0.0
        %3406 = vmatmul.mubr.f32.gmra.mxu0 %v2750
        %v3407 = vpop.f32.mrf.mxu0
        %v3408 = vadd.f32 %v3183, %v3407
        %v3409 = vpop.f32.mrf.mxu0
        %3410 = vmatprep.mubr.f32.mxu0 0.0
        %3411 = vmatmul.mubr.f32.gmra.mxu0 %v2753
        %v3412 = vpop.f32.mrf.mxu0
        %v3413 = vadd.f32 %v3188, %v3412
        %v3414 = vpop.f32.mrf.mxu0
        %3415 = vmatprep.mubr.f32.mxu0 0.0
        %3416 = vmatmul.mubr.f32.gmra.mxu0 %v2756
        %v3417 = vpop.f32.mrf.mxu0
        %v3418 = vadd.f32 %v3193, %v3417
        %v3419 = vpop.f32.mrf.mxu0
        %3420 = vmatprep.mubr.f32.mxu0 0.0
        %3421 = vmatmul.mubr.f32.gmra.mxu0 %v2759
        %v3422 = vpop.f32.mrf.mxu0
        %v3423 = vadd.f32 %v3198, %v3422
        %v3424 = vpop.f32.mrf.mxu0
        %3425 = vmatprep.mubr.f32.mxu0 0.0
        %3426 = vmatmul.mubr.f32.gmra.mxu0 %v2762
        %v3427 = vpop.f32.mrf.mxu0
        %v3428 = vadd.f32 %v3203, %v3427
        %v3429 = vpop.f32.mrf.mxu0
        %3430 = vmatprep.mubr.f32.mxu0 0.0
        %3431 = vmatmul.mubr.f32.gmra.mxu0 %v2765
        %v3432 = vpop.f32.mrf.mxu0
        %v3433 = vadd.f32 %v3208, %v3432
        %v3434 = vpop.f32.mrf.mxu0
        %3435 = vmatprep.mubr.f32.mxu0 0.0
        %3436 = vmatmul.mubr.f32.gmra.mxu0 %v2768
        %v3437 = vpop.f32.mrf.mxu0
        %v3438 = vadd.f32 %v3213, %v3437
        %v3439 = vpop.f32.mrf.mxu0
        %3440 = vmatprep.mubr.f32.mxu0 0.0
        %3441 = vmatmul.mubr.f32.gmra.mxu0 %v2771
        %v3442 = vpop.f32.mrf.mxu0
        %v3443 = vadd.f32 %v3218, %v3442
        %v3444 = vpop.f32.mrf.mxu0
        %3445 = vmatprep.mubr.f32.mxu0 0.0
        %3446 = vmatmul.mubr.f32.gmra.mxu0 %v2774
        %v3447 = vpop.f32.mrf.mxu0
        %v3448 = vadd.f32 %v3223, %v3447
        %v3449 = vpop.f32.mrf.mxu0
        %3450 = vdwg.mxu0
        %v3451 = vld [vmem:[%s8] sm:$0x1]
        %v3452 = vld [vmem:[%s9] sm:$0x1]
        %v3453 = vsel %vm467, %v3293, 0.0
        %v3454 = vsel %vm467, %v3298, 0.0
        %v3455 = vadd.f32 %v3453, %v3454
        %v3456 = vsel %vm467, %v3303, 0.0
        %v3457 = vadd.f32 %v3455, %v3456
        %v3458 = vsel %vm467, %v3308, 0.0
        %v3459 = vadd.f32 %v3457, %v3458
        %v3460 = vsel %vm467, %v3313, 0.0
        %v3461 = vadd.f32 %v3459, %v3460
        %v3462 = vsel %vm467, %v3318, 0.0
        %v3463 = vadd.f32 %v3461, %v3462
        %v3464 = vsel %vm467, %v3323, 0.0
        %v3465 = vadd.f32 %v3463, %v3464
        %v3466 = vsel %vm467, %v3328, 0.0
        %v3467 = vadd.f32 %v3465, %v3466
        %v3468 = vsel %vm467, %v3333, 0.0
        %v3469 = vadd.f32 %v3467, %v3468
        %v3470 = vsel %vm467, %v3338, 0.0
        %v3471 = vadd.f32 %v3469, %v3470
        %v3472 = vsel %vm467, %v3343, 0.0
        %v3473 = vadd.f32 %v3471, %v3472
        %v3474 = vsel %vm467, %v3348, 0.0
        %v3475 = vadd.f32 %v3473, %v3474
        %v3476 = vsel %vm467, %v3353, 0.0
        %v3477 = vadd.f32 %v3475, %v3476
        %v3478 = vsel %vm467, %v3358, 0.0
        %v3479 = vadd.f32 %v3477, %v3478
        %v3480 = vsel %vm467, %v3363, 0.0
        %v3481 = vadd.f32 %v3479, %v3480
        %v3482 = vsel %vm467, %v3368, 0.0
        %v3483 = vadd.f32 %v3481, %v3482
        %v3484 = vsel %vm467, %v3373, 0.0
        %v3485 = vadd.f32 %v3483, %v3484
        %v3486 = vsel %vm467, %v3378, 0.0
        %v3487 = vadd.f32 %v3485, %v3486
        %v3488 = vsel %vm467, %v3383, 0.0
        %v3489 = vadd.f32 %v3487, %v3488
        %v3490 = vsel %vm467, %v3388, 0.0
        %v3491 = vadd.f32 %v3489, %v3490
        %v3492 = vsel %vm467, %v3393, 0.0
        %v3493 = vadd.f32 %v3491, %v3492
        %v3494 = vsel %vm467, %v3398, 0.0
        %v3495 = vadd.f32 %v3493, %v3494
        %v3496 = vsel %vm467, %v3403, 0.0
        %v3497 = vadd.f32 %v3495, %v3496
        %v3498 = vsel %vm467, %v3408, 0.0
        %v3499 = vadd.f32 %v3497, %v3498
        %v3500 = vsel %vm467, %v3413, 0.0
        %v3501 = vadd.f32 %v3499, %v3500
        %v3502 = vsel %vm467, %v3418, 0.0
        %v3503 = vadd.f32 %v3501, %v3502
        %v3504 = vsel %vm467, %v3423, 0.0
        %v3505 = vadd.f32 %v3503, %v3504
        %v3506 = vsel %vm467, %v3428, 0.0
        %v3507 = vadd.f32 %v3505, %v3506
        %v3508 = vsel %vm467, %v3433, 0.0
        %v3509 = vadd.f32 %v3507, %v3508
        %v3510 = vsel %vm467, %v3438, 0.0
        %v3511 = vadd.f32 %v3509, %v3510
        %v3512 = vsel %vm467, %v3443, 0.0
        %v3513 = vadd.f32 %v3511, %v3512
        %v3514 = vsel %vm467, %v3448, 0.0
        %v3515 = vadd.f32 %v3513, %v3514
        %v3516 = vrot.slane %v3515, 4
        %v3517 = vadd.f32 %v3515, %v3516
        %v3518 = vrot.slane %v3517, 2
        %v3519 = vadd.f32 %v3517, %v3518
        %v3520 = vrot.slane %v3519, 1
        %v3521 = vadd.f32 %v3519, %v3520
        %v3522 = vmul.f32 %v3293, %v3293
        %v3523 = vmul.f32 %v3298, %v3298
        %v3524 = vmul.f32 %v3303, %v3303
        %v3525 = vmul.f32 %v3308, %v3308
        %v3526 = vmul.f32 %v3313, %v3313
        %v3527 = vmul.f32 %v3318, %v3318
        %v3528 = vmul.f32 %v3323, %v3323
        %v3529 = vmul.f32 %v3328, %v3328
        %v3530 = vmul.f32 %v3333, %v3333
        %v3531 = vmul.f32 %v3338, %v3338
        %v3532 = vmul.f32 %v3343, %v3343
        %v3533 = vmul.f32 %v3348, %v3348
        %v3534 = vmul.f32 %v3353, %v3353
        %v3535 = vmul.f32 %v3358, %v3358
        %v3536 = vmul.f32 %v3363, %v3363
        %v3537 = vmul.f32 %v3368, %v3368
        %v3538 = vmul.f32 %v3373, %v3373
        %v3539 = vmul.f32 %v3378, %v3378
        %v3540 = vmul.f32 %v3383, %v3383
        %v3541 = vmul.f32 %v3388, %v3388
        %v3542 = vmul.f32 %v3393, %v3393
        %v3543 = vmul.f32 %v3398, %v3398
        %v3544 = vmul.f32 %v3403, %v3403
        %v3545 = vmul.f32 %v3408, %v3408
        %v3546 = vmul.f32 %v3413, %v3413
        %v3547 = vmul.f32 %v3418, %v3418
        %v3548 = vmul.f32 %v3423, %v3423
        %v3549 = vmul.f32 %v3428, %v3428
        %v3550 = vmul.f32 %v3433, %v3433
        %v3551 = vmul.f32 %v3438, %v3438
        %v3552 = vmul.f32 %v3443, %v3443
        %v3553 = vmul.f32 %v3448, %v3448
        %v3554 = vsel %vm467, %v3522, 0.0
        %v3555 = vsel %vm467, %v3523, 0.0
        %v3556 = vadd.f32 %v3554, %v3555
        %v3557 = vsel %vm467, %v3524, 0.0
        %v3558 = vadd.f32 %v3556, %v3557
        %v3559 = vsel %vm467, %v3525, 0.0
        %v3560 = vadd.f32 %v3558, %v3559
        %v3561 = vsel %vm467, %v3526, 0.0
        %v3562 = vadd.f32 %v3560, %v3561
        %v3563 = vsel %vm467, %v3527, 0.0
        %v3564 = vadd.f32 %v3562, %v3563
        %v3565 = vsel %vm467, %v3528, 0.0
        %v3566 = vadd.f32 %v3564, %v3565
        %v3567 = vsel %vm467, %v3529, 0.0
        %v3568 = vadd.f32 %v3566, %v3567
        %v3569 = vsel %vm467, %v3530, 0.0
        %v3570 = vadd.f32 %v3568, %v3569
        %v3571 = vsel %vm467, %v3531, 0.0
        %v3572 = vadd.f32 %v3570, %v3571
        %v3573 = vsel %vm467, %v3532, 0.0
        %v3574 = vadd.f32 %v3572, %v3573
        %v3575 = vsel %vm467, %v3533, 0.0
        %v3576 = vadd.f32 %v3574, %v3575
        %v3577 = vsel %vm467, %v3534, 0.0
        %v3578 = vadd.f32 %v3576, %v3577
        %v3579 = vsel %vm467, %v3535, 0.0
        %v3580 = vadd.f32 %v3578, %v3579
        %v3581 = vsel %vm467, %v3536, 0.0
        %v3582 = vadd.f32 %v3580, %v3581
        %v3583 = vsel %vm467, %v3537, 0.0
        %v3584 = vadd.f32 %v3582, %v3583
        %v3585 = vsel %vm467, %v3538, 0.0
        %v3586 = vadd.f32 %v3584, %v3585
        %v3587 = vsel %vm467, %v3539, 0.0
        %v3588 = vadd.f32 %v3586, %v3587
        %v3589 = vsel %vm467, %v3540, 0.0
        %v3590 = vadd.f32 %v3588, %v3589
        %v3591 = vsel %vm467, %v3541, 0.0
        %v3592 = vadd.f32 %v3590, %v3591
        %v3593 = vsel %vm467, %v3542, 0.0
        %v3594 = vadd.f32 %v3592, %v3593
        %v3595 = vsel %vm467, %v3543, 0.0
        %v3596 = vadd.f32 %v3594, %v3595
        %v3597 = vsel %vm467, %v3544, 0.0
        %v3598 = vadd.f32 %v3596, %v3597
        %v3599 = vsel %vm467, %v3545, 0.0
        %v3600 = vadd.f32 %v3598, %v3599
        %v3601 = vsel %vm467, %v3546, 0.0
        %v3602 = vadd.f32 %v3600, %v3601
        %v3603 = vsel %vm467, %v3547, 0.0
        %v3604 = vadd.f32 %v3602, %v3603
        %v3605 = vsel %vm467, %v3548, 0.0
        %v3606 = vadd.f32 %v3604, %v3605
        %v3607 = vsel %vm467, %v3549, 0.0
        %v3608 = vadd.f32 %v3606, %v3607
        %v3609 = vsel %vm467, %v3550, 0.0
        %v3610 = vadd.f32 %v3608, %v3609
        %v3611 = vsel %vm467, %v3551, 0.0
        %v3612 = vadd.f32 %v3610, %v3611
        %v3613 = vsel %vm467, %v3552, 0.0
        %v3614 = vadd.f32 %v3612, %v3613
        %v3615 = vsel %vm467, %v3553, 0.0
        %v3616 = vadd.f32 %v3614, %v3615
        %v3617 = vrot.slane %v3616, 4
        %v3618 = vadd.f32 %v3616, %v3617
        %v3619 = vrot.slane %v3618, 2
        %v3620 = vadd.f32 %v3618, %v3619
        %v3621 = vrot.slane %v3620, 1
        %v3622 = vadd.f32 %v3620, %v3621
        %v3624 = vsel %vm467, %v3521, 0
        %3626 = vmatprep.subr.mxu0 0.0
        %3627 = vmatpush1.msra.mxu0 0.0
        %3628 = vmatprep.subr.mxu0 0.0
        %3629 = vmatpush1.msra.mxu0 0.0
        %3630 = vmatprep.subr.mxu0 0.0
        %3631 = vmatpush1.msra.mxu0 0.0
        %3632 = vmatprep.subr.mxu0 0.0
        %3633 = vmatpush1.msra.mxu0 0.0
        %3634 = vmatprep.subr.mxu0 0.0
        %3635 = vmatpush1.msra.mxu0 0.0
        %3636 = vmatprep.subr.mxu0 0.0
        %3637 = vmatpush1.msra.mxu0 0.0
        %3638 = vmatprep.subr.mxu0 0.0
        %3639 = vmatpush1.msra.mxu0 0.0
        %3640 = vmatprep.subr.mxu0 0.0
        %3641 = vmatpush1.msra.mxu0 0.0
        %3642 = vmatprep.subr.mxu0 0.0
        %3643 = vmatpush1.msra.mxu0 %v466
        %3644 = vmatprep.subr.mxu0 0.0
        %3645 = vmatpush1.msra.mxu0 %v465
        %3646 = vmatprep.subr.mxu0 0.0
        %3647 = vmatpush1.msra.mxu0 %v464
        %3648 = vmatprep.subr.mxu0 0.0
        %3649 = vmatpush1.msra.mxu0 %v463
        %3650 = vmatprep.subr.mxu0 0.0
        %3651 = vmatpush1.msra.mxu0 %v462
        %3652 = vmatprep.subr.mxu0 0.0
        %3653 = vmatpush1.msra.mxu0 %v461
        %3654 = vmatprep.subr.mxu0 0.0
        %3655 = vmatpush1.msra.mxu0 %v460
        %3656 = vmatprep.subr.mxu0 0.0
        %3657 = vmatpush1.msra.mxu0 %v459
        %3658 = vmatprep.subr.mxu0 0.0
        %3659 = vmatpush2.msra.mxu0 0.0
        %3660 = vmatprep.subr.mxu0 0.0
        %3661 = vmatpush2.msra.mxu0 0.0
        %3662 = vmatprep.subr.mxu0 0.0
        %3663 = vmatpush2.msra.mxu0 0.0
        %3664 = vmatprep.subr.mxu0 0.0
        %3665 = vmatpush2.msra.mxu0 0.0
        %3666 = vmatprep.subr.mxu0 0.0
        %3667 = vmatpush2.msra.mxu0 0.0
        %3668 = vmatprep.subr.mxu0 0.0
        %3669 = vmatpush2.msra.mxu0 0.0
        %3670 = vmatprep.subr.mxu0 0.0
        %3671 = vmatpush2.msra.mxu0 0.0
        %3672 = vmatprep.subr.mxu0 0.0
        %3673 = vmatpush2.msra.mxu0 0.0
        %3674 = vmatprep.subr.mxu0 0.0
        %3675 = vmatpush2.msra.mxu0 0.0
        %3676 = vmatprep.subr.mxu0 0.0
        %3677 = vmatpush2.msra.mxu0 0.0
        %3678 = vmatprep.subr.mxu0 0.0
        %3679 = vmatpush2.msra.mxu0 0.0
        %3680 = vmatprep.subr.mxu0 0.0
        %3681 = vmatpush2.msra.mxu0 0.0
        %3682 = vmatprep.subr.mxu0 0.0
        %3683 = vmatpush2.msra.mxu0 0.0
        %3684 = vmatprep.subr.mxu0 0.0
        %3685 = vmatpush2.msra.mxu0 0.0
        %3686 = vmatprep.subr.mxu0 0.0
        %3687 = vmatpush2.msra.mxu0 0.0
        %3688 = vmatprep.subr.mxu0 0.0
        %3689 = vmatpush2.msra.mxu0 0.0
        %3690 = vmatprep.mubr.f32.mxu0 0.0
        %3691 = vmatmul.mubr.f32.gmra.mxu0 %v3624
        %v3692 = vpop.f32.mrf.mxu0
        %v3693 = vadd.f32 0.0, %v3692
        %v3694 = vpop.f32.mrf.mxu0
        %3695 = vdwg.mxu0
        %v3696 = vmul.f32 %v3693, 0.00024414063
        %v3698 = vsel %vm467, %v3622, 0
        %3700 = vmatprep.subr.mxu0 0.0
        %3701 = vmatpush1.msra.mxu0 0.0
        %3702 = vmatprep.subr.mxu0 0.0
        %3703 = vmatpush1.msra.mxu0 0.0
        %3704 = vmatprep.subr.mxu0 0.0
        %3705 = vmatpush1.msra.mxu0 0.0
        %3706 = vmatprep.subr.mxu0 0.0
        %3707 = vmatpush1.msra.mxu0 0.0
        %3708 = vmatprep.subr.mxu0 0.0
        %3709 = vmatpush1.msra.mxu0 0.0
        %3710 = vmatprep.subr.mxu0 0.0
        %3711 = vmatpush1.msra.mxu0 0.0
        %3712 = vmatprep.subr.mxu0 0.0
        %3713 = vmatpush1.msra.mxu0 0.0
        %3714 = vmatprep.subr.mxu0 0.0
        %3715 = vmatpush1.msra.mxu0 0.0
        %3716 = vmatprep.subr.mxu0 0.0
        %3717 = vmatpush1.msra.mxu0 %v466
        %3718 = vmatprep.subr.mxu0 0.0
        %3719 = vmatpush1.msra.mxu0 %v465
        %3720 = vmatprep.subr.mxu0 0.0
        %3721 = vmatpush1.msra.mxu0 %v464
        %3722 = vmatprep.subr.mxu0 0.0
        %3723 = vmatpush1.msra.mxu0 %v463
        %3724 = vmatprep.subr.mxu0 0.0
        %3725 = vmatpush1.msra.mxu0 %v462
        %3726 = vmatprep.subr.mxu0 0.0
        %3727 = vmatpush1.msra.mxu0 %v461
        %3728 = vmatprep.subr.mxu0 0.0
        %3729 = vmatpush1.msra.mxu0 %v460
        %3730 = vmatprep.subr.mxu0 0.0
        %3731 = vmatpush1.msra.mxu0 %v459
        %3732 = vmatprep.subr.mxu0 0.0
        %3733 = vmatpush2.msra.mxu0 0.0
        %3734 = vmatprep.subr.mxu0 0.0
        %3735 = vmatpush2.msra.mxu0 0.0
        %3736 = vmatprep.subr.mxu0 0.0
        %3737 = vmatpush2.msra.mxu0 0.0
        %3738 = vmatprep.subr.mxu0 0.0
        %3739 = vmatpush2.msra.mxu0 0.0
        %3740 = vmatprep.subr.mxu0 0.0
        %3741 = vmatpush2.msra.mxu0 0.0
        %3742 = vmatprep.subr.mxu0 0.0
        %3743 = vmatpush2.msra.mxu0 0.0
        %3744 = vmatprep.subr.mxu0 0.0
        %3745 = vmatpush2.msra.mxu0 0.0
        %3746 = vmatprep.subr.mxu0 0.0
        %3747 = vmatpush2.msra.mxu0 0.0
        %3748 = vmatprep.subr.mxu0 0.0
        %3749 = vmatpush2.msra.mxu0 0.0
        %3750 = vmatprep.subr.mxu0 0.0
        %3751 = vmatpush2.msra.mxu0 0.0
        %3752 = vmatprep.subr.mxu0 0.0
        %3753 = vmatpush2.msra.mxu0 0.0
        %3754 = vmatprep.subr.mxu0 0.0
        %3755 = vmatpush2.msra.mxu0 0.0
        %3756 = vmatprep.subr.mxu0 0.0
        %3757 = vmatpush2.msra.mxu0 0.0
        %3758 = vmatprep.subr.mxu0 0.0
        %3759 = vmatpush2.msra.mxu0 0.0
        %3760 = vmatprep.subr.mxu0 0.0
        %3761 = vmatpush2.msra.mxu0 0.0
        %3762 = vmatprep.subr.mxu0 0.0
        %3763 = vmatpush2.msra.mxu0 0.0
        %3764 = vmatprep.mubr.f32.mxu0 0.0
        %3765 = vmatmul.mubr.f32.gmra.mxu0 %v3698
        %v3766 = vpop.f32.mrf.mxu0
        %v3767 = vadd.f32 0.0, %v3766
        %v3768 = vpop.f32.mrf.mxu0
        %3769 = vdwg.mxu0
        %v3770 = vmul.f32 %v3767, 0.00024414063
        %v3771 = vmul.f32 %v3696, %v3696
        %v3772 = vsub.f32 %v3770, %v3771
        %v3773 = vmax.f32 %v3772, 0.0
        %v3774 = vadd.f32 %v3773, 1e-05
        %v3775 = vrsqrt.pop %v3774
        %v3776 = vmul.f32 %v3451, %v3775
        %v3777 = vmul.f32 %v3696, %v3776
        %v3778 = vsub.f32 %v3452, %v3777
        %v3780 = vlaneseq
        %v3781 = vshrl.u32 %v3780, 7
        %v3782 = vsub.s32 0, %v3781
        %v3783 = vrot.slane %v3776, %v3782
        %v3785 = vmul.f32 %v3293, %v3783
        %v3786 = vmul.f32 %v3298, %v3783
        %v3787 = vmul.f32 %v3303, %v3783
        %v3788 = vmul.f32 %v3308, %v3783
        %v3789 = vmul.f32 %v3313, %v3783
        %v3790 = vmul.f32 %v3318, %v3783
        %v3791 = vmul.f32 %v3323, %v3783
        %v3792 = vmul.f32 %v3328, %v3783
        %v3793 = vmul.f32 %v3333, %v3783
        %v3794 = vmul.f32 %v3338, %v3783
        %v3795 = vmul.f32 %v3343, %v3783
        %v3796 = vmul.f32 %v3348, %v3783
        %v3797 = vmul.f32 %v3353, %v3783
        %v3798 = vmul.f32 %v3358, %v3783
        %v3799 = vmul.f32 %v3363, %v3783
        %v3800 = vmul.f32 %v3368, %v3783
        %v3801 = vmul.f32 %v3373, %v3783
        %v3802 = vmul.f32 %v3378, %v3783
        %v3803 = vmul.f32 %v3383, %v3783
        %v3804 = vmul.f32 %v3388, %v3783
        %v3805 = vmul.f32 %v3393, %v3783
        %v3806 = vmul.f32 %v3398, %v3783
        %v3807 = vmul.f32 %v3403, %v3783
        %v3808 = vmul.f32 %v3408, %v3783
        %v3809 = vmul.f32 %v3413, %v3783
        %v3810 = vmul.f32 %v3418, %v3783
        %v3811 = vmul.f32 %v3423, %v3783
        %v3812 = vmul.f32 %v3428, %v3783
        %v3813 = vmul.f32 %v3433, %v3783
        %v3814 = vmul.f32 %v3438, %v3783
        %v3815 = vmul.f32 %v3443, %v3783
        %v3816 = vmul.f32 %v3448, %v3783
        %v3818 = vlaneseq
        %v3819 = vshrl.u32 %v3818, 7
        %v3820 = vsub.s32 0, %v3819
        %v3821 = vrot.slane %v3778, %v3820
        %v3823 = vadd.f32 %v3785, %v3821
        %v3824 = vadd.f32 %v3786, %v3821
        %v3825 = vadd.f32 %v3787, %v3821
        %v3826 = vadd.f32 %v3788, %v3821
        %v3827 = vadd.f32 %v3789, %v3821
        %v3828 = vadd.f32 %v3790, %v3821
        %v3829 = vadd.f32 %v3791, %v3821
        %v3830 = vadd.f32 %v3792, %v3821
        %v3831 = vadd.f32 %v3793, %v3821
        %v3832 = vadd.f32 %v3794, %v3821
        %v3833 = vadd.f32 %v3795, %v3821
        %v3834 = vadd.f32 %v3796, %v3821
        %v3835 = vadd.f32 %v3797, %v3821
        %v3836 = vadd.f32 %v3798, %v3821
        %v3837 = vadd.f32 %v3799, %v3821
        %v3838 = vadd.f32 %v3800, %v3821
        %v3839 = vadd.f32 %v3801, %v3821
        %v3840 = vadd.f32 %v3802, %v3821
        %v3841 = vadd.f32 %v3803, %v3821
        %v3842 = vadd.f32 %v3804, %v3821
        %v3843 = vadd.f32 %v3805, %v3821
        %v3844 = vadd.f32 %v3806, %v3821
        %v3845 = vadd.f32 %v3807, %v3821
        %v3846 = vadd.f32 %v3808, %v3821
        %v3847 = vadd.f32 %v3809, %v3821
        %v3848 = vadd.f32 %v3810, %v3821
        %v3849 = vadd.f32 %v3811, %v3821
        %v3850 = vadd.f32 %v3812, %v3821
        %v3851 = vadd.f32 %v3813, %v3821
        %v3852 = vadd.f32 %v3814, %v3821
        %v3853 = vadd.f32 %v3815, %v3821
        %v3854 = vadd.f32 %v3816, %v3821
        %v3855 = vmax.f32 %v3823, 0.0
        %v3856 = vmax.f32 %v3824, 0.0
        %v3857 = vmax.f32 %v3825, 0.0
        %v3858 = vmax.f32 %v3826, 0.0
        %v3859 = vmax.f32 %v3827, 0.0
        %v3860 = vmax.f32 %v3828, 0.0
        %v3861 = vmax.f32 %v3829, 0.0
        %v3862 = vmax.f32 %v3830, 0.0
        %v3863 = vmax.f32 %v3831, 0.0
        %v3864 = vmax.f32 %v3832, 0.0
        %v3865 = vmax.f32 %v3833, 0.0
        %v3866 = vmax.f32 %v3834, 0.0
        %v3867 = vmax.f32 %v3835, 0.0
        %v3868 = vmax.f32 %v3836, 0.0
        %v3869 = vmax.f32 %v3837, 0.0
        %v3870 = vmax.f32 %v3838, 0.0
        %v3871 = vmax.f32 %v3839, 0.0
        %v3872 = vmax.f32 %v3840, 0.0
        %v3873 = vmax.f32 %v3841, 0.0
        %v3874 = vmax.f32 %v3842, 0.0
        %v3875 = vmax.f32 %v3843, 0.0
        %v3876 = vmax.f32 %v3844, 0.0
        %v3877 = vmax.f32 %v3845, 0.0
        %v3878 = vmax.f32 %v3846, 0.0
        %v3879 = vmax.f32 %v3847, 0.0
        %v3880 = vmax.f32 %v3848, 0.0
        %v3881 = vmax.f32 %v3849, 0.0
        %v3882 = vmax.f32 %v3850, 0.0
        %v3883 = vmax.f32 %v3851, 0.0
        %v3884 = vmax.f32 %v3852, 0.0
        %v3885 = vmax.f32 %v3853, 0.0
        %v3886 = vmax.f32 %v3854, 0.0
        %3887 = vst.msk [vmem:[%s1319 + $0x1] sm:$0xff] %vm467, %v3855
        %3888 = vst.msk [vmem:[%s1319 + $0x9] sm:$0xff] %vm467, %v3856
        %3889 = vst.msk [vmem:[%s1319 + $0x19] sm:$0xff] %vm467, %v3857
        %3890 = vst.msk [vmem:[%s1319 + $0x21] sm:$0xff] %vm467, %v3858
        %3891 = vst.msk [vmem:[%s1319 + $0x31] sm:$0xff] %vm467, %v3859
        %3892 = vst.msk [vmem:[%s1319 + $0x39] sm:$0xff] %vm467, %v3860
        %3893 = vst.msk [vmem:[%s1319 + $0x49] sm:$0xff] %vm467, %v3861
        %3894 = vst.msk [vmem:[%s1319 + $0x51] sm:$0xff] %vm467, %v3862
        %3895 = vst.msk [vmem:[%s1319 + $0x61] sm:$0xff] %vm467, %v3863
        %3896 = vst.msk [vmem:[%s1319 + $0x69] sm:$0xff] %vm467, %v3864
        %3897 = vst.msk [vmem:[%s1319 + $0x79] sm:$0xff] %vm467, %v3865
        %3898 = vst.msk [vmem:[%s1319 + $0x81] sm:$0xff] %vm467, %v3866
        %3899 = vst.msk [vmem:[%s1319 + $0x91] sm:$0xff] %vm467, %v3867
        %3900 = vst.msk [vmem:[%s1319 + $0x99] sm:$0xff] %vm467, %v3868
        %3901 = vst.msk [vmem:[%s1319 + $0xa9] sm:$0xff] %vm467, %v3869
        %3902 = vst.msk [vmem:[%s1319 + $0xb1] sm:$0xff] %vm467, %v3870
        %3903 = vst.msk [vmem:[%s1319 + $0xc1] sm:$0xff] %vm467, %v3871
        %3904 = vst.msk [vmem:[%s1319 + $0xc9] sm:$0xff] %vm467, %v3872
        %3905 = vst.msk [vmem:[%s1319 + $0xd9] sm:$0xff] %vm467, %v3873
        %3906 = vst.msk [vmem:[%s1319 + $0xe1] sm:$0xff] %vm467, %v3874
        %3907 = vst.msk [vmem:[%s1319 + $0xf1] sm:$0xff] %vm467, %v3875
        %3908 = vst.msk [vmem:[%s1319 + $0xf9] sm:$0xff] %vm467, %v3876
        %3909 = vst.msk [vmem:[%s1319 + $0x109] sm:$0xff] %vm467, %v3877
        %3910 = vst.msk [vmem:[%s1319 + $0x111] sm:$0xff] %vm467, %v3878
        %3911 = vst.msk [vmem:[%s1319 + $0x121] sm:$0xff] %vm467, %v3879
        %3912 = vst.msk [vmem:[%s1319 + $0x129] sm:$0xff] %vm467, %v3880
        %3913 = vst.msk [vmem:[%s1319 + $0x139] sm:$0xff] %vm467, %v3881
        %3914 = vst.msk [vmem:[%s1319 + $0x141] sm:$0xff] %vm467, %v3882
        %3915 = vst.msk [vmem:[%s1319 + $0x151] sm:$0xff] %vm467, %v3883
        %3916 = vst.msk [vmem:[%s1319 + $0x159] sm:$0xff] %vm467, %v3884
        %3917 = vst.msk [vmem:[%s1319 + $0x169] sm:$0xff] %vm467, %v3885
        %3918 = vst.msk [vmem:[%s1319 + $0x171] sm:$0xff] %vm467, %v3886
        %v3919 = vld [vmem:[#allocation2] sm:$0xff]
        %v3920 = vld [vmem:[#allocation2 + $0x8] sm:$0xff]
        %v3921 = vld [vmem:[#allocation2 + $0x18] sm:$0xff]
        %v3922 = vld [vmem:[#allocation2 + $0x20] sm:$0xff]
        %v3923 = vld [vmem:[#allocation2 + $0x30] sm:$0xff]
        %v3924 = vld [vmem:[#allocation2 + $0x38] sm:$0xff]
        %v3925 = vld [vmem:[#allocation2 + $0x48] sm:$0xff]
        %v3926 = vld [vmem:[#allocation2 + $0x50] sm:$0xff]
        %v3927 = vld [vmem:[#allocation2 + $0x60] sm:$0xff]
        %v3928 = vld [vmem:[#allocation2 + $0x68] sm:$0xff]
        %v3929 = vld [vmem:[#allocation2 + $0x78] sm:$0xff]
        %v3930 = vld [vmem:[#allocation2 + $0x80] sm:$0xff]
        %v3931 = vld [vmem:[#allocation2 + $0x90] sm:$0xff]
        %v3932 = vld [vmem:[#allocation2 + $0x98] sm:$0xff]
        %v3933 = vld [vmem:[#allocation2 + $0xa8] sm:$0xff]
        %v3934 = vld [vmem:[#allocation2 + $0xb0] sm:$0xff]
        %v3935 = vld [vmem:[#allocation2 + $0xc0] sm:$0xff]
        %v3936 = vld [vmem:[#allocation2 + $0xc8] sm:$0xff]
        %v3937 = vld [vmem:[#allocation2 + $0xd8] sm:$0xff]
        %v3938 = vld [vmem:[#allocation2 + $0xe0] sm:$0xff]
        %v3939 = vld [vmem:[#allocation2 + $0xf0] sm:$0xff]
        %v3940 = vld [vmem:[#allocation2 + $0xf8] sm:$0xff]
        %v3941 = vld [vmem:[#allocation2 + $0x108] sm:$0xff]
        %v3942 = vld [vmem:[#allocation2 + $0x110] sm:$0xff]
        %v3943 = vld [vmem:[#allocation2 + $0x120] sm:$0xff]
        %v3944 = vld [vmem:[#allocation2 + $0x128] sm:$0xff]
        %v3945 = vld [vmem:[#allocation2 + $0x138] sm:$0xff]
        %v3946 = vld [vmem:[#allocation2 + $0x140] sm:$0xff]
        %v3947 = vld [vmem:[#allocation2 + $0x150] sm:$0xff]
        %v3948 = vld [vmem:[#allocation2 + $0x158] sm:$0xff]
        %v3949 = vld [vmem:[#allocation2 + $0x168] sm:$0xff]
        %v3950 = vld [vmem:[#allocation2 + $0x170] sm:$0xff]
        %v3951 = vld [vmem:[#allocation2 + $0x1] sm:$0xff]
        %v3952 = vld [vmem:[#allocation2 + $0x9] sm:$0xff]
        %v3953 = vld [vmem:[#allocation2 + $0x19] sm:$0xff]
        %v3954 = vld [vmem:[#allocation2 + $0x21] sm:$0xff]
        %v3955 = vld [vmem:[#allocation2 + $0x31] sm:$0xff]
        %v3956 = vld [vmem:[#allocation2 + $0x39] sm:$0xff]
        %v3957 = vld [vmem:[#allocation2 + $0x49] sm:$0xff]
        %v3958 = vld [vmem:[#allocation2 + $0x51] sm:$0xff]
        %v3959 = vld [vmem:[#allocation2 + $0x61] sm:$0xff]
        %v3960 = vld [vmem:[#allocation2 + $0x69] sm:$0xff]
        %v3961 = vld [vmem:[#allocation2 + $0x79] sm:$0xff]
        %v3962 = vld [vmem:[#allocation2 + $0x81] sm:$0xff]
        %v3963 = vld [vmem:[#allocation2 + $0x91] sm:$0xff]
        %v3964 = vld [vmem:[#allocation2 + $0x99] sm:$0xff]
        %v3965 = vld [vmem:[#allocation2 + $0xa9] sm:$0xff]
        %v3966 = vld [vmem:[#allocation2 + $0xb1] sm:$0xff]
        %v3967 = vld [vmem:[#allocation2 + $0xc1] sm:$0xff]
        %v3968 = vld [vmem:[#allocation2 + $0xc9] sm:$0xff]
        %v3969 = vld [vmem:[#allocation2 + $0xd9] sm:$0xff]
        %v3970 = vld [vmem:[#allocation2 + $0xe1] sm:$0xff]
        %v3971 = vld [vmem:[#allocation2 + $0xf1] sm:$0xff]
        %v3972 = vld [vmem:[#allocation2 + $0xf9] sm:$0xff]
        %v3973 = vld [vmem:[#allocation2 + $0x109] sm:$0xff]
        %v3974 = vld [vmem:[#allocation2 + $0x111] sm:$0xff]
        %v3975 = vld [vmem:[#allocation2 + $0x121] sm:$0xff]
        %v3976 = vld [vmem:[#allocation2 + $0x129] sm:$0xff]
        %v3977 = vld [vmem:[#allocation2 + $0x139] sm:$0xff]
        %v3978 = vld [vmem:[#allocation2 + $0x141] sm:$0xff]
        %v3979 = vld [vmem:[#allocation2 + $0x151] sm:$0xff]
        %v3980 = vld [vmem:[#allocation2 + $0x159] sm:$0xff]
        %v3981 = vld [vmem:[#allocation2 + $0x169] sm:$0xff]
        %v3982 = vld [vmem:[#allocation2 + $0x171] sm:$0xff]
        %4015 = vrot.lane.b32.xlu0 %v3951, 64
        %v4016 = vpop.permute.xlu0 %4015
        %4017 = vrot.lane.b32.xlu0 %v3952, 64
        %v4018 = vpop.permute.xlu0 %4017
        %4019 = vrot.lane.b32.xlu0 %v3953, 64
        %v4020 = vpop.permute.xlu0 %4019
        %4021 = vrot.lane.b32.xlu0 %v3954, 64
        %v4022 = vpop.permute.xlu0 %4021
        %4023 = vrot.lane.b32.xlu0 %v3955, 64
        %v4024 = vpop.permute.xlu0 %4023
        %4025 = vrot.lane.b32.xlu0 %v3956, 64
        %v4026 = vpop.permute.xlu0 %4025
        %4027 = vrot.lane.b32.xlu0 %v3957, 64
        %v4028 = vpop.permute.xlu0 %4027
        %4029 = vrot.lane.b32.xlu0 %v3958, 64
        %v4030 = vpop.permute.xlu0 %4029
        %4031 = vrot.lane.b32.xlu0 %v3959, 64
        %v4032 = vpop.permute.xlu0 %4031
        %4033 = vrot.lane.b32.xlu0 %v3960, 64
        %v4034 = vpop.permute.xlu0 %4033
        %4035 = vrot.lane.b32.xlu0 %v3961, 64
        %v4036 = vpop.permute.xlu0 %4035
        %4037 = vrot.lane.b32.xlu0 %v3962, 64
        %v4038 = vpop.permute.xlu0 %4037
        %4039 = vrot.lane.b32.xlu0 %v3963, 64
        %v4040 = vpop.permute.xlu0 %4039
        %4041 = vrot.lane.b32.xlu0 %v3964, 64
        %v4042 = vpop.permute.xlu0 %4041
        %4043 = vrot.lane.b32.xlu0 %v3965, 64
        %v4044 = vpop.permute.xlu0 %4043
        %4045 = vrot.lane.b32.xlu0 %v3966, 64
        %v4046 = vpop.permute.xlu0 %4045
        %4047 = vrot.lane.b32.xlu0 %v3967, 64
        %v4048 = vpop.permute.xlu0 %4047
        %4049 = vrot.lane.b32.xlu0 %v3968, 64
        %v4050 = vpop.permute.xlu0 %4049
        %4051 = vrot.lane.b32.xlu0 %v3969, 64
        %v4052 = vpop.permute.xlu0 %4051
        %4053 = vrot.lane.b32.xlu0 %v3970, 64
        %v4054 = vpop.permute.xlu0 %4053
        %4055 = vrot.lane.b32.xlu0 %v3971, 64
        %v4056 = vpop.permute.xlu0 %4055
        %4057 = vrot.lane.b32.xlu0 %v3972, 64
        %v4058 = vpop.permute.xlu0 %4057
        %4059 = vrot.lane.b32.xlu0 %v3973, 64
        %v4060 = vpop.permute.xlu0 %4059
        %4061 = vrot.lane.b32.xlu0 %v3974, 64
        %v4062 = vpop.permute.xlu0 %4061
        %4063 = vrot.lane.b32.xlu0 %v3975, 64
        %v4064 = vpop.permute.xlu0 %4063
        %4065 = vrot.lane.b32.xlu0 %v3976, 64
        %v4066 = vpop.permute.xlu0 %4065
        %4067 = vrot.lane.b32.xlu0 %v3977, 64
        %v4068 = vpop.permute.xlu0 %4067
        %4069 = vrot.lane.b32.xlu0 %v3978, 64
        %v4070 = vpop.permute.xlu0 %4069
        %4071 = vrot.lane.b32.xlu0 %v3979, 64
        %v4072 = vpop.permute.xlu0 %4071
        %4073 = vrot.lane.b32.xlu0 %v3980, 64
        %v4074 = vpop.permute.xlu0 %4073
        %4075 = vrot.lane.b32.xlu0 %v3981, 64
        %v4076 = vpop.permute.xlu0 %4075
        %4077 = vrot.lane.b32.xlu0 %v3982, 64
        %v4078 = vpop.permute.xlu0 %4077
        %v4111 = vsel %vm467, %v3919, %v4016
        %v4112 = vsel %vm467, %v3920, %v4018
        %v4113 = vsel %vm467, %v3921, %v4020
        %v4114 = vsel %vm467, %v3922, %v4022
        %v4115 = vsel %vm467, %v3923, %v4024
        %v4116 = vsel %vm467, %v3924, %v4026
        %v4117 = vsel %vm467, %v3925, %v4028
        %v4118 = vsel %vm467, %v3926, %v4030
        %v4119 = vsel %vm467, %v3927, %v4032
        %v4120 = vsel %vm467, %v3928, %v4034
        %v4121 = vsel %vm467, %v3929, %v4036
        %v4122 = vsel %vm467, %v3930, %v4038
        %v4123 = vsel %vm467, %v3931, %v4040
        %v4124 = vsel %vm467, %v3932, %v4042
        %v4125 = vsel %vm467, %v3933, %v4044
        %v4126 = vsel %vm467, %v3934, %v4046
        %v4127 = vsel %vm467, %v3935, %v4048
        %v4128 = vsel %vm467, %v3936, %v4050
        %v4129 = vsel %vm467, %v3937, %v4052
        %v4130 = vsel %vm467, %v3938, %v4054
        %v4131 = vsel %vm467, %v3939, %v4056
        %v4132 = vsel %vm467, %v3940, %v4058
        %v4133 = vsel %vm467, %v3941, %v4060
        %v4134 = vsel %vm467, %v3942, %v4062
        %v4135 = vsel %vm467, %v3943, %v4064
        %v4136 = vsel %vm467, %v3944, %v4066
        %v4137 = vsel %vm467, %v3945, %v4068
        %v4138 = vsel %vm467, %v3946, %v4070
        %v4139 = vsel %vm467, %v3947, %v4072
        %v4140 = vsel %vm467, %v3948, %v4074
        %v4141 = vsel %vm467, %v3949, %v4076
        %v4142 = vsel %vm467, %v3950, %v4078
        %4143 = vst [vmem:[#allocation3] sm:$0xff] %v4111
        %4144 = vst [vmem:[#allocation3 + $0x28] sm:$0xff] %v4112
        %4145 = vst [vmem:[#allocation3 + $0x50] sm:$0xff] %v4113
        %4146 = vst [vmem:[#allocation3 + $0x78] sm:$0xff] %v4114
        %4147 = vst [vmem:[#allocation3 + $0xa0] sm:$0xff] %v4115
        %4148 = vst [vmem:[#allocation3 + $0xc8] sm:$0xff] %v4116
        %4149 = vst [vmem:[#allocation3 + $0xf0] sm:$0xff] %v4117
        %4150 = vst [vmem:[#allocation3 + $0x118] sm:$0xff] %v4118
        %4151 = vst [vmem:[#allocation3 + $0x140] sm:$0xff] %v4119
        %4152 = vst [vmem:[#allocation3 + $0x168] sm:$0xff] %v4120
        %4153 = vst [vmem:[#allocation3 + $0x190] sm:$0xff] %v4121
        %4154 = vst [vmem:[#allocation3 + $0x1b8] sm:$0xff] %v4122
        %4155 = vst [vmem:[#allocation3 + $0x1e0] sm:$0xff] %v4123
        %4156 = vst [vmem:[#allocation3 + $0x208] sm:$0xff] %v4124
        %4157 = vst [vmem:[#allocation3 + $0x230] sm:$0xff] %v4125
        %4158 = vst [vmem:[#allocation3 + $0x258] sm:$0xff] %v4126
        %4159 = vst [vmem:[#allocation3 + $0x280] sm:$0xff] %v4127
        %4160 = vst [vmem:[#allocation3 + $0x2a8] sm:$0xff] %v4128
        %4161 = vst [vmem:[#allocation3 + $0x2d0] sm:$0xff] %v4129
        %4162 = vst [vmem:[#allocation3 + $0x2f8] sm:$0xff] %v4130
        %4163 = vst [vmem:[#allocation3 + $0x320] sm:$0xff] %v4131
        %4164 = vst [vmem:[#allocation3 + $0x348] sm:$0xff] %v4132
        %4165 = vst [vmem:[#allocation3 + $0x370] sm:$0xff] %v4133
        %4166 = vst [vmem:[#allocation3 + $0x398] sm:$0xff] %v4134
        %4167 = vst [vmem:[#allocation3 + $0x3c0] sm:$0xff] %v4135
        %4168 = vst [vmem:[#allocation3 + $0x3e8] sm:$0xff] %v4136
        %4169 = vst [vmem:[#allocation3 + $0x410] sm:$0xff] %v4137
        %4170 = vst [vmem:[#allocation3 + $0x438] sm:$0xff] %v4138
        %4171 = vst [vmem:[#allocation3 + $0x460] sm:$0xff] %v4139
        %4172 = vst [vmem:[#allocation3 + $0x488] sm:$0xff] %v4140
        %4173 = vst [vmem:[#allocation3 + $0x4b0] sm:$0xff] %v4141
        %4174 = vst [vmem:[#allocation3 + $0x4d8] sm:$0xff] %v4142
        %v4175 = vld [vmem:[#allocation2 + $0x2] sm:$0xff]
        %v4176 = vld [vmem:[#allocation2 + $0xa] sm:$0xff]
        %v4177 = vld [vmem:[#allocation2 + $0x1a] sm:$0xff]
        %v4178 = vld [vmem:[#allocation2 + $0x22] sm:$0xff]
        %v4179 = vld [vmem:[#allocation2 + $0x32] sm:$0xff]
        %v4180 = vld [vmem:[#allocation2 + $0x3a] sm:$0xff]
        %v4181 = vld [vmem:[#allocation2 + $0x4a] sm:$0xff]
        %v4182 = vld [vmem:[#allocation2 + $0x52] sm:$0xff]
        %v4183 = vld [vmem:[#allocation2 + $0x62] sm:$0xff]
        %v4184 = vld [vmem:[#allocation2 + $0x6a] sm:$0xff]
        %v4185 = vld [vmem:[#allocation2 + $0x7a] sm:$0xff]
        %v4186 = vld [vmem:[#allocation2 + $0x82] sm:$0xff]
        %v4187 = vld [vmem:[#allocation2 + $0x92] sm:$0xff]
        %v4188 = vld [vmem:[#allocation2 + $0x9a] sm:$0xff]
        %v4189 = vld [vmem:[#allocation2 + $0xaa] sm:$0xff]
        %v4190 = vld [vmem:[#allocation2 + $0xb2] sm:$0xff]
        %v4191 = vld [vmem:[#allocation2 + $0xc2] sm:$0xff]
        %v4192 = vld [vmem:[#allocation2 + $0xca] sm:$0xff]
        %v4193 = vld [vmem:[#allocation2 + $0xda] sm:$0xff]
        %v4194 = vld [vmem:[#allocation2 + $0xe2] sm:$0xff]
        %v4195 = vld [vmem:[#allocation2 + $0xf2] sm:$0xff]
        %v4196 = vld [vmem:[#allocation2 + $0xfa] sm:$0xff]
        %v4197 = vld [vmem:[#allocation2 + $0x10a] sm:$0xff]
        %v4198 = vld [vmem:[#allocation2 + $0x112] sm:$0xff]
        %v4199 = vld [vmem:[#allocation2 + $0x122] sm:$0xff]
        %v4200 = vld [vmem:[#allocation2 + $0x12a] sm:$0xff]
        %v4201 = vld [vmem:[#allocation2 + $0x13a] sm:$0xff]
        %v4202 = vld [vmem:[#allocation2 + $0x142] sm:$0xff]
        %v4203 = vld [vmem:[#allocation2 + $0x152] sm:$0xff]
        %v4204 = vld [vmem:[#allocation2 + $0x15a] sm:$0xff]
        %v4205 = vld [vmem:[#allocation2 + $0x16a] sm:$0xff]
        %v4206 = vld [vmem:[#allocation2 + $0x172] sm:$0xff]
        %v4207 = vld [vmem:[%s1319] sm:$0xff]
        %v4208 = vld [vmem:[%s1319 + $0x8] sm:$0xff]
        %v4209 = vld [vmem:[%s1319 + $0x18] sm:$0xff]
        %v4210 = vld [vmem:[%s1319 + $0x20] sm:$0xff]
        %v4211 = vld [vmem:[%s1319 + $0x30] sm:$0xff]
        %v4212 = vld [vmem:[%s1319 + $0x38] sm:$0xff]
        %v4213 = vld [vmem:[%s1319 + $0x48] sm:$0xff]
        %v4214 = vld [vmem:[%s1319 + $0x50] sm:$0xff]
        %v4215 = vld [vmem:[%s1319 + $0x60] sm:$0xff]
        %v4216 = vld [vmem:[%s1319 + $0x68] sm:$0xff]
        %v4217 = vld [vmem:[%s1319 + $0x78] sm:$0xff]
        %v4218 = vld [vmem:[%s1319 + $0x80] sm:$0xff]
        %v4219 = vld [vmem:[%s1319 + $0x90] sm:$0xff]
        %v4220 = vld [vmem:[%s1319 + $0x98] sm:$0xff]
        %v4221 = vld [vmem:[%s1319 + $0xa8] sm:$0xff]
        %v4222 = vld [vmem:[%s1319 + $0xb0] sm:$0xff]
        %v4223 = vld [vmem:[%s1319 + $0xc0] sm:$0xff]
        %v4224 = vld [vmem:[%s1319 + $0xc8] sm:$0xff]
        %v4225 = vld [vmem:[%s1319 + $0xd8] sm:$0xff]
        %v4226 = vld [vmem:[%s1319 + $0xe0] sm:$0xff]
        %v4227 = vld [vmem:[%s1319 + $0xf0] sm:$0xff]
        %v4228 = vld [vmem:[%s1319 + $0xf8] sm:$0xff]
        %v4229 = vld [vmem:[%s1319 + $0x108] sm:$0xff]
        %v4230 = vld [vmem:[%s1319 + $0x110] sm:$0xff]
        %v4231 = vld [vmem:[%s1319 + $0x120] sm:$0xff]
        %v4232 = vld [vmem:[%s1319 + $0x128] sm:$0xff]
        %v4233 = vld [vmem:[%s1319 + $0x138] sm:$0xff]
        %v4234 = vld [vmem:[%s1319 + $0x140] sm:$0xff]
        %v4235 = vld [vmem:[%s1319 + $0x150] sm:$0xff]
        %v4236 = vld [vmem:[%s1319 + $0x158] sm:$0xff]
        %v4237 = vld [vmem:[%s1319 + $0x168] sm:$0xff]
        %v4238 = vld [vmem:[%s1319 + $0x170] sm:$0xff]
        %4271 = vrot.lane.b32.xlu0 %v4207, 64
        %v4272 = vpop.permute.xlu0 %4271
        %4273 = vrot.lane.b32.xlu0 %v4208, 64
        %v4274 = vpop.permute.xlu0 %4273
        %4275 = vrot.lane.b32.xlu0 %v4209, 64
        %v4276 = vpop.permute.xlu0 %4275
        %4277 = vrot.lane.b32.xlu0 %v4210, 64
        %v4278 = vpop.permute.xlu0 %4277
        %4279 = vrot.lane.b32.xlu0 %v4211, 64
        %v4280 = vpop.permute.xlu0 %4279
        %4281 = vrot.lane.b32.xlu0 %v4212, 64
        %v4282 = vpop.permute.xlu0 %4281
        %4283 = vrot.lane.b32.xlu0 %v4213, 64
        %v4284 = vpop.permute.xlu0 %4283
        %4285 = vrot.lane.b32.xlu0 %v4214, 64
        %v4286 = vpop.permute.xlu0 %4285
        %4287 = vrot.lane.b32.xlu0 %v4215, 64
        %v4288 = vpop.permute.xlu0 %4287
        %4289 = vrot.lane.b32.xlu0 %v4216, 64
        %v4290 = vpop.permute.xlu0 %4289
        %4291 = vrot.lane.b32.xlu0 %v4217, 64
        %v4292 = vpop.permute.xlu0 %4291
        %4293 = vrot.lane.b32.xlu0 %v4218, 64
        %v4294 = vpop.permute.xlu0 %4293
        %4295 = vrot.lane.b32.xlu0 %v4219, 64
        %v4296 = vpop.permute.xlu0 %4295
        %4297 = vrot.lane.b32.xlu0 %v4220, 64
        %v4298 = vpop.permute.xlu0 %4297
        %4299 = vrot.lane.b32.xlu0 %v4221, 64
        %v4300 = vpop.permute.xlu0 %4299
        %4301 = vrot.lane.b32.xlu0 %v4222, 64
        %v4302 = vpop.permute.xlu0 %4301
        %4303 = vrot.lane.b32.xlu0 %v4223, 64
        %v4304 = vpop.permute.xlu0 %4303
        %4305 = vrot.lane.b32.xlu0 %v4224, 64
        %v4306 = vpop.permute.xlu0 %4305
        %4307 = vrot.lane.b32.xlu0 %v4225, 64
        %v4308 = vpop.permute.xlu0 %4307
        %4309 = vrot.lane.b32.xlu0 %v4226, 64
        %v4310 = vpop.permute.xlu0 %4309
        %4311 = vrot.lane.b32.xlu0 %v4227, 64
        %v4312 = vpop.permute.xlu0 %4311
        %4313 = vrot.lane.b32.xlu0 %v4228, 64
        %v4314 = vpop.permute.xlu0 %4313
        %4315 = vrot.lane.b32.xlu0 %v4229, 64
        %v4316 = vpop.permute.xlu0 %4315
        %4317 = vrot.lane.b32.xlu0 %v4230, 64
        %v4318 = vpop.permute.xlu0 %4317
        %4319 = vrot.lane.b32.xlu0 %v4231, 64
        %v4320 = vpop.permute.xlu0 %4319
        %4321 = vrot.lane.b32.xlu0 %v4232, 64
        %v4322 = vpop.permute.xlu0 %4321
        %4323 = vrot.lane.b32.xlu0 %v4233, 64
        %v4324 = vpop.permute.xlu0 %4323
        %4325 = vrot.lane.b32.xlu0 %v4234, 64
        %v4326 = vpop.permute.xlu0 %4325
        %4327 = vrot.lane.b32.xlu0 %v4235, 64
        %v4328 = vpop.permute.xlu0 %4327
        %4329 = vrot.lane.b32.xlu0 %v4236, 64
        %v4330 = vpop.permute.xlu0 %4329
        %4331 = vrot.lane.b32.xlu0 %v4237, 64
        %v4332 = vpop.permute.xlu0 %4331
        %4333 = vrot.lane.b32.xlu0 %v4238, 64
        %v4334 = vpop.permute.xlu0 %4333
        %v4367 = vsel %vm467, %v4175, %v4272
        %v4368 = vsel %vm467, %v4176, %v4274
        %v4369 = vsel %vm467, %v4177, %v4276
        %v4370 = vsel %vm467, %v4178, %v4278
        %v4371 = vsel %vm467, %v4179, %v4280
        %v4372 = vsel %vm467, %v4180, %v4282
        %v4373 = vsel %vm467, %v4181, %v4284
        %v4374 = vsel %vm467, %v4182, %v4286
        %v4375 = vsel %vm467, %v4183, %v4288
        %v4376 = vsel %vm467, %v4184, %v4290
        %v4377 = vsel %vm467, %v4185, %v4292
        %v4378 = vsel %vm467, %v4186, %v4294
        %v4379 = vsel %vm467, %v4187, %v4296
        %v4380 = vsel %vm467, %v4188, %v4298
        %v4381 = vsel %vm467, %v4189, %v4300
        %v4382 = vsel %vm467, %v4190, %v4302
        %v4383 = vsel %vm467, %v4191, %v4304
        %v4384 = vsel %vm467, %v4192, %v4306
        %v4385 = vsel %vm467, %v4193, %v4308
        %v4386 = vsel %vm467, %v4194, %v4310
        %v4387 = vsel %vm467, %v4195, %v4312
        %v4388 = vsel %vm467, %v4196, %v4314
        %v4389 = vsel %vm467, %v4197, %v4316
        %v4390 = vsel %vm467, %v4198, %v4318
        %v4391 = vsel %vm467, %v4199, %v4320
        %v4392 = vsel %vm467, %v4200, %v4322
        %v4393 = vsel %vm467, %v4201, %v4324
        %v4394 = vsel %vm467, %v4202, %v4326
        %v4395 = vsel %vm467, %v4203, %v4328
        %v4396 = vsel %vm467, %v4204, %v4330
        %v4397 = vsel %vm467, %v4205, %v4332
        %v4398 = vsel %vm467, %v4206, %v4334
        %4399 = vst [vmem:[#allocation3 + $0x8] sm:$0xff] %v4367
        %4400 = vst [vmem:[#allocation3 + $0x30] sm:$0xff] %v4368
        %4401 = vst [vmem:[#allocation3 + $0x58] sm:$0xff] %v4369
        %4402 = vst [vmem:[#allocation3 + $0x80] sm:$0xff] %v4370
        %4403 = vst [vmem:[#allocation3 + $0xa8] sm:$0xff] %v4371
        %4404 = vst [vmem:[#allocation3 + $0xd0] sm:$0xff] %v4372
        %4405 = vst [vmem:[#allocation3 + $0xf8] sm:$0xff] %v4373
        %4406 = vst [vmem:[#allocation3 + $0x120] sm:$0xff] %v4374
        %4407 = vst [vmem:[#allocation3 + $0x148] sm:$0xff] %v4375
        %4408 = vst [vmem:[#allocation3 + $0x170] sm:$0xff] %v4376
        %4409 = vst [vmem:[#allocation3 + $0x198] sm:$0xff] %v4377
        %4410 = vst [vmem:[#allocation3 + $0x1c0] sm:$0xff] %v4378
        %4411 = vst [vmem:[#allocation3 + $0x1e8] sm:$0xff] %v4379
        %4412 = vst [vmem:[#allocation3 + $0x210] sm:$0xff] %v4380
        %4413 = vst [vmem:[#allocation3 + $0x238] sm:$0xff] %v4381
        %4414 = vst [vmem:[#allocation3 + $0x260] sm:$0xff] %v4382
        %4415 = vst [vmem:[#allocation3 + $0x288] sm:$0xff] %v4383
        %4416 = vst [vmem:[#allocation3 + $0x2b0] sm:$0xff] %v4384
        %4417 = vst [vmem:[#allocation3 + $0x2d8] sm:$0xff] %v4385
        %4418 = vst [vmem:[#allocation3 + $0x300] sm:$0xff] %v4386
        %4419 = vst [vmem:[#allocation3 + $0x328] sm:$0xff] %v4387
        %4420 = vst [vmem:[#allocation3 + $0x350] sm:$0xff] %v4388
        %4421 = vst [vmem:[#allocation3 + $0x378] sm:$0xff] %v4389
        %4422 = vst [vmem:[#allocation3 + $0x3a0] sm:$0xff] %v4390
        %4423 = vst [vmem:[#allocation3 + $0x3c8] sm:$0xff] %v4391
        %4424 = vst [vmem:[#allocation3 + $0x3f0] sm:$0xff] %v4392
        %4425 = vst [vmem:[#allocation3 + $0x418] sm:$0xff] %v4393
        %4426 = vst [vmem:[#allocation3 + $0x440] sm:$0xff] %v4394
        %4427 = vst [vmem:[#allocation3 + $0x468] sm:$0xff] %v4395
        %4428 = vst [vmem:[#allocation3 + $0x490] sm:$0xff] %v4396
        %4429 = vst [vmem:[#allocation3 + $0x4b8] sm:$0xff] %v4397
        %4430 = vst [vmem:[#allocation3 + $0x4e0] sm:$0xff] %v4398
        %v4431 = vld [vmem:[%s1319 + $0x1] sm:$0xff]
        %v4432 = vld [vmem:[%s1319 + $0x9] sm:$0xff]
        %v4433 = vld [vmem:[%s1319 + $0x19] sm:$0xff]
        %v4434 = vld [vmem:[%s1319 + $0x21] sm:$0xff]
        %v4435 = vld [vmem:[%s1319 + $0x31] sm:$0xff]
        %v4436 = vld [vmem:[%s1319 + $0x39] sm:$0xff]
        %v4437 = vld [vmem:[%s1319 + $0x49] sm:$0xff]
        %v4438 = vld [vmem:[%s1319 + $0x51] sm:$0xff]
        %v4439 = vld [vmem:[%s1319 + $0x61] sm:$0xff]
        %v4440 = vld [vmem:[%s1319 + $0x69] sm:$0xff]
        %v4441 = vld [vmem:[%s1319 + $0x79] sm:$0xff]
        %v4442 = vld [vmem:[%s1319 + $0x81] sm:$0xff]
        %v4443 = vld [vmem:[%s1319 + $0x91] sm:$0xff]
        %v4444 = vld [vmem:[%s1319 + $0x99] sm:$0xff]
        %v4445 = vld [vmem:[%s1319 + $0xa9] sm:$0xff]
        %v4446 = vld [vmem:[%s1319 + $0xb1] sm:$0xff]
        %v4447 = vld [vmem:[%s1319 + $0xc1] sm:$0xff]
        %v4448 = vld [vmem:[%s1319 + $0xc9] sm:$0xff]
        %v4449 = vld [vmem:[%s1319 + $0xd9] sm:$0xff]
        %v4450 = vld [vmem:[%s1319 + $0xe1] sm:$0xff]
        %v4451 = vld [vmem:[%s1319 + $0xf1] sm:$0xff]
        %v4452 = vld [vmem:[%s1319 + $0xf9] sm:$0xff]
        %v4453 = vld [vmem:[%s1319 + $0x109] sm:$0xff]
        %v4454 = vld [vmem:[%s1319 + $0x111] sm:$0xff]
        %v4455 = vld [vmem:[%s1319 + $0x121] sm:$0xff]
        %v4456 = vld [vmem:[%s1319 + $0x129] sm:$0xff]
        %v4457 = vld [vmem:[%s1319 + $0x139] sm:$0xff]
        %v4458 = vld [vmem:[%s1319 + $0x141] sm:$0xff]
        %v4459 = vld [vmem:[%s1319 + $0x151] sm:$0xff]
        %v4460 = vld [vmem:[%s1319 + $0x159] sm:$0xff]
        %v4461 = vld [vmem:[%s1319 + $0x169] sm:$0xff]
        %v4462 = vld [vmem:[%s1319 + $0x171] sm:$0xff]
        %v4463 = vld [vmem:[%s1319 + $0x2] sm:$0xff]
        %v4464 = vld [vmem:[%s1319 + $0xa] sm:$0xff]
        %v4465 = vld [vmem:[%s1319 + $0x1a] sm:$0xff]
        %v4466 = vld [vmem:[%s1319 + $0x22] sm:$0xff]
        %v4467 = vld [vmem:[%s1319 + $0x32] sm:$0xff]
        %v4468 = vld [vmem:[%s1319 + $0x3a] sm:$0xff]
        %v4469 = vld [vmem:[%s1319 + $0x4a] sm:$0xff]
        %v4470 = vld [vmem:[%s1319 + $0x52] sm:$0xff]
        %v4471 = vld [vmem:[%s1319 + $0x62] sm:$0xff]
        %v4472 = vld [vmem:[%s1319 + $0x6a] sm:$0xff]
        %v4473 = vld [vmem:[%s1319 + $0x7a] sm:$0xff]
        %v4474 = vld [vmem:[%s1319 + $0x82] sm:$0xff]
        %v4475 = vld [vmem:[%s1319 + $0x92] sm:$0xff]
        %v4476 = vld [vmem:[%s1319 + $0x9a] sm:$0xff]
        %v4477 = vld [vmem:[%s1319 + $0xaa] sm:$0xff]
        %v4478 = vld [vmem:[%s1319 + $0xb2] sm:$0xff]
        %v4479 = vld [vmem:[%s1319 + $0xc2] sm:$0xff]
        %v4480 = vld [vmem:[%s1319 + $0xca] sm:$0xff]
        %v4481 = vld [vmem:[%s1319 + $0xda] sm:$0xff]
        %v4482 = vld [vmem:[%s1319 + $0xe2] sm:$0xff]
        %v4483 = vld [vmem:[%s1319 + $0xf2] sm:$0xff]
        %v4484 = vld [vmem:[%s1319 + $0xfa] sm:$0xff]
        %v4485 = vld [vmem:[%s1319 + $0x10a] sm:$0xff]
        %v4486 = vld [vmem:[%s1319 + $0x112] sm:$0xff]
        %v4487 = vld [vmem:[%s1319 + $0x122] sm:$0xff]
        %v4488 = vld [vmem:[%s1319 + $0x12a] sm:$0xff]
        %v4489 = vld [vmem:[%s1319 + $0x13a] sm:$0xff]
        %v4490 = vld [vmem:[%s1319 + $0x142] sm:$0xff]
        %v4491 = vld [vmem:[%s1319 + $0x152] sm:$0xff]
        %v4492 = vld [vmem:[%s1319 + $0x15a] sm:$0xff]
        %v4493 = vld [vmem:[%s1319 + $0x16a] sm:$0xff]
        %v4494 = vld [vmem:[%s1319 + $0x172] sm:$0xff]
        %4527 = vrot.lane.b32.xlu0 %v4463, 64
        %v4528 = vpop.permute.xlu0 %4527
        %4529 = vrot.lane.b32.xlu0 %v4464, 64
        %v4530 = vpop.permute.xlu0 %4529
        %4531 = vrot.lane.b32.xlu0 %v4465, 64
        %v4532 = vpop.permute.xlu0 %4531
        %4533 = vrot.lane.b32.xlu0 %v4466, 64
        %v4534 = vpop.permute.xlu0 %4533
        %4535 = vrot.lane.b32.xlu0 %v4467, 64
        %v4536 = vpop.permute.xlu0 %4535
        %4537 = vrot.lane.b32.xlu0 %v4468, 64
        %v4538 = vpop.permute.xlu0 %4537
        %4539 = vrot.lane.b32.xlu0 %v4469, 64
        %v4540 = vpop.permute.xlu0 %4539
        %4541 = vrot.lane.b32.xlu0 %v4470, 64
        %v4542 = vpop.permute.xlu0 %4541
        %4543 = vrot.lane.b32.xlu0 %v4471, 64
        %v4544 = vpop.permute.xlu0 %4543
        %4545 = vrot.lane.b32.xlu0 %v4472, 64
        %v4546 = vpop.permute.xlu0 %4545
        %4547 = vrot.lane.b32.xlu0 %v4473, 64
        %v4548 = vpop.permute.xlu0 %4547
        %4549 = vrot.lane.b32.xlu0 %v4474, 64
        %v4550 = vpop.permute.xlu0 %4549
        %4551 = vrot.lane.b32.xlu0 %v4475, 64
        %v4552 = vpop.permute.xlu0 %4551
        %4553 = vrot.lane.b32.xlu0 %v4476, 64
        %v4554 = vpop.permute.xlu0 %4553
        %4555 = vrot.lane.b32.xlu0 %v4477, 64
        %v4556 = vpop.permute.xlu0 %4555
        %4557 = vrot.lane.b32.xlu0 %v4478, 64
        %v4558 = vpop.permute.xlu0 %4557
        %4559 = vrot.lane.b32.xlu0 %v4479, 64
        %v4560 = vpop.permute.xlu0 %4559
        %4561 = vrot.lane.b32.xlu0 %v4480, 64
        %v4562 = vpop.permute.xlu0 %4561
        %4563 = vrot.lane.b32.xlu0 %v4481, 64
        %v4564 = vpop.permute.xlu0 %4563
        %4565 = vrot.lane.b32.xlu0 %v4482, 64
        %v4566 = vpop.permute.xlu0 %4565
        %4567 = vrot.lane.b32.xlu0 %v4483, 64
        %v4568 = vpop.permute.xlu0 %4567
        %4569 = vrot.lane.b32.xlu0 %v4484, 64
        %v4570 = vpop.permute.xlu0 %4569
        %4571 = vrot.lane.b32.xlu0 %v4485, 64
        %v4572 = vpop.permute.xlu0 %4571
        %4573 = vrot.lane.b32.xlu0 %v4486, 64
        %v4574 = vpop.permute.xlu0 %4573
        %4575 = vrot.lane.b32.xlu0 %v4487, 64
        %v4576 = vpop.permute.xlu0 %4575
        %4577 = vrot.lane.b32.xlu0 %v4488, 64
        %v4578 = vpop.permute.xlu0 %4577
        %4579 = vrot.lane.b32.xlu0 %v4489, 64
        %v4580 = vpop.permute.xlu0 %4579
        %4581 = vrot.lane.b32.xlu0 %v4490, 64
        %v4582 = vpop.permute.xlu0 %4581
        %4583 = vrot.lane.b32.xlu0 %v4491, 64
        %v4584 = vpop.permute.xlu0 %4583
        %4585 = vrot.lane.b32.xlu0 %v4492, 64
        %v4586 = vpop.permute.xlu0 %4585
        %4587 = vrot.lane.b32.xlu0 %v4493, 64
        %v4588 = vpop.permute.xlu0 %4587
        %4589 = vrot.lane.b32.xlu0 %v4494, 64
        %v4590 = vpop.permute.xlu0 %4589
        %v4623 = vsel %vm467, %v4431, %v4528
        %v4624 = vsel %vm467, %v4432, %v4530
        %v4625 = vsel %vm467, %v4433, %v4532
        %v4626 = vsel %vm467, %v4434, %v4534
        %v4627 = vsel %vm467, %v4435, %v4536
        %v4628 = vsel %vm467, %v4436, %v4538
        %v4629 = vsel %vm467, %v4437, %v4540
        %v4630 = vsel %vm467, %v4438, %v4542
        %v4631 = vsel %vm467, %v4439, %v4544
        %v4632 = vsel %vm467, %v4440, %v4546
        %v4633 = vsel %vm467, %v4441, %v4548
        %v4634 = vsel %vm467, %v4442, %v4550
        %v4635 = vsel %vm467, %v4443, %v4552
        %v4636 = vsel %vm467, %v4444, %v4554
        %v4637 = vsel %vm467, %v4445, %v4556
        %v4638 = vsel %vm467, %v4446, %v4558
        %v4639 = vsel %vm467, %v4447, %v4560
        %v4640 = vsel %vm467, %v4448, %v4562
        %v4641 = vsel %vm467, %v4449, %v4564
        %v4642 = vsel %vm467, %v4450, %v4566
        %v4643 = vsel %vm467, %v4451, %v4568
        %v4644 = vsel %vm467, %v4452, %v4570
        %v4645 = vsel %vm467, %v4453, %v4572
        %v4646 = vsel %vm467, %v4454, %v4574
        %v4647 = vsel %vm467, %v4455, %v4576
        %v4648 = vsel %vm467, %v4456, %v4578
        %v4649 = vsel %vm467, %v4457, %v4580
        %v4650 = vsel %vm467, %v4458, %v4582
        %v4651 = vsel %vm467, %v4459, %v4584
        %v4652 = vsel %vm467, %v4460, %v4586
        %v4653 = vsel %vm467, %v4461, %v4588
        %v4654 = vsel %vm467, %v4462, %v4590
        %4655 = vst [vmem:[#allocation3 + $0x10] sm:$0xff] %v4623
        %4656 = vst [vmem:[#allocation3 + $0x38] sm:$0xff] %v4624
        %4657 = vst [vmem:[#allocation3 + $0x60] sm:$0xff] %v4625
        %4658 = vst [vmem:[#allocation3 + $0x88] sm:$0xff] %v4626
        %4659 = vst [vmem:[#allocation3 + $0xb0] sm:$0xff] %v4627
        %4660 = vst [vmem:[#allocation3 + $0xd8] sm:$0xff] %v4628
        %4661 = vst [vmem:[#allocation3 + $0x100] sm:$0xff] %v4629
        %4662 = vst [vmem:[#allocation3 + $0x128] sm:$0xff] %v4630
        %4663 = vst [vmem:[#allocation3 + $0x150] sm:$0xff] %v4631
        %4664 = vst [vmem:[#allocation3 + $0x178] sm:$0xff] %v4632
        %4665 = vst [vmem:[#allocation3 + $0x1a0] sm:$0xff] %v4633
        %4666 = vst [vmem:[#allocation3 + $0x1c8] sm:$0xff] %v4634
        %4667 = vst [vmem:[#allocation3 + $0x1f0] sm:$0xff] %v4635
        %4668 = vst [vmem:[#allocation3 + $0x218] sm:$0xff] %v4636
        %4669 = vst [vmem:[#allocation3 + $0x240] sm:$0xff] %v4637
        %4670 = vst [vmem:[#allocation3 + $0x268] sm:$0xff] %v4638
        %4671 = vst [vmem:[#allocation3 + $0x290] sm:$0xff] %v4639
        %4672 = vst [vmem:[#allocation3 + $0x2b8] sm:$0xff] %v4640
        %4673 = vst [vmem:[#allocation3 + $0x2e0] sm:$0xff] %v4641
        %4674 = vst [vmem:[#allocation3 + $0x308] sm:$0xff] %v4642
        %4675 = vst [vmem:[#allocation3 + $0x330] sm:$0xff] %v4643
        %4676 = vst [vmem:[#allocation3 + $0x358] sm:$0xff] %v4644
        %4677 = vst [vmem:[#allocation3 + $0x380] sm:$0xff] %v4645
        %4678 = vst [vmem:[#allocation3 + $0x3a8] sm:$0xff] %v4646
        %4679 = vst [vmem:[#allocation3 + $0x3d0] sm:$0xff] %v4647
        %4680 = vst [vmem:[#allocation3 + $0x3f8] sm:$0xff] %v4648
        %4681 = vst [vmem:[#allocation3 + $0x420] sm:$0xff] %v4649
        %4682 = vst [vmem:[#allocation3 + $0x448] sm:$0xff] %v4650
        %4683 = vst [vmem:[#allocation3 + $0x470] sm:$0xff] %v4651
        %4684 = vst [vmem:[#allocation3 + $0x498] sm:$0xff] %v4652
        %4685 = vst [vmem:[#allocation3 + $0x4c0] sm:$0xff] %v4653
        %4686 = vst [vmem:[#allocation3 + $0x4e8] sm:$0xff] %v4654
        %v4687 = vld [vmem:[%s2120] sm:$0xff]
        %v4688 = vld [vmem:[%s2120 + $0x8] sm:$0xff]
        %v4689 = vld [vmem:[%s2120 + $0x18] sm:$0xff]
        %v4690 = vld [vmem:[%s2120 + $0x20] sm:$0xff]
        %v4691 = vld [vmem:[%s2120 + $0x30] sm:$0xff]
        %v4692 = vld [vmem:[%s2120 + $0x38] sm:$0xff]
        %v4693 = vld [vmem:[%s2120 + $0x48] sm:$0xff]
        %v4694 = vld [vmem:[%s2120 + $0x50] sm:$0xff]
        %v4695 = vld [vmem:[%s2120 + $0x60] sm:$0xff]
        %v4696 = vld [vmem:[%s2120 + $0x68] sm:$0xff]
        %v4697 = vld [vmem:[%s2120 + $0x78] sm:$0xff]
        %v4698 = vld [vmem:[%s2120 + $0x80] sm:$0xff]
        %v4699 = vld [vmem:[%s2120 + $0x90] sm:$0xff]
        %v4700 = vld [vmem:[%s2120 + $0x98] sm:$0xff]
        %v4701 = vld [vmem:[%s2120 + $0xa8] sm:$0xff]
        %v4702 = vld [vmem:[%s2120 + $0xb0] sm:$0xff]
        %v4703 = vld [vmem:[%s2120 + $0xc0] sm:$0xff]
        %v4704 = vld [vmem:[%s2120 + $0xc8] sm:$0xff]
        %v4705 = vld [vmem:[%s2120 + $0xd8] sm:$0xff]
        %v4706 = vld [vmem:[%s2120 + $0xe0] sm:$0xff]
        %v4707 = vld [vmem:[%s2120 + $0xf0] sm:$0xff]
        %v4708 = vld [vmem:[%s2120 + $0xf8] sm:$0xff]
        %v4709 = vld [vmem:[%s2120 + $0x108] sm:$0xff]
        %v4710 = vld [vmem:[%s2120 + $0x110] sm:$0xff]
        %v4711 = vld [vmem:[%s2120 + $0x120] sm:$0xff]
        %v4712 = vld [vmem:[%s2120 + $0x128] sm:$0xff]
        %v4713 = vld [vmem:[%s2120 + $0x138] sm:$0xff]
        %v4714 = vld [vmem:[%s2120 + $0x140] sm:$0xff]
        %v4715 = vld [vmem:[%s2120 + $0x150] sm:$0xff]
        %v4716 = vld [vmem:[%s2120 + $0x158] sm:$0xff]
        %v4717 = vld [vmem:[%s2120 + $0x168] sm:$0xff]
        %v4718 = vld [vmem:[%s2120 + $0x170] sm:$0xff]
        %v4719 = vld [vmem:[%s2120 + $0x1] sm:$0xff]
        %v4720 = vld [vmem:[%s2120 + $0x9] sm:$0xff]
        %v4721 = vld [vmem:[%s2120 + $0x19] sm:$0xff]
        %v4722 = vld [vmem:[%s2120 + $0x21] sm:$0xff]
        %v4723 = vld [vmem:[%s2120 + $0x31] sm:$0xff]
        %v4724 = vld [vmem:[%s2120 + $0x39] sm:$0xff]
        %v4725 = vld [vmem:[%s2120 + $0x49] sm:$0xff]
        %v4726 = vld [vmem:[%s2120 + $0x51] sm:$0xff]
        %v4727 = vld [vmem:[%s2120 + $0x61] sm:$0xff]
        %v4728 = vld [vmem:[%s2120 + $0x69] sm:$0xff]
        %v4729 = vld [vmem:[%s2120 + $0x79] sm:$0xff]
        %v4730 = vld [vmem:[%s2120 + $0x81] sm:$0xff]
        %v4731 = vld [vmem:[%s2120 + $0x91] sm:$0xff]
        %v4732 = vld [vmem:[%s2120 + $0x99] sm:$0xff]
        %v4733 = vld [vmem:[%s2120 + $0xa9] sm:$0xff]
        %v4734 = vld [vmem:[%s2120 + $0xb1] sm:$0xff]
        %v4735 = vld [vmem:[%s2120 + $0xc1] sm:$0xff]
        %v4736 = vld [vmem:[%s2120 + $0xc9] sm:$0xff]
        %v4737 = vld [vmem:[%s2120 + $0xd9] sm:$0xff]
        %v4738 = vld [vmem:[%s2120 + $0xe1] sm:$0xff]
        %v4739 = vld [vmem:[%s2120 + $0xf1] sm:$0xff]
        %v4740 = vld [vmem:[%s2120 + $0xf9] sm:$0xff]
        %v4741 = vld [vmem:[%s2120 + $0x109] sm:$0xff]
        %v4742 = vld [vmem:[%s2120 + $0x111] sm:$0xff]
        %v4743 = vld [vmem:[%s2120 + $0x121] sm:$0xff]
        %v4744 = vld [vmem:[%s2120 + $0x129] sm:$0xff]
        %v4745 = vld [vmem:[%s2120 + $0x139] sm:$0xff]
        %v4746 = vld [vmem:[%s2120 + $0x141] sm:$0xff]
        %v4747 = vld [vmem:[%s2120 + $0x151] sm:$0xff]
        %v4748 = vld [vmem:[%s2120 + $0x159] sm:$0xff]
        %v4749 = vld [vmem:[%s2120 + $0x169] sm:$0xff]
        %v4750 = vld [vmem:[%s2120 + $0x171] sm:$0xff]
        %4783 = vrot.lane.b32.xlu0 %v4719, 64
        %v4784 = vpop.permute.xlu0 %4783
        %4785 = vrot.lane.b32.xlu0 %v4720, 64
        %v4786 = vpop.permute.xlu0 %4785
        %4787 = vrot.lane.b32.xlu0 %v4721, 64
        %v4788 = vpop.permute.xlu0 %4787
        %4789 = vrot.lane.b32.xlu0 %v4722, 64
        %v4790 = vpop.permute.xlu0 %4789
        %4791 = vrot.lane.b32.xlu0 %v4723, 64
        %v4792 = vpop.permute.xlu0 %4791
        %4793 = vrot.lane.b32.xlu0 %v4724, 64
        %v4794 = vpop.permute.xlu0 %4793
        %4795 = vrot.lane.b32.xlu0 %v4725, 64
        %v4796 = vpop.permute.xlu0 %4795
        %4797 = vrot.lane.b32.xlu0 %v4726, 64
        %v4798 = vpop.permute.xlu0 %4797
        %4799 = vrot.lane.b32.xlu0 %v4727, 64
        %v4800 = vpop.permute.xlu0 %4799
        %4801 = vrot.lane.b32.xlu0 %v4728, 64
        %v4802 = vpop.permute.xlu0 %4801
        %4803 = vrot.lane.b32.xlu0 %v4729, 64
        %v4804 = vpop.permute.xlu0 %4803
        %4805 = vrot.lane.b32.xlu0 %v4730, 64
        %v4806 = vpop.permute.xlu0 %4805
        %4807 = vrot.lane.b32.xlu0 %v4731, 64
        %v4808 = vpop.permute.xlu0 %4807
        %4809 = vrot.lane.b32.xlu0 %v4732, 64
        %v4810 = vpop.permute.xlu0 %4809
        %4811 = vrot.lane.b32.xlu0 %v4733, 64
        %v4812 = vpop.permute.xlu0 %4811
        %4813 = vrot.lane.b32.xlu0 %v4734, 64
        %v4814 = vpop.permute.xlu0 %4813
        %4815 = vrot.lane.b32.xlu0 %v4735, 64
        %v4816 = vpop.permute.xlu0 %4815
        %4817 = vrot.lane.b32.xlu0 %v4736, 64
        %v4818 = vpop.permute.xlu0 %4817
        %4819 = vrot.lane.b32.xlu0 %v4737, 64
        %v4820 = vpop.permute.xlu0 %4819
        %4821 = vrot.lane.b32.xlu0 %v4738, 64
        %v4822 = vpop.permute.xlu0 %4821
        %4823 = vrot.lane.b32.xlu0 %v4739, 64
        %v4824 = vpop.permute.xlu0 %4823
        %4825 = vrot.lane.b32.xlu0 %v4740, 64
        %v4826 = vpop.permute.xlu0 %4825
        %4827 = vrot.lane.b32.xlu0 %v4741, 64
        %v4828 = vpop.permute.xlu0 %4827
        %4829 = vrot.lane.b32.xlu0 %v4742, 64
        %v4830 = vpop.permute.xlu0 %4829
        %4831 = vrot.lane.b32.xlu0 %v4743, 64
        %v4832 = vpop.permute.xlu0 %4831
        %4833 = vrot.lane.b32.xlu0 %v4744, 64
        %v4834 = vpop.permute.xlu0 %4833
        %4835 = vrot.lane.b32.xlu0 %v4745, 64
        %v4836 = vpop.permute.xlu0 %4835
        %4837 = vrot.lane.b32.xlu0 %v4746, 64
        %v4838 = vpop.permute.xlu0 %4837
        %4839 = vrot.lane.b32.xlu0 %v4747, 64
        %v4840 = vpop.permute.xlu0 %4839
        %4841 = vrot.lane.b32.xlu0 %v4748, 64
        %v4842 = vpop.permute.xlu0 %4841
        %4843 = vrot.lane.b32.xlu0 %v4749, 64
        %v4844 = vpop.permute.xlu0 %4843
        %4845 = vrot.lane.b32.xlu0 %v4750, 64
        %v4846 = vpop.permute.xlu0 %4845
        %v4879 = vsel %vm467, %v4687, %v4784
        %v4880 = vsel %vm467, %v4688, %v4786
        %v4881 = vsel %vm467, %v4689, %v4788
        %v4882 = vsel %vm467, %v4690, %v4790
        %v4883 = vsel %vm467, %v4691, %v4792
        %v4884 = vsel %vm467, %v4692, %v4794
        %v4885 = vsel %vm467, %v4693, %v4796
        %v4886 = vsel %vm467, %v4694, %v4798
        %v4887 = vsel %vm467, %v4695, %v4800
        %v4888 = vsel %vm467, %v4696, %v4802
        %v4889 = vsel %vm467, %v4697, %v4804
        %v4890 = vsel %vm467, %v4698, %v4806
        %v4891 = vsel %vm467, %v4699, %v4808
        %v4892 = vsel %vm467, %v4700, %v4810
        %v4893 = vsel %vm467, %v4701, %v4812
        %v4894 = vsel %vm467, %v4702, %v4814
        %v4895 = vsel %vm467, %v4703, %v4816
        %v4896 = vsel %vm467, %v4704, %v4818
        %v4897 = vsel %vm467, %v4705, %v4820
        %v4898 = vsel %vm467, %v4706, %v4822
        %v4899 = vsel %vm467, %v4707, %v4824
        %v4900 = vsel %vm467, %v4708, %v4826
        %v4901 = vsel %vm467, %v4709, %v4828
        %v4902 = vsel %vm467, %v4710, %v4830
        %v4903 = vsel %vm467, %v4711, %v4832
        %v4904 = vsel %vm467, %v4712, %v4834
        %v4905 = vsel %vm467, %v4713, %v4836
        %v4906 = vsel %vm467, %v4714, %v4838
        %v4907 = vsel %vm467, %v4715, %v4840
        %v4908 = vsel %vm467, %v4716, %v4842
        %v4909 = vsel %vm467, %v4717, %v4844
        %v4910 = vsel %vm467, %v4718, %v4846
        %4911 = vst [vmem:[#allocation3 + $0x18] sm:$0xff] %v4879
        %4912 = vst [vmem:[#allocation3 + $0x40] sm:$0xff] %v4880
        %4913 = vst [vmem:[#allocation3 + $0x68] sm:$0xff] %v4881
        %4914 = vst [vmem:[#allocation3 + $0x90] sm:$0xff] %v4882
        %4915 = vst [vmem:[#allocation3 + $0xb8] sm:$0xff] %v4883
        %4916 = vst [vmem:[#allocation3 + $0xe0] sm:$0xff] %v4884
        %4917 = vst [vmem:[#allocation3 + $0x108] sm:$0xff] %v4885
        %4918 = vst [vmem:[#allocation3 + $0x130] sm:$0xff] %v4886
        %4919 = vst [vmem:[#allocation3 + $0x158] sm:$0xff] %v4887
        %4920 = vst [vmem:[#allocation3 + $0x180] sm:$0xff] %v4888
        %4921 = vst [vmem:[#allocation3 + $0x1a8] sm:$0xff] %v4889
        %4922 = vst [vmem:[#allocation3 + $0x1d0] sm:$0xff] %v4890
        %4923 = vst [vmem:[#allocation3 + $0x1f8] sm:$0xff] %v4891
        %4924 = vst [vmem:[#allocation3 + $0x220] sm:$0xff] %v4892
        %4925 = vst [vmem:[#allocation3 + $0x248] sm:$0xff] %v4893
        %4926 = vst [vmem:[#allocation3 + $0x270] sm:$0xff] %v4894
        %4927 = vst [vmem:[#allocation3 + $0x298] sm:$0xff] %v4895
        %4928 = vst [vmem:[#allocation3 + $0x2c0] sm:$0xff] %v4896
        %4929 = vst [vmem:[#allocation3 + $0x2e8] sm:$0xff] %v4897
        %4930 = vst [vmem:[#allocation3 + $0x310] sm:$0xff] %v4898
        %4931 = vst [vmem:[#allocation3 + $0x338] sm:$0xff] %v4899
        %4932 = vst [vmem:[#allocation3 + $0x360] sm:$0xff] %v4900
        %4933 = vst [vmem:[#allocation3 + $0x388] sm:$0xff] %v4901
        %4934 = vst [vmem:[#allocation3 + $0x3b0] sm:$0xff] %v4902
        %4935 = vst [vmem:[#allocation3 + $0x3d8] sm:$0xff] %v4903
        %4936 = vst [vmem:[#allocation3 + $0x400] sm:$0xff] %v4904
        %4937 = vst [vmem:[#allocation3 + $0x428] sm:$0xff] %v4905
        %4938 = vst [vmem:[#allocation3 + $0x450] sm:$0xff] %v4906
        %4939 = vst [vmem:[#allocation3 + $0x478] sm:$0xff] %v4907
        %4940 = vst [vmem:[#allocation3 + $0x4a0] sm:$0xff] %v4908
        %4941 = vst [vmem:[#allocation3 + $0x4c8] sm:$0xff] %v4909
        %4942 = vst [vmem:[#allocation3 + $0x4f0] sm:$0xff] %v4910
        %v4943 = vld [vmem:[%s2120 + $0x2] sm:$0xff]
        %v4944 = vld [vmem:[%s2120 + $0xa] sm:$0xff]
        %v4945 = vld [vmem:[%s2120 + $0x1a] sm:$0xff]
        %v4946 = vld [vmem:[%s2120 + $0x22] sm:$0xff]
        %v4947 = vld [vmem:[%s2120 + $0x32] sm:$0xff]
        %v4948 = vld [vmem:[%s2120 + $0x3a] sm:$0xff]
        %v4949 = vld [vmem:[%s2120 + $0x4a] sm:$0xff]
        %v4950 = vld [vmem:[%s2120 + $0x52] sm:$0xff]
        %v4951 = vld [vmem:[%s2120 + $0x62] sm:$0xff]
        %v4952 = vld [vmem:[%s2120 + $0x6a] sm:$0xff]
        %v4953 = vld [vmem:[%s2120 + $0x7a] sm:$0xff]
        %v4954 = vld [vmem:[%s2120 + $0x82] sm:$0xff]
        %v4955 = vld [vmem:[%s2120 + $0x92] sm:$0xff]
        %v4956 = vld [vmem:[%s2120 + $0x9a] sm:$0xff]
        %v4957 = vld [vmem:[%s2120 + $0xaa] sm:$0xff]
        %v4958 = vld [vmem:[%s2120 + $0xb2] sm:$0xff]
        %v4959 = vld [vmem:[%s2120 + $0xc2] sm:$0xff]
        %v4960 = vld [vmem:[%s2120 + $0xca] sm:$0xff]
        %v4961 = vld [vmem:[%s2120 + $0xda] sm:$0xff]
        %v4962 = vld [vmem:[%s2120 + $0xe2] sm:$0xff]
        %v4963 = vld [vmem:[%s2120 + $0xf2] sm:$0xff]
        %v4964 = vld [vmem:[%s2120 + $0xfa] sm:$0xff]
        %v4965 = vld [vmem:[%s2120 + $0x10a] sm:$0xff]
        %v4966 = vld [vmem:[%s2120 + $0x112] sm:$0xff]
        %v4967 = vld [vmem:[%s2120 + $0x122] sm:$0xff]
        %v4968 = vld [vmem:[%s2120 + $0x12a] sm:$0xff]
        %v4969 = vld [vmem:[%s2120 + $0x13a] sm:$0xff]
        %v4970 = vld [vmem:[%s2120 + $0x142] sm:$0xff]
        %v4971 = vld [vmem:[%s2120 + $0x152] sm:$0xff]
        %v4972 = vld [vmem:[%s2120 + $0x15a] sm:$0xff]
        %v4973 = vld [vmem:[%s2120 + $0x16a] sm:$0xff]
        %v4974 = vld [vmem:[%s2120 + $0x172] sm:$0xff]
        %4975 = vst.msk [vmem:[#allocation3 + $0x20] sm:$0xff] %vm467, %v4943
        %4976 = vst.msk [vmem:[#allocation3 + $0x48] sm:$0xff] %vm467, %v4944
        %4977 = vst.msk [vmem:[#allocation3 + $0x70] sm:$0xff] %vm467, %v4945
        %4978 = vst.msk [vmem:[#allocation3 + $0x98] sm:$0xff] %vm467, %v4946
        %4979 = vst.msk [vmem:[#allocation3 + $0xc0] sm:$0xff] %vm467, %v4947
        %4980 = vst.msk [vmem:[#allocation3 + $0xe8] sm:$0xff] %vm467, %v4948
        %4981 = vst.msk [vmem:[#allocation3 + $0x110] sm:$0xff] %vm467, %v4949
        %4982 = vst.msk [vmem:[#allocation3 + $0x138] sm:$0xff] %vm467, %v4950
        %4983 = vst.msk [vmem:[#allocation3 + $0x160] sm:$0xff] %vm467, %v4951
        %4984 = vst.msk [vmem:[#allocation3 + $0x188] sm:$0xff] %vm467, %v4952
        %4985 = vst.msk [vmem:[#allocation3 + $0x1b0] sm:$0xff] %vm467, %v4953
        %4986 = vst.msk [vmem:[#allocation3 + $0x1d8] sm:$0xff] %vm467, %v4954
        %4987 = vst.msk [vmem:[#allocation3 + $0x200] sm:$0xff] %vm467, %v4955
        %4988 = vst.msk [vmem:[#allocation3 + $0x228] sm:$0xff] %vm467, %v4956
        %4989 = vst.msk [vmem:[#allocation3 + $0x250] sm:$0xff] %vm467, %v4957
        %4990 = vst.msk [vmem:[#allocation3 + $0x278] sm:$0xff] %vm467, %v4958
        %4991 = vst.msk [vmem:[#allocation3 + $0x2a0] sm:$0xff] %vm467, %v4959
        %4992 = vst.msk [vmem:[#allocation3 + $0x2c8] sm:$0xff] %vm467, %v4960
        %4993 = vst.msk [vmem:[#allocation3 + $0x2f0] sm:$0xff] %vm467, %v4961
        %4994 = vst.msk [vmem:[#allocation3 + $0x318] sm:$0xff] %vm467, %v4962
        %4995 = vst.msk [vmem:[#allocation3 + $0x340] sm:$0xff] %vm467, %v4963
        %4996 = vst.msk [vmem:[#allocation3 + $0x368] sm:$0xff] %vm467, %v4964
        %4997 = vst.msk [vmem:[#allocation3 + $0x390] sm:$0xff] %vm467, %v4965
        %4998 = vst.msk [vmem:[#allocation3 + $0x3b8] sm:$0xff] %vm467, %v4966
        %4999 = vst.msk [vmem:[#allocation3 + $0x3e0] sm:$0xff] %vm467, %v4967
        %5000 = vst.msk [vmem:[#allocation3 + $0x408] sm:$0xff] %vm467, %v4968
        %5001 = vst.msk [vmem:[#allocation3 + $0x430] sm:$0xff] %vm467, %v4969
        %5002 = vst.msk [vmem:[#allocation3 + $0x458] sm:$0xff] %vm467, %v4970
        %5003 = vst.msk [vmem:[#allocation3 + $0x480] sm:$0xff] %vm467, %v4971
        %5004 = vst.msk [vmem:[#allocation3 + $0x4a8] sm:$0xff] %vm467, %v4972
        %5005 = vst.msk [vmem:[#allocation3 + $0x4d0] sm:$0xff] %vm467, %v4973
        %5006 = vst.msk [vmem:[#allocation3 + $0x4f8] sm:$0xff] %vm467, %v4974
        %v5007 = vld [vmem:[%s10] sm:$0xff]
        %v5008 = vld [vmem:[%s10 + $0x8] sm:$0xff]
        %v5009 = vld [vmem:[%s10 + $0x10] sm:$0xff]
        %v5010 = vld [vmem:[%s10 + $0x18] sm:$0xff]
        %v5011 = vld [vmem:[%s10 + $0x20] sm:$0xff]
        %v5012 = vld [vmem:[#allocation3] sm:$0xff]
        %v5013 = vld [vmem:[#allocation3 + $0x8] sm:$0xff]
        %v5014 = vld [vmem:[#allocation3 + $0x10] sm:$0xff]
        %v5015 = vld [vmem:[#allocation3 + $0x18] sm:$0xff]
        %v5016 = vld [vmem:[#allocation3 + $0x20] sm:$0xff]
        %v5017 = vld [vmem:[#allocation3 + $0x28] sm:$0xff]
        %v5018 = vld [vmem:[#allocation3 + $0x30] sm:$0xff]
        %v5019 = vld [vmem:[#allocation3 + $0x38] sm:$0xff]
        %v5020 = vld [vmem:[#allocation3 + $0x40] sm:$0xff]
        %v5021 = vld [vmem:[#allocation3 + $0x48] sm:$0xff]
        %v5022 = vld [vmem:[#allocation3 + $0x50] sm:$0xff]
        %v5023 = vld [vmem:[#allocation3 + $0x58] sm:$0xff]
        %v5024 = vld [vmem:[#allocation3 + $0x60] sm:$0xff]
        %v5025 = vld [vmem:[#allocation3 + $0x68] sm:$0xff]
        %v5026 = vld [vmem:[#allocation3 + $0x70] sm:$0xff]
        %v5027 = vld [vmem:[#allocation3 + $0x78] sm:$0xff]
        %v5028 = vld [vmem:[#allocation3 + $0x80] sm:$0xff]
        %v5029 = vld [vmem:[#allocation3 + $0x88] sm:$0xff]
        %v5030 = vld [vmem:[#allocation3 + $0x90] sm:$0xff]
        %v5031 = vld [vmem:[#allocation3 + $0x98] sm:$0xff]
        %v5032 = vld [vmem:[#allocation3 + $0xa0] sm:$0xff]
        %v5033 = vld [vmem:[#allocation3 + $0xa8] sm:$0xff]
        %v5034 = vld [vmem:[#allocation3 + $0xb0] sm:$0xff]
        %v5035 = vld [vmem:[#allocation3 + $0xb8] sm:$0xff]
        %v5036 = vld [vmem:[#allocation3 + $0xc0] sm:$0xff]
        %v5037 = vld [vmem:[#allocation3 + $0xc8] sm:$0xff]
        %v5038 = vld [vmem:[#allocation3 + $0xd0] sm:$0xff]
        %v5039 = vld [vmem:[#allocation3 + $0xd8] sm:$0xff]
        %v5040 = vld [vmem:[#allocation3 + $0xe0] sm:$0xff]
        %v5041 = vld [vmem:[#allocation3 + $0xe8] sm:$0xff]
        %v5042 = vld [vmem:[#allocation3 + $0xf0] sm:$0xff]
        %v5043 = vld [vmem:[#allocation3 + $0xf8] sm:$0xff]
        %v5044 = vld [vmem:[#allocation3 + $0x100] sm:$0xff]
        %v5045 = vld [vmem:[#allocation3 + $0x108] sm:$0xff]
        %v5046 = vld [vmem:[#allocation3 + $0x110] sm:$0xff]
        %v5047 = vld [vmem:[#allocation3 + $0x118] sm:$0xff]
        %v5048 = vld [vmem:[#allocation3 + $0x120] sm:$0xff]
        %v5049 = vld [vmem:[#allocation3 + $0x128] sm:$0xff]
        %v5050 = vld [vmem:[#allocation3 + $0x130] sm:$0xff]
        %v5051 = vld [vmem:[#allocation3 + $0x138] sm:$0xff]
        %v5052 = vld [vmem:[#allocation3 + $0x140] sm:$0xff]
        %v5053 = vld [vmem:[#allocation3 + $0x148] sm:$0xff]
        %v5054 = vld [vmem:[#allocation3 + $0x150] sm:$0xff]
        %v5055 = vld [vmem:[#allocation3 + $0x158] sm:$0xff]
        %v5056 = vld [vmem:[#allocation3 + $0x160] sm:$0xff]
        %v5057 = vld [vmem:[#allocation3 + $0x168] sm:$0xff]
        %v5058 = vld [vmem:[#allocation3 + $0x170] sm:$0xff]
        %v5059 = vld [vmem:[#allocation3 + $0x178] sm:$0xff]
        %v5060 = vld [vmem:[#allocation3 + $0x180] sm:$0xff]
        %v5061 = vld [vmem:[#allocation3 + $0x188] sm:$0xff]
        %v5062 = vld [vmem:[#allocation3 + $0x190] sm:$0xff]
        %v5063 = vld [vmem:[#allocation3 + $0x198] sm:$0xff]
        %v5064 = vld [vmem:[#allocation3 + $0x1a0] sm:$0xff]
        %v5065 = vld [vmem:[#allocation3 + $0x1a8] sm:$0xff]
        %v5066 = vld [vmem:[#allocation3 + $0x1b0] sm:$0xff]
        %v5067 = vld [vmem:[#allocation3 + $0x1b8] sm:$0xff]
        %v5068 = vld [vmem:[#allocation3 + $0x1c0] sm:$0xff]
        %v5069 = vld [vmem:[#allocation3 + $0x1c8] sm:$0xff]
        %v5070 = vld [vmem:[#allocation3 + $0x1d0] sm:$0xff]
        %v5071 = vld [vmem:[#allocation3 + $0x1d8] sm:$0xff]
        %v5072 = vld [vmem:[#allocation3 + $0x1e0] sm:$0xff]
        %v5073 = vld [vmem:[#allocation3 + $0x1e8] sm:$0xff]
        %v5074 = vld [vmem:[#allocation3 + $0x1f0] sm:$0xff]
        %v5075 = vld [vmem:[#allocation3 + $0x1f8] sm:$0xff]
        %v5076 = vld [vmem:[#allocation3 + $0x200] sm:$0xff]
        %v5077 = vld [vmem:[#allocation3 + $0x208] sm:$0xff]
        %v5078 = vld [vmem:[#allocation3 + $0x210] sm:$0xff]
        %v5079 = vld [vmem:[#allocation3 + $0x218] sm:$0xff]
        %v5080 = vld [vmem:[#allocation3 + $0x220] sm:$0xff]
        %v5081 = vld [vmem:[#allocation3 + $0x228] sm:$0xff]
        %v5082 = vld [vmem:[#allocation3 + $0x230] sm:$0xff]
        %v5083 = vld [vmem:[#allocation3 + $0x238] sm:$0xff]
        %v5084 = vld [vmem:[#allocation3 + $0x240] sm:$0xff]
        %v5085 = vld [vmem:[#allocation3 + $0x248] sm:$0xff]
        %v5086 = vld [vmem:[#allocation3 + $0x250] sm:$0xff]
        %v5087 = vld [vmem:[#allocation3 + $0x258] sm:$0xff]
        %v5088 = vld [vmem:[#allocation3 + $0x260] sm:$0xff]
        %v5089 = vld [vmem:[#allocation3 + $0x268] sm:$0xff]
        %v5090 = vld [vmem:[#allocation3 + $0x270] sm:$0xff]
        %v5091 = vld [vmem:[#allocation3 + $0x278] sm:$0xff]
        %v5092 = vld [vmem:[#allocation3 + $0x280] sm:$0xff]
        %v5093 = vld [vmem:[#allocation3 + $0x288] sm:$0xff]
        %v5094 = vld [vmem:[#allocation3 + $0x290] sm:$0xff]
        %v5095 = vld [vmem:[#allocation3 + $0x298] sm:$0xff]
        %v5096 = vld [vmem:[#allocation3 + $0x2a0] sm:$0xff]
        %v5097 = vld [vmem:[#allocation3 + $0x2a8] sm:$0xff]
        %v5098 = vld [vmem:[#allocation3 + $0x2b0] sm:$0xff]
        %v5099 = vld [vmem:[#allocation3 + $0x2b8] sm:$0xff]
        %v5100 = vld [vmem:[#allocation3 + $0x2c0] sm:$0xff]
        %v5101 = vld [vmem:[#allocation3 + $0x2c8] sm:$0xff]
        %v5102 = vld [vmem:[#allocation3 + $0x2d0] sm:$0xff]
        %v5103 = vld [vmem:[#allocation3 + $0x2d8] sm:$0xff]
        %v5104 = vld [vmem:[#allocation3 + $0x2e0] sm:$0xff]
        %v5105 = vld [vmem:[#allocation3 + $0x2e8] sm:$0xff]
        %v5106 = vld [vmem:[#allocation3 + $0x2f0] sm:$0xff]
        %v5107 = vld [vmem:[#allocation3 + $0x2f8] sm:$0xff]
        %v5108 = vld [vmem:[#allocation3 + $0x300] sm:$0xff]
        %v5109 = vld [vmem:[#allocation3 + $0x308] sm:$0xff]
        %v5110 = vld [vmem:[#allocation3 + $0x310] sm:$0xff]
        %v5111 = vld [vmem:[#allocation3 + $0x318] sm:$0xff]
        %v5112 = vld [vmem:[#allocation3 + $0x320] sm:$0xff]
        %v5113 = vld [vmem:[#allocation3 + $0x328] sm:$0xff]
        %v5114 = vld [vmem:[#allocation3 + $0x330] sm:$0xff]
        %v5115 = vld [vmem:[#allocation3 + $0x338] sm:$0xff]
        %v5116 = vld [vmem:[#allocation3 + $0x340] sm:$0xff]
        %v5117 = vld [vmem:[#allocation3 + $0x348] sm:$0xff]
        %v5118 = vld [vmem:[#allocation3 + $0x350] sm:$0xff]
        %v5119 = vld [vmem:[#allocation3 + $0x358] sm:$0xff]
        %v5120 = vld [vmem:[#allocation3 + $0x360] sm:$0xff]
        %v5121 = vld [vmem:[#allocation3 + $0x368] sm:$0xff]
        %v5122 = vld [vmem:[#allocation3 + $0x370] sm:$0xff]
        %v5123 = vld [vmem:[#allocation3 + $0x378] sm:$0xff]
        %v5124 = vld [vmem:[#allocation3 + $0x380] sm:$0xff]
        %v5125 = vld [vmem:[#allocation3 + $0x388] sm:$0xff]
        %v5126 = vld [vmem:[#allocation3 + $0x390] sm:$0xff]
        %v5127 = vld [vmem:[#allocation3 + $0x398] sm:$0xff]
        %v5128 = vld [vmem:[#allocation3 + $0x3a0] sm:$0xff]
        %v5129 = vld [vmem:[#allocation3 + $0x3a8] sm:$0xff]
        %v5130 = vld [vmem:[#allocation3 + $0x3b0] sm:$0xff]
        %v5131 = vld [vmem:[#allocation3 + $0x3b8] sm:$0xff]
        %v5132 = vld [vmem:[#allocation3 + $0x3c0] sm:$0xff]
        %v5133 = vld [vmem:[#allocation3 + $0x3c8] sm:$0xff]
        %v5134 = vld [vmem:[#allocation3 + $0x3d0] sm:$0xff]
        %v5135 = vld [vmem:[#allocation3 + $0x3d8] sm:$0xff]
        %v5136 = vld [vmem:[#allocation3 + $0x3e0] sm:$0xff]
        %v5137 = vld [vmem:[#allocation3 + $0x3e8] sm:$0xff]
        %v5138 = vld [vmem:[#allocation3 + $0x3f0] sm:$0xff]
        %v5139 = vld [vmem:[#allocation3 + $0x3f8] sm:$0xff]
        %v5140 = vld [vmem:[#allocation3 + $0x400] sm:$0xff]
        %v5141 = vld [vmem:[#allocation3 + $0x408] sm:$0xff]
        %v5142 = vld [vmem:[#allocation3 + $0x410] sm:$0xff]
        %v5143 = vld [vmem:[#allocation3 + $0x418] sm:$0xff]
        %v5144 = vld [vmem:[#allocation3 + $0x420] sm:$0xff]
        %v5145 = vld [vmem:[#allocation3 + $0x428] sm:$0xff]
        %v5146 = vld [vmem:[#allocation3 + $0x430] sm:$0xff]
        %v5147 = vld [vmem:[#allocation3 + $0x438] sm:$0xff]
        %v5148 = vld [vmem:[#allocation3 + $0x440] sm:$0xff]
        %v5149 = vld [vmem:[#allocation3 + $0x448] sm:$0xff]
        %v5150 = vld [vmem:[#allocation3 + $0x450] sm:$0xff]
        %v5151 = vld [vmem:[#allocation3 + $0x458] sm:$0xff]
        %v5152 = vld [vmem:[#allocation3 + $0x460] sm:$0xff]
        %v5153 = vld [vmem:[#allocation3 + $0x468] sm:$0xff]
        %v5154 = vld [vmem:[#allocation3 + $0x470] sm:$0xff]
        %v5155 = vld [vmem:[#allocation3 + $0x478] sm:$0xff]
        %v5156 = vld [vmem:[#allocation3 + $0x480] sm:$0xff]
        %v5157 = vld [vmem:[#allocation3 + $0x488] sm:$0xff]
        %v5158 = vld [vmem:[#allocation3 + $0x490] sm:$0xff]
        %v5159 = vld [vmem:[#allocation3 + $0x498] sm:$0xff]
        %v5160 = vld [vmem:[#allocation3 + $0x4a0] sm:$0xff]
        %v5161 = vld [vmem:[#allocation3 + $0x4a8] sm:$0xff]
        %v5162 = vld [vmem:[#allocation3 + $0x4b0] sm:$0xff]
        %v5163 = vld [vmem:[#allocation3 + $0x4b8] sm:$0xff]
        %v5164 = vld [vmem:[#allocation3 + $0x4c0] sm:$0xff]
        %v5165 = vld [vmem:[#allocation3 + $0x4c8] sm:$0xff]
        %v5166 = vld [vmem:[#allocation3 + $0x4d0] sm:$0xff]
        %v5167 = vld [vmem:[#allocation3 + $0x4d8] sm:$0xff]
        %v5168 = vld [vmem:[#allocation3 + $0x4e0] sm:$0xff]
        %v5169 = vld [vmem:[#allocation3 + $0x4e8] sm:$0xff]
        %v5170 = vld [vmem:[#allocation3 + $0x4f0] sm:$0xff]
        %v5171 = vld [vmem:[#allocation3 + $0x4f8] sm:$0xff]
        %v5172 = vld [vmem:[%s11] sm:$0xff]
        %5174 = vset.pattern.permute.xlu0 0
        %5175 = vperm.xlu0 %5174, %v5172
        %v5176 = vpop.permute.xlu0 %5175
        %v5179 = vsel %vm467, %v5011, 0
        %v5182 = vsel %vm467, %v5016, 0
        %v5185 = vsel %vm467, %v5021, 0
        %v5188 = vsel %vm467, %v5026, 0
        %v5191 = vsel %vm467, %v5031, 0
        %v5194 = vsel %vm467, %v5036, 0
        %v5197 = vsel %vm467, %v5041, 0
        %v5200 = vsel %vm467, %v5046, 0
        %v5203 = vsel %vm467, %v5051, 0
        %v5206 = vsel %vm467, %v5056, 0
        %v5209 = vsel %vm467, %v5061, 0
        %v5212 = vsel %vm467, %v5066, 0
        %v5215 = vsel %vm467, %v5071, 0
        %v5218 = vsel %vm467, %v5076, 0
        %v5221 = vsel %vm467, %v5081, 0
        %v5224 = vsel %vm467, %v5086, 0
        %v5227 = vsel %vm467, %v5091, 0
        %v5230 = vsel %vm467, %v5096, 0
        %v5233 = vsel %vm467, %v5101, 0
        %v5236 = vsel %vm467, %v5106, 0
        %v5239 = vsel %vm467, %v5111, 0
        %v5242 = vsel %vm467, %v5116, 0
        %v5245 = vsel %vm467, %v5121, 0
        %v5248 = vsel %vm467, %v5126, 0
        %v5251 = vsel %vm467, %v5131, 0
        %v5254 = vsel %vm467, %v5136, 0
        %v5257 = vsel %vm467, %v5141, 0
        %v5260 = vsel %vm467, %v5146, 0
        %v5263 = vsel %vm467, %v5151, 0
        %v5266 = vsel %vm467, %v5156, 0
        %v5269 = vsel %vm467, %v5161, 0
        %v5272 = vsel %vm467, %v5166, 0
        %v5275 = vsel %vm467, %v5171, 0
        %5277 = vmatprep.subr.mxu0 %v5088
        %5278 = vmatpush1.xpose.msra.mxu0 %v5087
        %5279 = vmatprep.subr.mxu0 %v5083
        %5280 = vmatpush1.xpose.msra.mxu0 %v5082
        %5281 = vmatprep.subr.mxu0 %v5078
        %5282 = vmatpush1.xpose.msra.mxu0 %v5077
        %5283 = vmatprep.subr.mxu0 %v5073
        %5284 = vmatpush1.xpose.msra.mxu0 %v5072
        %5285 = vmatprep.subr.mxu0 %v5068
        %5286 = vmatpush1.xpose.msra.mxu0 %v5067
        %5287 = vmatprep.subr.mxu0 %v5063
        %5288 = vmatpush1.xpose.msra.mxu0 %v5062
        %5289 = vmatprep.subr.mxu0 %v5058
        %5290 = vmatpush1.xpose.msra.mxu0 %v5057
        %5291 = vmatprep.subr.mxu0 %v5053
        %5292 = vmatpush1.xpose.msra.mxu0 %v5052
        %5293 = vmatprep.subr.mxu0 %v5048
        %5294 = vmatpush1.xpose.msra.mxu0 %v5047
        %5295 = vmatprep.subr.mxu0 %v5043
        %5296 = vmatpush1.xpose.msra.mxu0 %v5042
        %5297 = vmatprep.subr.mxu0 %v5038
        %5298 = vmatpush1.xpose.msra.mxu0 %v5037
        %5299 = vmatprep.subr.mxu0 %v5033
        %5300 = vmatpush1.xpose.msra.mxu0 %v5032
        %5301 = vmatprep.subr.mxu0 %v5028
        %5302 = vmatpush1.xpose.msra.mxu0 %v5027
        %5303 = vmatprep.subr.mxu0 %v5023
        %5304 = vmatpush1.xpose.msra.mxu0 %v5022
        %5305 = vmatprep.subr.mxu0 %v5018
        %5306 = vmatpush1.xpose.msra.mxu0 %v5017
        %5307 = vmatprep.subr.mxu0 %v5013
        %5308 = vmatpush1.xpose.msra.mxu0 %v5012
        %5309 = vmatprep.subr.mxu0 %v5168
        %5310 = vmatpush2.xpose.msra.mxu0 %v5167
        %5311 = vmatprep.subr.mxu0 %v5163
        %5312 = vmatpush2.xpose.msra.mxu0 %v5162
        %5313 = vmatprep.subr.mxu0 %v5158
        %5314 = vmatpush2.xpose.msra.mxu0 %v5157
        %5315 = vmatprep.subr.mxu0 %v5153
        %5316 = vmatpush2.xpose.msra.mxu0 %v5152
        %5317 = vmatprep.subr.mxu0 %v5148
        %5318 = vmatpush2.xpose.msra.mxu0 %v5147
        %5319 = vmatprep.subr.mxu0 %v5143
        %5320 = vmatpush2.xpose.msra.mxu0 %v5142
        %5321 = vmatprep.subr.mxu0 %v5138
        %5322 = vmatpush2.xpose.msra.mxu0 %v5137
        %5323 = vmatprep.subr.mxu0 %v5133
        %5324 = vmatpush2.xpose.msra.mxu0 %v5132
        %5325 = vmatprep.subr.mxu0 %v5128
        %5326 = vmatpush2.xpose.msra.mxu0 %v5127
        %5327 = vmatprep.subr.mxu0 %v5123
        %5328 = vmatpush2.xpose.msra.mxu0 %v5122
        %5329 = vmatprep.subr.mxu0 %v5118
        %5330 = vmatpush2.xpose.msra.mxu0 %v5117
        %5331 = vmatprep.subr.mxu0 %v5113
        %5332 = vmatpush2.xpose.msra.mxu0 %v5112
        %5333 = vmatprep.subr.mxu0 %v5108
        %5334 = vmatpush2.xpose.msra.mxu0 %v5107
        %5335 = vmatprep.subr.mxu0 %v5103
        %5336 = vmatpush2.xpose.msra.mxu0 %v5102
        %5337 = vmatprep.subr.mxu0 %v5098
        %5338 = vmatpush2.xpose.msra.mxu0 %v5097
        %5339 = vmatprep.subr.mxu0 %v5093
        %5340 = vmatpush2.xpose.msra.mxu0 %v5092
        %5341 = vmatprep.mubr.f32.mxu0 %v5008
        %5342 = vmatmul.mubr.f32.gmra.mxu0 %v5007
        %v5343 = vpop.f32.mrf.mxu0
        %v5344 = vadd.f32 %v5176, %v5343
        %v5345 = vpop.f32.mrf.mxu0
        %v5346 = vadd.f32 %v5176, %v5345
        %5347 = vdwg.mxu0
        %5348 = vmatprep.subr.mxu0 %v5090
        %5349 = vmatpush1.xpose.msra.mxu0 %v5089
        %5350 = vmatprep.subr.mxu0 %v5085
        %5351 = vmatpush1.xpose.msra.mxu0 %v5084
        %5352 = vmatprep.subr.mxu0 %v5080
        %5353 = vmatpush1.xpose.msra.mxu0 %v5079
        %5354 = vmatprep.subr.mxu0 %v5075
        %5355 = vmatpush1.xpose.msra.mxu0 %v5074
        %5356 = vmatprep.subr.mxu0 %v5070
        %5357 = vmatpush1.xpose.msra.mxu0 %v5069
        %5358 = vmatprep.subr.mxu0 %v5065
        %5359 = vmatpush1.xpose.msra.mxu0 %v5064
        %5360 = vmatprep.subr.mxu0 %v5060
        %5361 = vmatpush1.xpose.msra.mxu0 %v5059
        %5362 = vmatprep.subr.mxu0 %v5055
        %5363 = vmatpush1.xpose.msra.mxu0 %v5054
        %5364 = vmatprep.subr.mxu0 %v5050
        %5365 = vmatpush1.xpose.msra.mxu0 %v5049
        %5366 = vmatprep.subr.mxu0 %v5045
        %5367 = vmatpush1.xpose.msra.mxu0 %v5044
        %5368 = vmatprep.subr.mxu0 %v5040
        %5369 = vmatpush1.xpose.msra.mxu0 %v5039
        %5370 = vmatprep.subr.mxu0 %v5035
        %5371 = vmatpush1.xpose.msra.mxu0 %v5034
        %5372 = vmatprep.subr.mxu0 %v5030
        %5373 = vmatpush1.xpose.msra.mxu0 %v5029
        %5374 = vmatprep.subr.mxu0 %v5025
        %5375 = vmatpush1.xpose.msra.mxu0 %v5024
        %5376 = vmatprep.subr.mxu0 %v5020
        %5377 = vmatpush1.xpose.msra.mxu0 %v5019
        %5378 = vmatprep.subr.mxu0 %v5015
        %5379 = vmatpush1.xpose.msra.mxu0 %v5014
        %5380 = vmatprep.subr.mxu0 %v5170
        %5381 = vmatpush2.xpose.msra.mxu0 %v5169
        %5382 = vmatprep.subr.mxu0 %v5165
        %5383 = vmatpush2.xpose.msra.mxu0 %v5164
        %5384 = vmatprep.subr.mxu0 %v5160
        %5385 = vmatpush2.xpose.msra.mxu0 %v5159
        %5386 = vmatprep.subr.mxu0 %v5155
        %5387 = vmatpush2.xpose.msra.mxu0 %v5154
        %5388 = vmatprep.subr.mxu0 %v5150
        %5389 = vmatpush2.xpose.msra.mxu0 %v5149
        %5390 = vmatprep.subr.mxu0 %v5145
        %5391 = vmatpush2.xpose.msra.mxu0 %v5144
        %5392 = vmatprep.subr.mxu0 %v5140
        %5393 = vmatpush2.xpose.msra.mxu0 %v5139
        %5394 = vmatprep.subr.mxu0 %v5135
        %5395 = vmatpush2.xpose.msra.mxu0 %v5134
        %5396 = vmatprep.subr.mxu0 %v5130
        %5397 = vmatpush2.xpose.msra.mxu0 %v5129
        %5398 = vmatprep.subr.mxu0 %v5125
        %5399 = vmatpush2.xpose.msra.mxu0 %v5124
        %5400 = vmatprep.subr.mxu0 %v5120
        %5401 = vmatpush2.xpose.msra.mxu0 %v5119
        %5402 = vmatprep.subr.mxu0 %v5115
        %5403 = vmatpush2.xpose.msra.mxu0 %v5114
        %5404 = vmatprep.subr.mxu0 %v5110
        %5405 = vmatpush2.xpose.msra.mxu0 %v5109
        %5406 = vmatprep.subr.mxu0 %v5105
        %5407 = vmatpush2.xpose.msra.mxu0 %v5104
        %5408 = vmatprep.subr.mxu0 %v5100
        %5409 = vmatpush2.xpose.msra.mxu0 %v5099
        %5410 = vmatprep.subr.mxu0 %v5095
        %5411 = vmatpush2.xpose.msra.mxu0 %v5094
        %5412 = vmatprep.mubr.f32.mxu0 %v5010
        %5413 = vmatmul.mubr.f32.gmra.mxu0 %v5009
        %v5414 = vpop.f32.mrf.mxu0
        %v5415 = vadd.f32 %v5344, %v5414
        %v5416 = vpop.f32.mrf.mxu0
        %v5417 = vadd.f32 %v5346, %v5416
        %5418 = vdwg.mxu0
        %5419 = vmatprep.subr.mxu0 0.0
        %5420 = vmatpush1.xpose.msra.mxu0 %v5227
        %5421 = vmatprep.subr.mxu0 0.0
        %5422 = vmatpush1.xpose.msra.mxu0 %v5224
        %5423 = vmatprep.subr.mxu0 0.0
        %5424 = vmatpush1.xpose.msra.mxu0 %v5221
        %5425 = vmatprep.subr.mxu0 0.0
        %5426 = vmatpush1.xpose.msra.mxu0 %v5218
        %5427 = vmatprep.subr.mxu0 0.0
        %5428 = vmatpush1.xpose.msra.mxu0 %v5215
        %5429 = vmatprep.subr.mxu0 0.0
        %5430 = vmatpush1.xpose.msra.mxu0 %v5212
        %5431 = vmatprep.subr.mxu0 0.0
        %5432 = vmatpush1.xpose.msra.mxu0 %v5209
        %5433 = vmatprep.subr.mxu0 0.0
        %5434 = vmatpush1.xpose.msra.mxu0 %v5206
        %5435 = vmatprep.subr.mxu0 0.0
        %5436 = vmatpush1.xpose.msra.mxu0 %v5203
        %5437 = vmatprep.subr.mxu0 0.0
        %5438 = vmatpush1.xpose.msra.mxu0 %v5200
        %5439 = vmatprep.subr.mxu0 0.0
        %5440 = vmatpush1.xpose.msra.mxu0 %v5197
        %5441 = vmatprep.subr.mxu0 0.0
        %5442 = vmatpush1.xpose.msra.mxu0 %v5194
        %5443 = vmatprep.subr.mxu0 0.0
        %5444 = vmatpush1.xpose.msra.mxu0 %v5191
        %5445 = vmatprep.subr.mxu0 0.0
        %5446 = vmatpush1.xpose.msra.mxu0 %v5188
        %5447 = vmatprep.subr.mxu0 0.0
        %5448 = vmatpush1.xpose.msra.mxu0 %v5185
        %5449 = vmatprep.subr.mxu0 0.0
        %5450 = vmatpush1.xpose.msra.mxu0 %v5182
        %5451 = vmatprep.subr.mxu0 0.0
        %5452 = vmatpush2.xpose.msra.mxu0 %v5275
        %5453 = vmatprep.subr.mxu0 0.0
        %5454 = vmatpush2.xpose.msra.mxu0 %v5272
        %5455 = vmatprep.subr.mxu0 0.0
        %5456 = vmatpush2.xpose.msra.mxu0 %v5269
        %5457 = vmatprep.subr.mxu0 0.0
        %5458 = vmatpush2.xpose.msra.mxu0 %v5266
        %5459 = vmatprep.subr.mxu0 0.0
        %5460 = vmatpush2.xpose.msra.mxu0 %v5263
        %5461 = vmatprep.subr.mxu0 0.0
        %5462 = vmatpush2.xpose.msra.mxu0 %v5260
        %5463 = vmatprep.subr.mxu0 0.0
        %5464 = vmatpush2.xpose.msra.mxu0 %v5257
        %5465 = vmatprep.subr.mxu0 0.0
        %5466 = vmatpush2.xpose.msra.mxu0 %v5254
        %5467 = vmatprep.subr.mxu0 0.0
        %5468 = vmatpush2.xpose.msra.mxu0 %v5251
        %5469 = vmatprep.subr.mxu0 0.0
        %5470 = vmatpush2.xpose.msra.mxu0 %v5248
        %5471 = vmatprep.subr.mxu0 0.0
        %5472 = vmatpush2.xpose.msra.mxu0 %v5245
        %5473 = vmatprep.subr.mxu0 0.0
        %5474 = vmatpush2.xpose.msra.mxu0 %v5242
        %5475 = vmatprep.subr.mxu0 0.0
        %5476 = vmatpush2.xpose.msra.mxu0 %v5239
        %5477 = vmatprep.subr.mxu0 0.0
        %5478 = vmatpush2.xpose.msra.mxu0 %v5236
        %5479 = vmatprep.subr.mxu0 0.0
        %5480 = vmatpush2.xpose.msra.mxu0 %v5233
        %5481 = vmatprep.subr.mxu0 0.0
        %5482 = vmatpush2.xpose.msra.mxu0 %v5230
        %5483 = vmatprep.mubr.f32.mxu0 0.0
        %5484 = vmatmul.mubr.f32.gmra.mxu0 %v5179
        %v5485 = vpop.f32.mrf.mxu0
        %v5486 = vadd.f32 %v5415, %v5485
        %v5487 = vpop.f32.mrf.mxu0
        %v5488 = vadd.f32 %v5417, %v5487
        %5489 = vdwg.mxu0
        %v5490 = vrot.slane %v5486, 4
        %v5491 = vmax.f32 %v5486, %v5490
        %v5492 = vrot.slane %v5491, 2
        %v5493 = vmax.f32 %v5491, %v5492
        %v5494 = vrot.slane %v5493, 1
        %v5495 = vmax.f32 %v5493, %v5494
        %v5496 = vrot.slane %v5488, 4
        %v5497 = vmax.f32 %v5488, %v5496
        %v5498 = vrot.slane %v5497, 2
        %v5499 = vmax.f32 %v5497, %v5498
        %v5500 = vrot.slane %v5499, 1
        %v5501 = vmax.f32 %v5499, %v5500
        %v5502 = vsub.f32 %v5486, %v5495
        %v5503 = vsub.f32 %v5488, %v5501
        %v5504 = vmul.f32 %v5502, 1.442695
        %v5505 = vpow.pop %v5504
        %v5506 = vmul.f32 %v5503, 1.442695
        %v5507 = vpow.pop %v5506
        %v5508 = vrot.slane %v5505, 4
        %v5509 = vadd.f32 %v5505, %v5508
        %v5510 = vrot.slane %v5509, 2
        %v5511 = vadd.f32 %v5509, %v5510
        %v5512 = vrot.slane %v5511, 1
        %v5513 = vadd.f32 %v5511, %v5512
        %v5514 = vrot.slane %v5507, 4
        %v5515 = vadd.f32 %v5507, %v5514
        %v5516 = vrot.slane %v5515, 2
        %v5517 = vadd.f32 %v5515, %v5516
        %v5518 = vrot.slane %v5517, 1
        %v5519 = vadd.f32 %v5517, %v5518
        %v5520 = vrcp.pop %v5513
        %v5521 = vmul.f32 1.0, %v5520
        %v5522 = vrcp.pop %v5519
        %v5523 = vmul.f32 1.0, %v5522
        %v5524 = vmul.f32 %v5505, %v5521
        %v5525 = vmul.f32 %v5507, %v5523
        %v5526 = vld [vmem:[%s458] sm:$0xff]
        %v5527 = vld [vmem:[%s458 + $0x8] sm:$0xff]
        %v5528 = vmul.f32 %v5526, %v5524
        %v5529 = vmul.f32 %v5527, %v5525
        %v5530 = vrot.slane %v5528, 4
        %v5531 = vadd.f32 %v5528, %v5530
        %v5532 = vrot.slane %v5531, 2
        %v5533 = vadd.f32 %v5531, %v5532
        %v5534 = vrot.slane %v5533, 1
        %v5535 = vadd.f32 %v5533, %v5534
        %v5536 = vrot.slane %v5529, 4
        %v5537 = vadd.f32 %v5529, %v5536
        %v5538 = vrot.slane %v5537, 2
        %v5539 = vadd.f32 %v5537, %v5538
        %v5540 = vrot.slane %v5539, 1
        %v5541 = vadd.f32 %v5539, %v5540
        %v5544 = vcombine.low %v5535, %v5541
        %v5546 = vunpack.c.l.s4 1966171168
        %v5547 = vunpack.c.0.s8 %v5546
        %v5548 = vlaneseq
        %v5549 = vshrl.u32 %v5548, 7
        %v5550 = vsub.s32 %v5547, %v5549
        %v5551 = vrot.slane %v5544, %v5550
        %v5553 = vunpack.c.l.s4 1966171168
        %v5554 = vunpack.c.0.s8 %v5553
        %v5555 = vlaneseq
        %v5556 = vshrl.u32 %v5555, 7
        %v5557 = vsub.s32 %v5554, %v5556
        %v5558 = vrot.slane %v5551, %v5557
        %v5560 = vlaneseq
        %vm5561 = vcmp.ge.s32.totalorder %v5560, 0
        %vm5562 = vcmp.lt.s32.totalorder %v5560, 256
        %vm5563 = vmand %vm5561, %vm5562
        %5564 = vst.msk [vmem:[%s448] sm:$0x3] %vm5563, %v5558
        %s5565 = sand.u32 %s318, 1
        %s5566 = scalar_lea.sflag [#allocation5], %s5565
        %s5567 = sand.u32 %s318, 1
        %s5568 = smul.addr %s5567, 2
        %s5569 = scalar_lea.vmem [#allocation4], %s5568
        // Predicated region
        $region73: #{tpu_custom_call.1} parent=71 // pred_check
          %p5570 = pneg %p328
        $region74: #{tpu_custom_call.1} parent=71 // pred_check_branch
          %5572 = sbr.rel (%p5570) target = $region76
        $region75: #{tpu_custom_call.1} parent=71 // pred_region
          %s5574 = ssub.s32 32, 32
          %5575 = vsyncadd %s5566, %s5574
          %s5576 = smul.addr %s27, 2
          %s5577 = smul.addr %s5576, 16
          %s5578 = scalar_lea.hbm %s13, %s5577
          %s5580 = sshll.u32 %s5569, 4
          %s5581 = int_to_ptr.vmem [resolvable:$true] %s5580
          %5583 = dma.vmem_to_hbm [thread:$0]  %s5581, 32, %s5578, %s5566
        $region76: #{tpu_custom_call.1} parent=71 // pred_fallthru
          _
      $region72: #{tpu_custom_call.1} parent=5 // pred_fallthru
        _
      %p5584 = scmp.le.s32.totalorder 2, %s22
      // Predicated region
      $region77: #{tpu_custom_call.1} parent=5 // pred_check
        %p5585 = pneg %p5584
      $region78: #{tpu_custom_call.1} parent=5 // pred_check_branch
        %5587 = sbr.rel (%p5585) target = $region80
      $region79: #{tpu_custom_call.1} parent=5 // pred_region
        %s5588 = ssub.s32 %s22, 2
        // Predicated region
        $region81: #{tpu_custom_call.1} parent=79 // pred_check
          %p5589 = pneg %p334
        $region82: #{tpu_custom_call.1} parent=79 // pred_check_branch
          %5591 = sbr.rel (%p5589) target = $region84
        $region83: #{tpu_custom_call.1} parent=79 // pred_region
          %s5592 = sand.u32 %s319, 1
          %s5593 = scalar_lea.sflag [#allocation5], %s5592
          %s5594 = sand.u32 %s319, 1
          %s5595 = smul.addr %s5594, 2
          %s5596 = scalar_lea.vmem [#allocation4], %s5595
          %5597 = dma.done %s5593, 32
        $region84: #{tpu_custom_call.1} parent=79 // pred_fallthru
          _
      $region80: #{tpu_custom_call.1} parent=5 // pred_fallthru
        _
    $region6: #{tpu_custom_call.1} parent=1 // loop_footer
      %s26 = sadd.s32 1, %s22
    $region7: #{tpu_custom_call.1} parent=1 // loop_footer_branch
      %21 = sbr.rel target = $region3
    $region8: #{tpu_custom_call.1} parent=1 // loop_exit
      _
    %5598 = vsyncpa [#allocation5], 1
    %s5599 = scalar_lea.sflag [#allocation5], 1
    %5600 = vsyncpa %s5599, 1

</llo_original>
